<compile_context>
chip_gen: v5e
topology: v5e:2x2
jax: 0.10.0
libtpu: 0.0.40
codegen_flags: <defaults>
</compile_context>

<pallas_src>
import functools

import jax
import jax.numpy as jnp
from jax.experimental import pallas as pl
from jax.experimental.pallas import tpu as pltpu

EPS = 1e-5
_HI = jax.lax.Precision.HIGHEST


# -----------------------------------------------------------------------------
# Kernel: one grid step = one independent channel group.
#   x_ref : (NH, Lp)        lane-packed activations of this group (lane = c_local*W+w)
#   bn_ref: (1, 4, 128)     rows = gamma1, beta1, gamma2, beta2 (channel-padded)
#   w_ref : (1, 3, Lp, Lp)  block-banded depthwise conv matrices (one per kernel row)
#   s_ref : (Lp, 128)       one-hot lane -> local-channel fold matrix
#   st_ref: (128, Lp)       one-hot local-channel -> lane broadcast matrix
#   ud_ref: (2, NH, NH)     row-shift matrices U (y[r-1]) and D (y[r+1]), image
#                           boundary zeros folded in
# -----------------------------------------------------------------------------
def _fused_kernel(x_ref, bn_ref, w_ref, s_ref, st_ref, ud_ref, o_ref, *,
                  inv_count, eps):
    S = s_ref[...]
    ST = st_ref[...]
    bn = bn_ref[0]                                  # (4, 128)

    def bn_relu(t, g_row, b_row):
        # Single-pass batch statistics; sum & sumsq folded per channel with one
        # small MXU dot, scale/shift broadcast back with one more.
        s = jnp.sum(t, axis=0, keepdims=True)                           # (1, Lp)
        ss = jnp.sum(t * t, axis=0, keepdims=True)                      # (1, Lp)
        mom = jnp.dot(jnp.concatenate([s, ss], axis=0), S,
                      preferred_element_type=jnp.float32, precision=_HI)  # (2, 128)
        mean_c = mom[0:1, :] * inv_count
        var_c = jnp.maximum(mom[1:2, :] * inv_count - mean_c * mean_c, 0.0)
        scale_c = g_row * jax.lax.rsqrt(var_c + eps)
        shift_c = b_row - mean_c * scale_c
        sc_sh = jnp.dot(jnp.concatenate([scale_c, shift_c], axis=0), ST,
                        preferred_element_type=jnp.float32, precision=_HI)  # (2, Lp)
        return jnp.maximum(t * sc_sh[0:1, :] + sc_sh[1:2, :], 0.0)

    # ---- BatchNorm2d #0 + ReLU ----------------------------------------------
    y = bn_relu(x_ref[...], bn[0:1, :], bn[1:2, :])                     # (NH, Lp)

    # ---- depthwise 3x3 conv, padding=1, entirely on the MXU ------------------
    U = ud_ref[0]
    D = ud_ref[1]
    acc = jnp.dot(jnp.dot(U, y, preferred_element_type=jnp.float32, precision=_HI),
                  w_ref[0, 0], preferred_element_type=jnp.float32, precision=_HI)
    acc = acc + jnp.dot(y, w_ref[0, 1],
                        preferred_element_type=jnp.float32, precision=_HI)
    acc = acc + jnp.dot(jnp.dot(D, y, preferred_element_type=jnp.float32,
                                precision=_HI),
                        w_ref[0, 2], preferred_element_type=jnp.float32,
                        precision=_HI)

    # ---- BatchNorm2d #1 + ReLU ----------------------------------------------
    o_ref[...] = bn_relu(acc, bn[2:3, :], bn[3:4, :]).astype(o_ref.dtype)


def _pick_group_size(C, W):
    # Smallest channel-group size that divides C and makes the lane block a
    # multiple of 128 (lane-dense, unmasked stores); otherwise one padded group.
    for g in range(1, C + 1):
        if C % g == 0 and (g * W) % 128 == 0:
            return g
    return C


# -----------------------------------------------------------------------------
# Wrapper: NCHW <-> lane-packed (N*H, groups*Lp), parameter pre-packing, pallas_call.
# -----------------------------------------------------------------------------
@jax.jit
def fused_bn_relu_dwconv_bn_relu(x_nchw, g1, b1, w_oihw, g2, b2):
    """x_nchw: (N, 16, H, W) f32; w_oihw: (16, 1, 3, 3) depthwise weights."""
    N, C, H, W = x_nchw.shape
    f32 = jnp.float32
    GC = _pick_group_size(C, W)            # channels per group
    NG = C // GC                           # number of (independent) groups
    L = GC * W                             # true lanes per group
    Lp = ((L + 127) // 128) * 128          # lane-padded group width
    CP = 128                               # per-group channel axis, one lane tile
    NH = N * H

    # Activations: NCHW -> (N,H,C,W) -> per-group lane packing (N*H, NG*Lp).
    xt = jnp.transpose(x_nchw, (0, 2, 1, 3)).astype(f32)        # (N, H, C, W)
    xg = xt.reshape(N, H, NG, L)
    if Lp != L:
        xg = jnp.pad(xg, ((0, 0), (0, 0), (0, 0), (0, Lp - L)))
    x_p = xg.reshape(NH, NG * Lp)

    # BN affine params per group: (NG, 4, CP) = [gamma1, beta1, gamma2, beta2].
    def pack_params(p):
        return jnp.pad(p.astype(f32).reshape(NG, GC), ((0, 0), (0, CP - GC)))
    bn = jnp.stack([pack_params(g1), pack_params(b1),
                    pack_params(g2), pack_params(b2)], axis=1)   # (NG, 4, CP)

    # Block-banded depthwise conv matrices per group and kernel row:
    #   B_dh[li, lo] = tap[c, dh, wi - wo + 1]  for same channel, |wi - wo| <= 1
    # (left/right zero padding and cross-channel/pad-lane zeros are implicit).
    taps = w_oihw[:, 0, :, :].astype(f32).reshape(NG, GC, 3, 3)
    li = jnp.arange(Lp)
    ci, wi = li // W, li % W
    same_c = (ci[:, None] == ci[None, :]) & (li[:, None] < L) & (li[None, :] < L)
    dw = wi[:, None] - wi[None, :] + 1
    valid = same_c & (dw >= 0) & (dw <= 2)
    c_idx = jnp.broadcast_to(jnp.clip(ci, 0, GC - 1)[:, None], (Lp, Lp))
    dw_idx = jnp.clip(dw, 0, 2)
    w_groups = []
    for g in range(NG):
        per_dh = [jnp.where(valid, taps[g][c_idx, dh, dw_idx], 0.0) for dh in range(3)]
        w_groups.append(jnp.stack(per_dh, axis=0))
    w_banded = jnp.stack(w_groups, axis=0)                       # (NG, 3, Lp, Lp)

    # One-hot lane<->local-channel fold matrices (shared by all groups).
    S = ((ci[:, None] == jnp.arange(CP)[None, :]) & (li[:, None] < L)).astype(f32)
    ST = S.T                                                     # (CP, Lp)

    # Row-shift matrices for the H axis of the merged N*H sublane dimension;
    # rows that would cross an image boundary are the conv's zero padding.
    r = jnp.arange(NH)
    U = ((r[:, None] - 1 == r[None, :]) & (r[:, None] % H != 0)).astype(f32)
    D = ((r[:, None] + 1 == r[None, :]) & (r[:, None] % H != (H - 1))).astype(f32)
    UD = jnp.stack([U, D], axis=0)                               # (2, NH, NH)

    kernel = functools.partial(_fused_kernel,
                               inv_count=1.0 / float(N * H * W), eps=EPS)

    # VMEM budget derived from the actual block sizes (double-buffered inputs +
    # output + in-kernel temporaries + slack), capped for v7x's 64 MiB.
    blk_bytes = 4 * (2 * NH * Lp + 4 * CP + 3 * Lp * Lp + 2 * Lp * CP + 2 * NH * NH)
    tmp_bytes = 4 * 8 * NH * Lp
    vmem_limit = int(min(2 * blk_bytes + tmp_bytes + (8 << 20), 48 << 20))

    out_p = pl.pallas_call(
        kernel,
        out_shape=jax.ShapeDtypeStruct((NH, NG * Lp), f32),
        grid=(NG,),
        in_specs=[
            pl.BlockSpec((NH, Lp), lambda g: (0, g)),            # x (group lane block)
            pl.BlockSpec((1, 4, CP), lambda g: (g, 0, 0)),       # BN params
            pl.BlockSpec((1, 3, Lp, Lp), lambda g: (g, 0, 0, 0)),  # banded conv mats
            pl.BlockSpec((Lp, CP), lambda g: (0, 0)),            # S   (shared)
            pl.BlockSpec((CP, Lp), lambda g: (0, 0)),            # S^T (shared)
            pl.BlockSpec((2, NH, NH), lambda g: (0, 0, 0)),      # U/D (shared)
        ],
        out_specs=pl.BlockSpec((NH, Lp), lambda g: (0, g)),
        compiler_params=pltpu.CompilerParams(
            dimension_semantics=("parallel",),       # channel groups are independent
            vmem_limit_bytes=vmem_limit),
    )(x_p, bn, w_banded, S, ST, UD)

    # Unpack back to NCHW (module-boundary layout).
    out = out_p.reshape(N, H, NG, Lp)[..., :L].reshape(N, H, C, W)
    return jnp.transpose(out, (0, 2, 1, 3))


# -----------------------------------------------------------------------------
# Pure-JAX reference (training-mode BN semantics).
# -----------------------------------------------------------------------------
def _reference(x_nchw, g1, b1, w_oihw, g2, b2):
    def bn(t, g, b):
        m = jnp.mean(t, axis=(0, 2, 3), keepdims=True)
        v = jnp.mean((t - m) ** 2, axis=(0, 2, 3), keepdims=True)
        return (t - m) * jax.lax.rsqrt(v + EPS) * g.reshape(1, -1, 1, 1) \
            + b.reshape(1, -1, 1, 1)

    y = jnp.maximum(bn(x_nchw, g1, b1), 0.0)
    conv = jax.lax.conv_general_dilated(
        y, w_oihw, window_strides=(1, 1), padding=((1, 1), (1, 1)),
        dimension_numbers=("NCHW", "OIHW", "NCHW"),
        feature_group_count=x_nchw.shape[1],
        precision=_HI)
    return jnp.maximum(bn(conv, g2, b2), 0.0)


if __name__ == "__main__":
    # Channels fixed at 16 by the module; batch/spatial shrunk to small sizes.
    N, C, H, W = 2, 16, 16, 16
    key = jax.random.PRNGKey(0)
    kx, kg1, kb1, kw, kg2, kb2 = jax.random.split(key, 6)

    x = jax.random.normal(kx, (N, C, H, W), jnp.float32)
    g1 = 1.0 + 0.1 * jax.random.normal(kg1, (C,), jnp.float32)
    b1 = 0.1 * jax.random.normal(kb1, (C,), jnp.float32)
    w = 0.1 * jax.random.normal(kw, (C, 1, 3, 3), jnp.float32)
    g2 = 1.0 + 0.1 * jax.random.normal(kg2, (C,), jnp.float32)
    b2 = 0.1 * jax.random.normal(kb2, (C,), jnp.float32)

    out = fused_bn_relu_dwconv_bn_relu(x, g1, b1, w, g2, b2)
    out = jax.block_until_ready(out)

    ref = _reference(x, g1, b1, w, g2, b2)
    assert out.shape == (N, C, H, W) and out.dtype == jnp.float32
    assert jnp.allclose(out, ref, atol=5e-4, rtol=5e-4), "mismatch vs reference"

    print("KERNEL_OK")
</pallas_src>

<mosaic_0001>
module attributes {stable_mosaic.version = 11 : i64} {
  func.func @_fused_kernel(%arg0: i32, %arg1: memref<32x128xf32, #tpu.memory_space<vmem>>, %arg2: memref<1x4x128xf32, #tpu.memory_space<vmem>>, %arg3: memref<1x3x128x128xf32, #tpu.memory_space<vmem>>, %arg4: memref<128x128xf32, #tpu.memory_space<vmem>>, %arg5: memref<128x128xf32, #tpu.memory_space<vmem>>, %arg6: memref<2x32x32xf32, #tpu.memory_space<vmem>>, %arg7: memref<32x128xf32, #tpu.memory_space<vmem>>) attributes {dimension_semantics = [#tpu.dimension_semantics<parallel>], iteration_bounds = array<i64: 2>, scalar_prefetch = 0 : i64, scratch_operands = 0 : i64, tpu.core_type = #tpu.core_type<tc>, window_params = [{transform_indices = @transform_0, window_bounds = array<i64: 32, 128>}, {transform_indices = @transform_1, window_bounds = array<i64: 1, 4, 128>}, {transform_indices = @transform_2, window_bounds = array<i64: 1, 3, 128, 128>}, {pipeline_mode = #tpu.pipeline_mode<synchronous>, transform_indices = @transform_3, window_bounds = array<i64: 128, 128>}, {pipeline_mode = #tpu.pipeline_mode<synchronous>, transform_indices = @transform_4, window_bounds = array<i64: 128, 128>}, {pipeline_mode = #tpu.pipeline_mode<synchronous>, transform_indices = @transform_5, window_bounds = array<i64: 2, 32, 32>}, {transform_indices = @transform_6, window_bounds = array<i64: 32, 128>}]} {
    %c0 = arith.constant 0 : index
    %c0_0 = arith.constant 0 : index
    %0 = vector.load %arg4[%c0, %c0_0] : memref<128x128xf32, #tpu.memory_space<vmem>>, vector<128x128xf32>
    %c0_1 = arith.constant 0 : index
    %c0_2 = arith.constant 0 : index
    %1 = vector.load %arg5[%c0_1, %c0_2] : memref<128x128xf32, #tpu.memory_space<vmem>>, vector<128x128xf32>
    %c0_3 = arith.constant 0 : index
    %c0_4 = arith.constant 0 : index
    %c0_5 = arith.constant 0 : index
    %2 = vector.load %arg2[%c0_3, %c0_4, %c0_5] : memref<1x4x128xf32, #tpu.memory_space<vmem>>, vector<1x4x128xf32>
    %3 = vector.shape_cast %2 : vector<1x4x128xf32> to vector<4x128xf32>
    %c0_6 = arith.constant 0 : index
    %c0_7 = arith.constant 0 : index
    %4 = vector.load %arg1[%c0_6, %c0_7] : memref<32x128xf32, #tpu.memory_space<vmem>>, vector<32x128xf32>
    %5 = vector.extract_strided_slice %3 {offsets = [0, 0], sizes = [1, 128], strides = [1, 1]} : vector<4x128xf32> to vector<1x128xf32>
    %6 = vector.extract_strided_slice %3 {offsets = [1, 0], sizes = [1, 128], strides = [1, 1]} : vector<4x128xf32> to vector<1x128xf32>
    %cst = arith.constant dense<0.000000e+00> : vector<128xf32>
    %7 = vector.multi_reduction <add>, %4, %cst [0] : vector<32x128xf32> to vector<128xf32>
    %8 = vector.shape_cast %7 : vector<128xf32> to vector<1x128xf32>
    %9 = arith.mulf %4, %4 : vector<32x128xf32>
    %cst_8 = arith.constant dense<0.000000e+00> : vector<128xf32>
    %10 = vector.multi_reduction <add>, %9, %cst_8 [0] : vector<32x128xf32> to vector<128xf32>
    %11 = vector.shape_cast %10 : vector<128xf32> to vector<1x128xf32>
    %12 = tpu.concatenate %8, %11 in 0 : vector<1x128xf32>, vector<1x128xf32> -> vector<2x128xf32>
    %cst_9 = arith.constant dense<0.000000e+00> : vector<2x128xf32>
    %13 = tpu.matmul %12, %0, %cst_9 {dimension_numbers = #tpu.dot_dimension_numbers<[1], [0], [0], [1], [0, 0, 1, 1], [], []>, precision = #tpu.contract_precision<fp32>} : vector<2x128xf32>, vector<128x128xf32>, vector<2x128xf32> -> vector<2x128xf32>
    %14 = vector.extract_strided_slice %13 {offsets = [0, 0], sizes = [1, 128], strides = [1, 1]} : vector<2x128xf32> to vector<1x128xf32>
    %cst_10 = arith.constant 0.001953125 : f32
    %15 = vector.broadcast %cst_10 : f32 to vector<1x128xf32>
    %16 = arith.mulf %14, %15 : vector<1x128xf32>
    %17 = vector.extract_strided_slice %13 {offsets = [1, 0], sizes = [1, 128], strides = [1, 1]} : vector<2x128xf32> to vector<1x128xf32>
    %cst_11 = arith.constant 0.001953125 : f32
    %18 = vector.broadcast %cst_11 : f32 to vector<1x128xf32>
    %19 = arith.mulf %17, %18 : vector<1x128xf32>
    %20 = arith.mulf %16, %16 : vector<1x128xf32>
    %21 = arith.subf %19, %20 : vector<1x128xf32>
    %cst_12 = arith.constant 0.000000e+00 : f32
    %22 = vector.broadcast %cst_12 : f32 to vector<1x128xf32>
    %23 = arith.maximumf %21, %22 : vector<1x128xf32>
    %cst_13 = arith.constant 9.99999974E-6 : f32
    %24 = vector.broadcast %cst_13 : f32 to vector<1x128xf32>
    %25 = arith.addf %23, %24 : vector<1x128xf32>
    %26 = math.rsqrt %25 : vector<1x128xf32>
    %27 = arith.mulf %5, %26 : vector<1x128xf32>
    %28 = arith.mulf %16, %27 : vector<1x128xf32>
    %29 = arith.subf %6, %28 : vector<1x128xf32>
    %30 = tpu.concatenate %27, %29 in 0 : vector<1x128xf32>, vector<1x128xf32> -> vector<2x128xf32>
    %cst_14 = arith.constant dense<0.000000e+00> : vector<2x128xf32>
    %31 = tpu.matmul %30, %1, %cst_14 {dimension_numbers = #tpu.dot_dimension_numbers<[1], [0], [0], [1], [0, 0, 1, 1], [], []>, precision = #tpu.contract_precision<fp32>} : vector<2x128xf32>, vector<128x128xf32>, vector<2x128xf32> -> vector<2x128xf32>
    %32 = vector.extract_strided_slice %31 {offsets = [0, 0], sizes = [1, 128], strides = [1, 1]} : vector<2x128xf32> to vector<1x128xf32>
    %33 = vector.broadcast %32 : vector<1x128xf32> to vector<32x128xf32>
    %34 = arith.mulf %4, %33 : vector<32x128xf32>
    %35 = vector.extract_strided_slice %31 {offsets = [1, 0], sizes = [1, 128], strides = [1, 1]} : vector<2x128xf32> to vector<1x128xf32>
    %36 = vector.broadcast %35 : vector<1x128xf32> to vector<32x128xf32>
    %37 = arith.addf %34, %36 : vector<32x128xf32>
    %cst_15 = arith.constant 0.000000e+00 : f32
    %38 = vector.broadcast %cst_15 : f32 to vector<32x128xf32>
    %39 = arith.maximumf %37, %38 : vector<32x128xf32>
    %c0_16 = arith.constant 0 : index
    %c0_17 = arith.constant 0 : index
    %c0_18 = arith.constant 0 : index
    %40 = vector.load %arg6[%c0_16, %c0_17, %c0_18] : memref<2x32x32xf32, #tpu.memory_space<vmem>>, vector<1x32x32xf32>
    %41 = vector.shape_cast %40 : vector<1x32x32xf32> to vector<32x32xf32>
    %c1 = arith.constant 1 : index
    %c0_19 = arith.constant 0 : index
    %c0_20 = arith.constant 0 : index
    %42 = vector.load %arg6[%c1, %c0_19, %c0_20] : memref<2x32x32xf32, #tpu.memory_space<vmem>>, vector<1x32x32xf32>
    %43 = vector.shape_cast %42 : vector<1x32x32xf32> to vector<32x32xf32>
    %cst_21 = arith.constant dense<0.000000e+00> : vector<32x128xf32>
    %44 = tpu.matmul %41, %39, %cst_21 {dimension_numbers = #tpu.dot_dimension_numbers<[1], [0], [0], [1], [0, 0, 1, 1], [], []>, precision = #tpu.contract_precision<fp32>} : vector<32x32xf32>, vector<32x128xf32>, vector<32x128xf32> -> vector<32x128xf32>
    %c0_22 = arith.constant 0 : index
    %c0_23 = arith.constant 0 : index
    %c0_24 = arith.constant 0 : index
    %c0_25 = arith.constant 0 : index
    %45 = vector.load %arg3[%c0_22, %c0_23, %c0_24, %c0_25] : memref<1x3x128x128xf32, #tpu.memory_space<vmem>>, vector<1x1x128x128xf32>
    %46 = vector.shape_cast %45 : vector<1x1x128x128xf32> to vector<128x128xf32>
    %cst_26 = arith.constant dense<0.000000e+00> : vector<32x128xf32>
    %47 = tpu.matmul %44, %46, %cst_26 {dimension_numbers = #tpu.dot_dimension_numbers<[1], [0], [0], [1], [0, 0, 1, 1], [], []>, precision = #tpu.contract_precision<fp32>} : vector<32x128xf32>, vector<128x128xf32>, vector<32x128xf32> -> vector<32x128xf32>
    %c0_27 = arith.constant 0 : index
    %c1_28 = arith.constant 1 : index
    %c0_29 = arith.constant 0 : index
    %c0_30 = arith.constant 0 : index
    %48 = vector.load %arg3[%c0_27, %c1_28, %c0_29, %c0_30] : memref<1x3x128x128xf32, #tpu.memory_space<vmem>>, vector<1x1x128x128xf32>
    %49 = vector.shape_cast %48 : vector<1x1x128x128xf32> to vector<128x128xf32>
    %cst_31 = arith.constant dense<0.000000e+00> : vector<32x128xf32>
    %50 = tpu.matmul %39, %49, %cst_31 {dimension_numbers = #tpu.dot_dimension_numbers<[1], [0], [0], [1], [0, 0, 1, 1], [], []>, precision = #tpu.contract_precision<fp32>} : vector<32x128xf32>, vector<128x128xf32>, vector<32x128xf32> -> vector<32x128xf32>
    %51 = arith.addf %47, %50 : vector<32x128xf32>
    %cst_32 = arith.constant dense<0.000000e+00> : vector<32x128xf32>
    %52 = tpu.matmul %43, %39, %cst_32 {dimension_numbers = #tpu.dot_dimension_numbers<[1], [0], [0], [1], [0, 0, 1, 1], [], []>, precision = #tpu.contract_precision<fp32>} : vector<32x32xf32>, vector<32x128xf32>, vector<32x128xf32> -> vector<32x128xf32>
    %c0_33 = arith.constant 0 : index
    %c2 = arith.constant 2 : index
    %c0_34 = arith.constant 0 : index
    %c0_35 = arith.constant 0 : index
    %53 = vector.load %arg3[%c0_33, %c2, %c0_34, %c0_35] : memref<1x3x128x128xf32, #tpu.memory_space<vmem>>, vector<1x1x128x128xf32>
    %54 = vector.shape_cast %53 : vector<1x1x128x128xf32> to vector<128x128xf32>
    %cst_36 = arith.constant dense<0.000000e+00> : vector<32x128xf32>
    %55 = tpu.matmul %52, %54, %cst_36 {dimension_numbers = #tpu.dot_dimension_numbers<[1], [0], [0], [1], [0, 0, 1, 1], [], []>, precision = #tpu.contract_precision<fp32>} : vector<32x128xf32>, vector<128x128xf32>, vector<32x128xf32> -> vector<32x128xf32>
    %56 = arith.addf %51, %55 : vector<32x128xf32>
    %57 = vector.extract_strided_slice %3 {offsets = [2, 0], sizes = [1, 128], strides = [1, 1]} : vector<4x128xf32> to vector<1x128xf32>
    %58 = vector.extract_strided_slice %3 {offsets = [3, 0], sizes = [1, 128], strides = [1, 1]} : vector<4x128xf32> to vector<1x128xf32>
    %cst_37 = arith.constant dense<0.000000e+00> : vector<128xf32>
    %59 = vector.multi_reduction <add>, %56, %cst_37 [0] : vector<32x128xf32> to vector<128xf32>
    %60 = vector.shape_cast %59 : vector<128xf32> to vector<1x128xf32>
    %61 = arith.mulf %56, %56 : vector<32x128xf32>
    %cst_38 = arith.constant dense<0.000000e+00> : vector<128xf32>
    %62 = vector.multi_reduction <add>, %61, %cst_38 [0] : vector<32x128xf32> to vector<128xf32>
    %63 = vector.shape_cast %62 : vector<128xf32> to vector<1x128xf32>
    %64 = tpu.concatenate %60, %63 in 0 : vector<1x128xf32>, vector<1x128xf32> -> vector<2x128xf32>
    %cst_39 = arith.constant dense<0.000000e+00> : vector<2x128xf32>
    %65 = tpu.matmul %64, %0, %cst_39 {dimension_numbers = #tpu.dot_dimension_numbers<[1], [0], [0], [1], [0, 0, 1, 1], [], []>, precision = #tpu.contract_precision<fp32>} : vector<2x128xf32>, vector<128x128xf32>, vector<2x128xf32> -> vector<2x128xf32>
    %66 = vector.extract_strided_slice %65 {offsets = [0, 0], sizes = [1, 128], strides = [1, 1]} : vector<2x128xf32> to vector<1x128xf32>
    %cst_40 = arith.constant 0.001953125 : f32
    %67 = vector.broadcast %cst_40 : f32 to vector<1x128xf32>
    %68 = arith.mulf %66, %67 : vector<1x128xf32>
    %69 = vector.extract_strided_slice %65 {offsets = [1, 0], sizes = [1, 128], strides = [1, 1]} : vector<2x128xf32> to vector<1x128xf32>
    %cst_41 = arith.constant 0.001953125 : f32
    %70 = vector.broadcast %cst_41 : f32 to vector<1x128xf32>
    %71 = arith.mulf %69, %70 : vector<1x128xf32>
    %72 = arith.mulf %68, %68 : vector<1x128xf32>
    %73 = arith.subf %71, %72 : vector<1x128xf32>
    %cst_42 = arith.constant 0.000000e+00 : f32
    %74 = vector.broadcast %cst_42 : f32 to vector<1x128xf32>
    %75 = arith.maximumf %73, %74 : vector<1x128xf32>
    %cst_43 = arith.constant 9.99999974E-6 : f32
    %76 = vector.broadcast %cst_43 : f32 to vector<1x128xf32>
    %77 = arith.addf %75, %76 : vector<1x128xf32>
    %78 = math.rsqrt %77 : vector<1x128xf32>
    %79 = arith.mulf %57, %78 : vector<1x128xf32>
    %80 = arith.mulf %68, %79 : vector<1x128xf32>
    %81 = arith.subf %58, %80 : vector<1x128xf32>
    %82 = tpu.concatenate %79, %81 in 0 : vector<1x128xf32>, vector<1x128xf32> -> vector<2x128xf32>
    %cst_44 = arith.constant dense<0.000000e+00> : vector<2x128xf32>
    %83 = tpu.matmul %82, %1, %cst_44 {dimension_numbers = #tpu.dot_dimension_numbers<[1], [0], [0], [1], [0, 0, 1, 1], [], []>, precision = #tpu.contract_precision<fp32>} : vector<2x128xf32>, vector<128x128xf32>, vector<2x128xf32> -> vector<2x128xf32>
    %84 = vector.extract_strided_slice %83 {offsets = [0, 0], sizes = [1, 128], strides = [1, 1]} : vector<2x128xf32> to vector<1x128xf32>
    %85 = vector.broadcast %84 : vector<1x128xf32> to vector<32x128xf32>
    %86 = arith.mulf %56, %85 : vector<32x128xf32>
    %87 = vector.extract_strided_slice %83 {offsets = [1, 0], sizes = [1, 128], strides = [1, 1]} : vector<2x128xf32> to vector<1x128xf32>
    %88 = vector.broadcast %87 : vector<1x128xf32> to vector<32x128xf32>
    %89 = arith.addf %86, %88 : vector<32x128xf32>
    %cst_45 = arith.constant 0.000000e+00 : f32
    %90 = vector.broadcast %cst_45 : f32 to vector<32x128xf32>
    %91 = arith.maximumf %89, %90 : vector<32x128xf32>
    %c0_46 = arith.constant 0 : index
    %c0_47 = arith.constant 0 : index
    %92 = vector.load %arg7[%c0_46, %c0_47] : memref<32x128xf32, #tpu.memory_space<vmem>>, vector<32x128xf32>
    tpu.vector_store %arg7[%c0_46, %c0_47], %91 {strides = array<i32>} : memref<32x128xf32, #tpu.memory_space<vmem>>, vector<32x128xf32>,
    return
  }
  func.func @transform_0(%arg0: i32) -> (i32, i32) {
    %c0_i32 = arith.constant 0 : i32
    %c0_i32_0 = arith.constant 0 : i32
    return %c0_i32, %arg0 : i32, i32
  }
  func.func @transform_1(%arg0: i32) -> (i32, i32, i32) {
    %c0_i32 = arith.constant 0 : i32
    %c0_i32_0 = arith.constant 0 : i32
    %c0_i32_1 = arith.constant 0 : i32
    return %arg0, %c0_i32, %c0_i32_0 : i32, i32, i32
  }
  func.func @transform_2(%arg0: i32) -> (i32, i32, i32, i32) {
    %c0_i32 = arith.constant 0 : i32
    %c0_i32_0 = arith.constant 0 : i32
    %c0_i32_1 = arith.constant 0 : i32
    %c0_i32_2 = arith.constant 0 : i32
    return %arg0, %c0_i32, %c0_i32_0, %c0_i32_1 : i32, i32, i32, i32
  }
  func.func @transform_3(%arg0: i32) -> (i32, i32) {
    %c0_i32 = arith.constant 0 : i32
    %c0_i32_0 = arith.constant 0 : i32
    %c0_i32_1 = arith.constant 0 : i32
    return %c0_i32, %c0_i32_0 : i32, i32
  }
  func.func @transform_4(%arg0: i32) -> (i32, i32) {
    %c0_i32 = arith.constant 0 : i32
    %c0_i32_0 = arith.constant 0 : i32
    %c0_i32_1 = arith.constant 0 : i32
    return %c0_i32, %c0_i32_0 : i32, i32
  }
  func.func @transform_5(%arg0: i32) -> (i32, i32, i32) {
    %c0_i32 = arith.constant 0 : i32
    %c0_i32_0 = arith.constant 0 : i32
    %c0_i32_1 = arith.constant 0 : i32
    %c0_i32_2 = arith.constant 0 : i32
    return %c0_i32, %c0_i32_0, %c0_i32_1 : i32, i32, i32
  }
  func.func @transform_6(%arg0: i32) -> (i32, i32) {
    %c0_i32 = arith.constant 0 : i32
    %c0_i32_0 = arith.constant 0 : i32
    return %c0_i32, %arg0 : i32, i32
  }
}

</mosaic_0001>

<llo_original>
// kernel: squeeze.7
$region0: #{squeeze.7}
  %s0 = inlined_call_operand.vmem [shape: f32[16,3,3], index: 0, kind: input, shape index: {}]
  %s1 = inlined_call_operand.vmem [shape: f32[2,8,3,3], index: 1, kind: output, shape index: {}]
  $region1: #{squeeze.7} parent=0
    #allocation0 [shape = 'u8[36864]{0}', space=vmem, size = 0x9000, scoped, tag = 'scoped mem for output reshape']
    #allocation1 [shape = 'u8[12288]{0}', space=vmem, size = 0x3000, scoped, tag = 'scoped mem for input reshape']
    %s3 = ssub.s32 16, 1
    %s4 = scalar_lea.vmem %s0, 8
    %v5 = vld [vmem:[%s4] sm:%s3]
    %s6 = scalar_lea.vmem [#allocation1], 16
    %7 = vst [vmem:[%s6] sm:%s3] %v5
    %s8 = scalar_lea.vmem %s0, 4
    %v9 = vld [vmem:[%s8] sm:%s3]
    %s10 = scalar_lea.vmem [#allocation1], 8
    %11 = vst [vmem:[%s10] sm:%s3] %v9
    %v12 = vld [vmem:[%s0] sm:%s3]
    %13 = vst [vmem:[#allocation1] sm:%s3] %v12
    %v14 = vld [vmem:[#allocation1] sm:$0x7]
    %vm15 = vcmask 64512
    %16 = vst.msk [vmem:[#allocation0] ss:$8 sm:$0x7] %vm15, %v14
    %s17 = scalar_lea.vmem [#allocation1], 8
    %v18 = vld [vmem:[%s17] sm:$0x7]
    %vm19 = vcmask 64512
    %s20 = scalar_lea.vmem [#allocation0], 24
    %21 = vst.msk [vmem:[%s20] ss:$8 sm:$0x7] %vm19, %v18
    %s22 = scalar_lea.vmem [#allocation1], 16
    %v23 = vld [vmem:[%s22] sm:$0x7]
    %vm24 = vcmask 64512
    %s25 = scalar_lea.vmem [#allocation0], 48
    %26 = vst.msk [vmem:[%s25] ss:$8 sm:$0x7] %vm24, %v23
    %v27 = vld.sshfl [vmem:[#allocation1] sm:$0xff pattern:$0xaaa98210]
    %s28 = scalar_lea.vmem [#allocation1], 10
    %v29 = vld [vmem:[%s28] sm:$0xc0]
    %vm30 = vcmask 1047558
    %v31 = vsel %vm30, %v29, %v27
    %32 = vrot.lane.b32.xlu0 %v31, 120
    %v33 = vpop.permute.xlu0 %32
    %vm34 = vcmask 64512
    %s35 = scalar_lea.vmem [#allocation0], 1
    %36 = vst.msk [vmem:[%s35] ss:$8 sm:$0xf] %vm34, %v33
    %s37 = scalar_lea.vmem [#allocation0], 1
    %38 = vst.msk [vmem:[%s37] ss:$8 sm:$0xf0] %vm34, %v33
    %s39 = scalar_lea.vmem [#allocation1], 18
    %v40 = vld [vmem:[%s39] sm:$0x1]
    %41 = vrot.lane.b32.xlu0 %v40, 120
    %v42 = vpop.permute.xlu0 %41
    %vm43 = vcmask 64512
    %s44 = scalar_lea.vmem [#allocation0], 65
    %45 = vst.msk [vmem:[%s44] sm:$0x1] %vm43, %v42
    %s47 = ssub.s32 4, 1
    %v48 = vld [vmem:[#allocation0] sm:%s47]
    %s50 = ssub.s32 4, 1
    %51 = vst [vmem:[%s1] sm:%s50] %v48
    %s52 = scalar_lea.vmem [#allocation0], 8
    %v53 = vld [vmem:[%s52] sm:%s47]
    %s55 = ssub.s32 4, 1
    %s56 = scalar_lea.vmem %s1, 2
    %57 = vst [vmem:[%s56] sm:%s55] %v53
    %s58 = scalar_lea.vmem [#allocation0], 16
    %v59 = vld [vmem:[%s58] sm:%s47]
    %s61 = ssub.s32 4, 1
    %s62 = scalar_lea.vmem %s1, 4
    %63 = vst [vmem:[%s62] sm:%s61] %v59
    %s64 = scalar_lea.vmem [#allocation0], 24
    %v65 = vld [vmem:[%s64] sm:%s47]
    %s67 = ssub.s32 4, 1
    %s68 = scalar_lea.vmem %s1, 6
    %69 = vst [vmem:[%s68] sm:%s67] %v65
    %s70 = scalar_lea.vmem [#allocation0], 32
    %v71 = vld [vmem:[%s70] sm:%s47]
    %s73 = ssub.s32 4, 1
    %s74 = scalar_lea.vmem %s1, 8
    %75 = vst [vmem:[%s74] sm:%s73] %v71
    %s76 = scalar_lea.vmem [#allocation0], 40
    %v77 = vld [vmem:[%s76] sm:%s47]
    %s79 = ssub.s32 4, 1
    %s80 = scalar_lea.vmem %s1, 10
    %81 = vst [vmem:[%s80] sm:%s79] %v77
    %s82 = scalar_lea.vmem [#allocation0], 48
    %v83 = vld [vmem:[%s82] sm:%s47]
    %s85 = ssub.s32 4, 1
    %s86 = scalar_lea.vmem %s1, 12
    %87 = vst [vmem:[%s86] sm:%s85] %v83
    %s88 = scalar_lea.vmem [#allocation0], 56
    %v89 = vld [vmem:[%s88] sm:%s47]
    %s91 = ssub.s32 4, 1
    %s92 = scalar_lea.vmem %s1, 14
    %93 = vst [vmem:[%s92] sm:%s91] %v89
    %s94 = scalar_lea.vmem [#allocation0], 64
    %v95 = vld [vmem:[%s94] sm:%s47]
    %s97 = ssub.s32 4, 1
    %s98 = scalar_lea.vmem %s1, 16
    %99 = vst [vmem:[%s98] sm:%s97] %v95

// kernel: fused_bn_relu_dwconv_bn_relu.1
$region0: #{fused_bn_relu_dwconv_bn_relu.1}
  #allocation0 [shape = 'u32[]', space=smem, size = 0x4, offset = 0x4, fixed_abs, tag = 'smem constant byte address 0x4 - core index']
  #allocation1 [shape = 'u32[72,128]{1,0:T(1,128)}', space=vmem, size = 0x9000, scoped, tag = 'internal scratch']
  %s0 = inlined_call_operand.vmem [shape: f32[32,256], index: 0, kind: input, shape index: {}]
  %s1 = inlined_call_operand.vmem [shape: f32[2,4,128], index: 1, kind: input, shape index: {}]
  %s2 = inlined_call_operand.vmem [shape: f32[2,3,128,128], index: 2, kind: input, shape index: {}]
  %s3 = inlined_call_operand.vmem [shape: f32[128,128], index: 3, kind: input, shape index: {}]
  %s4 = inlined_call_operand.vmem [shape: f32[128,128], index: 4, kind: input, shape index: {}]
  %s5 = inlined_call_operand.vmem [shape: f32[2,32,32], index: 5, kind: input, shape index: {}]
  %s6 = inlined_call_operand.vmem [shape: f32[32,256], index: 6, kind: output, shape index: {}]
  %s7 = sld [smem:[#allocation0]]
  $region129: #{fused_bn_relu_dwconv_bn_relu.1} parent=0
    _
  %s9 = ssub.s32 1, %s7
  %s10 = scalar_select 0, %s9, %s7
  $region1: #{fused_bn_relu_dwconv_bn_relu.1} parent=0
    #allocation2 [shape = 'u8[32768]{0}', space=vmem, size = 0x8000, scoped, tag = 'input window, operand 0']
    #allocation3 [shape = 'u8[32768]{0}', space=vmem, size = 0x8000, scoped, tag = 'output window, operand 0']
    loop: start=0, step=1, limit=4
    $region2: #{fused_bn_relu_dwconv_bn_relu.1} parent=1 // loop_pre_header
      _
    $region3: #{fused_bn_relu_dwconv_bn_relu.1} parent=1 // loop_header
      %s12 = sphi 0, %s16
      %p13 = scmp.ge.s32.totalorder %s12, 4
      %s22 = sphi 0, %s24
      %s25 = sphi 0, %s22
      %s26 = sphi 0, %s25
      %s42 = sphi 0, %s26
      %s48 = sphi 0, %s50
      %s51 = sphi 0, %s48
      %s52 = sphi 0, %s51
      %s68 = sphi 0, %s52
      %s74 = sphi 0, %s76
      %s77 = sphi 0, %s74
      %s78 = sphi 0, %s77
      %s94 = sphi 0, %s78
      %s98 = sphi 0, %s98
      %s100 = sphi 0, %s98
      %s101 = sphi 0, %s100
      %s115 = sphi 0, %s101
      %s119 = sphi 0, %s119
      %s121 = sphi 0, %s119
      %s122 = sphi 0, %s121
      %s136 = sphi 0, %s122
      %s140 = sphi 0, %s140
      %s142 = sphi 0, %s140
      %s143 = sphi 0, %s142
      %s157 = sphi 0, %s143
      %s163 = sphi 0, %s165
      %s166 = sphi 0, %s163
      %s167 = sphi 0, %s166
      %s183 = sphi 0, %s167
    $region4: #{fused_bn_relu_dwconv_bn_relu.1} parent=1 // loop_header_branch
      %15 = sbr.rel (%p13) target = $region8
    $region5: #{fused_bn_relu_dwconv_bn_relu.1} parent=1 // loop_body
      %s17 = ssub.s32 %s12, 1
      %s18 = ssub.s32 %s12, 2
      %s19 = sadd.s32 %s12, 1
      %s20 = ssub.s32 %s12, %s19
      %p21 = scmp.eq.s32.totalorder %s20, 0
      %s23 = sadd.s32 %s22, 1
      %s24 = scalar_select %p21, %s22, %s23
      %p27 = pneg %p21
      %p28 = scmp.eq.s32.totalorder %s12, 1
      %p29 = por %p27, %p28
      %p30 = scmp.ne.s32.totalorder %s22, %s25
      %p31 = scmp.eq.s32.totalorder %s12, 0
      %p32 = por %p30, %p31
      %p33 = scmp.ne.s32.totalorder %s22, %s25
      %p34 = scmp.eq.s32.totalorder %s17, 1
      %p35 = por %p33, %p34
      %p36 = scmp.ne.s32.totalorder %s25, %s26
      %p37 = scmp.eq.s32.totalorder %s17, 0
      %p38 = por %p36, %p37
      %p39 = scmp.ne.s32.totalorder %s25, %s26
      %p40 = scmp.eq.s32.totalorder %s18, 1
      %p41 = por %p39, %p40
      %p43 = scmp.ne.s32.totalorder %s26, %s42
      %p44 = scmp.eq.s32.totalorder %s18, 0
      %p45 = por %p43, %p44
      %s46 = ssub.s32 %s12, %s19
      %p47 = scmp.eq.s32.totalorder %s46, 0
      %s49 = sadd.s32 %s48, 1
      %s50 = scalar_select %p47, %s48, %s49
      %p53 = pneg %p47
      %p54 = scmp.eq.s32.totalorder %s12, 1
      %p55 = por %p53, %p54
      %p56 = scmp.ne.s32.totalorder %s48, %s51
      %p57 = scmp.eq.s32.totalorder %s12, 0
      %p58 = por %p56, %p57
      %p59 = scmp.ne.s32.totalorder %s48, %s51
      %p60 = scmp.eq.s32.totalorder %s17, 1
      %p61 = por %p59, %p60
      %p62 = scmp.ne.s32.totalorder %s51, %s52
      %p63 = scmp.eq.s32.totalorder %s17, 0
      %p64 = por %p62, %p63
      %p65 = scmp.ne.s32.totalorder %s51, %s52
      %p66 = scmp.eq.s32.totalorder %s18, 1
      %p67 = por %p65, %p66
      %p69 = scmp.ne.s32.totalorder %s52, %s68
      %p70 = scmp.eq.s32.totalorder %s18, 0
      %p71 = por %p69, %p70
      %s72 = ssub.s32 %s12, %s19
      %p73 = scmp.eq.s32.totalorder %s72, 0
      %s75 = sadd.s32 %s74, 1
      %s76 = scalar_select %p73, %s74, %s75
      %p79 = pneg %p73
      %p80 = scmp.eq.s32.totalorder %s12, 1
      %p81 = por %p79, %p80
      %p82 = scmp.ne.s32.totalorder %s74, %s77
      %p83 = scmp.eq.s32.totalorder %s12, 0
      %p84 = por %p82, %p83
      %p85 = scmp.ne.s32.totalorder %s74, %s77
      %p86 = scmp.eq.s32.totalorder %s17, 1
      %p87 = por %p85, %p86
      %p88 = scmp.ne.s32.totalorder %s77, %s78
      %p89 = scmp.eq.s32.totalorder %s17, 0
      %p90 = por %p88, %p89
      %p91 = scmp.ne.s32.totalorder %s77, %s78
      %p92 = scmp.eq.s32.totalorder %s18, 1
      %p93 = por %p91, %p92
      %p95 = scmp.ne.s32.totalorder %s78, %s94
      %p96 = scmp.eq.s32.totalorder %s18, 0
      %p97 = por %p95, %p96
      %s99 = sadd.s32 %s98, 1
      %p102 = scmp.eq.s32.totalorder %s12, 1
      %p103 = scmp.ne.s32.totalorder %s98, %s100
      %p104 = scmp.eq.s32.totalorder %s12, 0
      %p105 = por %p103, %p104
      %p106 = scmp.ne.s32.totalorder %s98, %s100
      %p107 = scmp.eq.s32.totalorder %s17, 1
      %p108 = por %p106, %p107
      %p109 = scmp.ne.s32.totalorder %s100, %s101
      %p110 = scmp.eq.s32.totalorder %s17, 0
      %p111 = por %p109, %p110
      %p112 = scmp.ne.s32.totalorder %s100, %s101
      %p113 = scmp.eq.s32.totalorder %s18, 1
      %p114 = por %p112, %p113
      %p116 = scmp.ne.s32.totalorder %s101, %s115
      %p117 = scmp.eq.s32.totalorder %s18, 0
      %p118 = por %p116, %p117
      %s120 = sadd.s32 %s119, 1
      %p123 = scmp.eq.s32.totalorder %s12, 1
      %p124 = scmp.ne.s32.totalorder %s119, %s121
      %p125 = scmp.eq.s32.totalorder %s12, 0
      %p126 = por %p124, %p125
      %p127 = scmp.ne.s32.totalorder %s119, %s121
      %p128 = scmp.eq.s32.totalorder %s17, 1
      %p129 = por %p127, %p128
      %p130 = scmp.ne.s32.totalorder %s121, %s122
      %p131 = scmp.eq.s32.totalorder %s17, 0
      %p132 = por %p130, %p131
      %p133 = scmp.ne.s32.totalorder %s121, %s122
      %p134 = scmp.eq.s32.totalorder %s18, 1
      %p135 = por %p133, %p134
      %p137 = scmp.ne.s32.totalorder %s122, %s136
      %p138 = scmp.eq.s32.totalorder %s18, 0
      %p139 = por %p137, %p138
      %s141 = sadd.s32 %s140, 1
      %p144 = scmp.eq.s32.totalorder %s12, 1
      %p145 = scmp.ne.s32.totalorder %s140, %s142
      %p146 = scmp.eq.s32.totalorder %s12, 0
      %p147 = por %p145, %p146
      %p148 = scmp.ne.s32.totalorder %s140, %s142
      %p149 = scmp.eq.s32.totalorder %s17, 1
      %p150 = por %p148, %p149
      %p151 = scmp.ne.s32.totalorder %s142, %s143
      %p152 = scmp.eq.s32.totalorder %s17, 0
      %p153 = por %p151, %p152
      %p154 = scmp.ne.s32.totalorder %s142, %s143
      %p155 = scmp.eq.s32.totalorder %s18, 1
      %p156 = por %p154, %p155
      %p158 = scmp.ne.s32.totalorder %s143, %s157
      %p159 = scmp.eq.s32.totalorder %s18, 0
      %p160 = por %p158, %p159
      %s161 = ssub.s32 %s12, %s19
      %p162 = scmp.eq.s32.totalorder %s161, 0
      %s164 = sadd.s32 %s163, 1
      %s165 = scalar_select %p162, %s163, %s164
      %p168 = pneg %p162
      %p169 = scmp.eq.s32.totalorder %s12, 1
      %p170 = por %p168, %p169
      %p171 = scmp.ne.s32.totalorder %s163, %s166
      %p172 = scmp.eq.s32.totalorder %s12, 0
      %p173 = por %p171, %p172
      %p174 = scmp.ne.s32.totalorder %s163, %s166
      %p175 = scmp.eq.s32.totalorder %s17, 1
      %p176 = por %p174, %p175
      %p177 = scmp.ne.s32.totalorder %s166, %s167
      %p178 = scmp.eq.s32.totalorder %s17, 0
      %p179 = por %p177, %p178
      %p180 = scmp.ne.s32.totalorder %s166, %s167
      %p181 = scmp.eq.s32.totalorder %s18, 1
      %p182 = por %p180, %p181
      %p184 = scmp.ne.s32.totalorder %s167, %s183
      %p185 = scmp.eq.s32.totalorder %s18, 0
      %p186 = por %p184, %p185
      %p187 = scmp.le.s32.totalorder 1, %s12
      %p188 = scmp.lt.s32.totalorder %s12, 3
      %p189 = pnand %p187, %p188
      %p190 = pneg %p189
      // Predicated region
      $region9: #{fused_bn_relu_dwconv_bn_relu.1} parent=5 // pred_check
        _
      $region10: #{fused_bn_relu_dwconv_bn_relu.1} parent=5 // pred_check_branch
        %192 = sbr.rel (%p189) target = $region12
      $region11: #{fused_bn_relu_dwconv_bn_relu.1} parent=5 // pred_region
        %s193 = ssub.s32 %s12, 1
        // Predicated region
        $region13: #{fused_bn_relu_dwconv_bn_relu.1} parent=11 // pred_check
          %p194 = pneg %p111
        $region14: #{fused_bn_relu_dwconv_bn_relu.1} parent=11 // pred_check_branch
          %196 = sbr.rel (%p194) target = $region16
        $region15: #{fused_bn_relu_dwconv_bn_relu.1} parent=11 // pred_region
          _
        $region16: #{fused_bn_relu_dwconv_bn_relu.1} parent=11 // pred_fallthru
          _
        // Predicated region
        $region17: #{fused_bn_relu_dwconv_bn_relu.1} parent=11 // pred_check
          %p197 = pneg %p132
        $region18: #{fused_bn_relu_dwconv_bn_relu.1} parent=11 // pred_check_branch
          %199 = sbr.rel (%p197) target = $region20
        $region19: #{fused_bn_relu_dwconv_bn_relu.1} parent=11 // pred_region
          _
        $region20: #{fused_bn_relu_dwconv_bn_relu.1} parent=11 // pred_fallthru
          _
        // Predicated region
        $region21: #{fused_bn_relu_dwconv_bn_relu.1} parent=11 // pred_check
          %p200 = pneg %p153
        $region22: #{fused_bn_relu_dwconv_bn_relu.1} parent=11 // pred_check_branch
          %202 = sbr.rel (%p200) target = $region24
        $region23: #{fused_bn_relu_dwconv_bn_relu.1} parent=11 // pred_region
          _
        $region24: #{fused_bn_relu_dwconv_bn_relu.1} parent=11 // pred_fallthru
          _
      $region12: #{fused_bn_relu_dwconv_bn_relu.1} parent=5 // pred_fallthru
        _
      %p203 = scmp.lt.s32.totalorder %s12, 2
      // Predicated region
      $region25: #{fused_bn_relu_dwconv_bn_relu.1} parent=5 // pred_check
        %p204 = pneg %p203
      $region26: #{fused_bn_relu_dwconv_bn_relu.1} parent=5 // pred_check_branch
        %206 = sbr.rel (%p204) target = $region28
      $region27: #{fused_bn_relu_dwconv_bn_relu.1} parent=5 // pred_region
        // Predicated region
        $region29: #{fused_bn_relu_dwconv_bn_relu.1} parent=27 // pred_check
          %p207 = pneg %p32
        $region30: #{fused_bn_relu_dwconv_bn_relu.1} parent=27 // pred_check_branch
          %209 = sbr.rel (%p207) target = $region32
        $region31: #{fused_bn_relu_dwconv_bn_relu.1} parent=27 // pred_region
          %s210 = sand.u32 %s22, 1
          %s211 = sand.u32 %s22, 1
          %s212 = smul.addr %s211, 32
          %s213 = scalar_lea.vmem [#allocation2], %s212
          %s214 = smul.addr %s12, 8
          %s215 = scalar_lea.vmem %s0, %s214
          // Predicated region
          $region33: #{fused_bn_relu_dwconv_bn_relu.1} parent=31 // pred_check
            _
          $region34: #{fused_bn_relu_dwconv_bn_relu.1} parent=31 // pred_check_branch
            %217 = sbr.rel (0) target = $region36
          $region35: #{fused_bn_relu_dwconv_bn_relu.1} parent=31 // pred_region
            // Predicated region
            $region37: #{fused_bn_relu_dwconv_bn_relu.1} parent=35 // pred_check
              _
            $region38: #{fused_bn_relu_dwconv_bn_relu.1} parent=35 // pred_check_branch
              %219 = sbr.rel (0) target = $region40
            $region39: #{fused_bn_relu_dwconv_bn_relu.1} parent=35 // pred_region
              // Predicated region
              $region52: #{fused_bn_relu_dwconv_bn_relu.1} parent=39 // pred_check
                _
              $region53: #{fused_bn_relu_dwconv_bn_relu.1} parent=39 // pred_check_branch
                %241 = sbr.rel (0) target = $region55
              $region54: #{fused_bn_relu_dwconv_bn_relu.1} parent=39 // pred_region
                loop: start=0, step=1, limit=1
                $region56: #{fused_bn_relu_dwconv_bn_relu.1} parent=54 // loop_pre_header
                  _
                $region57: #{fused_bn_relu_dwconv_bn_relu.1} parent=54 // loop_header
                  %s243 = sphi 0, %s247
                  %p244 = scmp.ge.s32.totalorder %s243, 1
                  %s248 = sphi %s215, %s215
                  %s249 = sphi %s213, %s213
                $region58: #{fused_bn_relu_dwconv_bn_relu.1} parent=54 // loop_header_branch
                  %246 = sbr.rel (%p244) target = $region62
                $region59: #{fused_bn_relu_dwconv_bn_relu.1} parent=54 // loop_body
                  %v250 = vld [vmem:[%s248] sm:$0xff]
                  %251 = vst [vmem:[%s249] sm:$0xff] %v250
                  %v252 = vld [vmem:[%s248 + $0x10] sm:$0xff]
                  %253 = vst [vmem:[%s249 + $0x8] sm:$0xff] %v252
                  %v254 = vld [vmem:[%s248 + $0x20] sm:$0xff]
                  %255 = vst [vmem:[%s249 + $0x10] sm:$0xff] %v254
                  %v256 = vld [vmem:[%s248 + $0x30] sm:$0xff]
                  %257 = vst [vmem:[%s249 + $0x18] sm:$0xff] %v256
                $region60: #{fused_bn_relu_dwconv_bn_relu.1} parent=54 // loop_footer
                  %s247 = sadd.s32 1, %s243
                $region61: #{fused_bn_relu_dwconv_bn_relu.1} parent=54 // loop_footer_branch
                  %242 = sbr.rel target = $region57
                $region62: #{fused_bn_relu_dwconv_bn_relu.1} parent=54 // loop_exit
                  _
              $region55: #{fused_bn_relu_dwconv_bn_relu.1} parent=39 // pred_fallthru
                _
              // Predicated region
              $region63: #{fused_bn_relu_dwconv_bn_relu.1} parent=39 // pred_check
                _
              $region64: #{fused_bn_relu_dwconv_bn_relu.1} parent=39 // pred_check_branch
                %259 = sbr.rel target = $region66
              $region65: #{fused_bn_relu_dwconv_bn_relu.1} parent=39 // pred_region
                _
              $region66: #{fused_bn_relu_dwconv_bn_relu.1} parent=39 // pred_fallthru
                _
            $region40: #{fused_bn_relu_dwconv_bn_relu.1} parent=35 // pred_fallthru
              _
            // Predicated region
            $region41: #{fused_bn_relu_dwconv_bn_relu.1} parent=35 // pred_check
              _
            $region42: #{fused_bn_relu_dwconv_bn_relu.1} parent=35 // pred_check_branch
              %221 = sbr.rel target = $region44
            $region43: #{fused_bn_relu_dwconv_bn_relu.1} parent=35 // pred_region
              %s223 = ssub.s32 256, 1
              loop: start=0, step=1, limit=1
              $region45: #{fused_bn_relu_dwconv_bn_relu.1} parent=43 // loop_pre_header
                _
              $region46: #{fused_bn_relu_dwconv_bn_relu.1} parent=43 // loop_header
                %s225 = sphi 0, %s229
                %p226 = scmp.ge.s32.totalorder %s225, 1
                %s230 = sphi %s215, %s215
                %s231 = sphi %s213, %s213
              $region47: #{fused_bn_relu_dwconv_bn_relu.1} parent=43 // loop_header_branch
                %228 = sbr.rel (%p226) target = $region51
              $region48: #{fused_bn_relu_dwconv_bn_relu.1} parent=43 // loop_body
                %v232 = vld [vmem:[%s230] sm:%s223]
                %233 = vst [vmem:[%s231] sm:%s223] %v232
                %v234 = vld [vmem:[%s230 + $0x10] sm:%s223]
                %235 = vst [vmem:[%s231 + $0x8] sm:%s223] %v234
                %v236 = vld [vmem:[%s230 + $0x20] sm:%s223]
                %237 = vst [vmem:[%s231 + $0x10] sm:%s223] %v236
                %v238 = vld [vmem:[%s230 + $0x30] sm:%s223]
                %239 = vst [vmem:[%s231 + $0x18] sm:%s223] %v238
              $region49: #{fused_bn_relu_dwconv_bn_relu.1} parent=43 // loop_footer
                %s229 = sadd.s32 1, %s225
              $region50: #{fused_bn_relu_dwconv_bn_relu.1} parent=43 // loop_footer_branch
                %224 = sbr.rel target = $region46
              $region51: #{fused_bn_relu_dwconv_bn_relu.1} parent=43 // loop_exit
                _
            $region44: #{fused_bn_relu_dwconv_bn_relu.1} parent=35 // pred_fallthru
              _
          $region36: #{fused_bn_relu_dwconv_bn_relu.1} parent=31 // pred_fallthru
            _
          %260 = vnop
        $region32: #{fused_bn_relu_dwconv_bn_relu.1} parent=27 // pred_fallthru
          _
        // Predicated region
        $region67: #{fused_bn_relu_dwconv_bn_relu.1} parent=27 // pred_check
          %p261 = pneg %p58
        $region68: #{fused_bn_relu_dwconv_bn_relu.1} parent=27 // pred_check_branch
          %263 = sbr.rel (%p261) target = $region70
        $region69: #{fused_bn_relu_dwconv_bn_relu.1} parent=27 // pred_region
          %p264 = scmp.lt.s32.totalorder %s12, 1
          %s265 = scalar_select %p264, %s12, 1
          %s266 = smul.addr %s265, 4
          %s267 = scalar_lea.vmem %s1, %s266
        $region70: #{fused_bn_relu_dwconv_bn_relu.1} parent=27 // pred_fallthru
          _
        // Predicated region
        $region71: #{fused_bn_relu_dwconv_bn_relu.1} parent=27 // pred_check
          %p268 = pneg %p84
        $region72: #{fused_bn_relu_dwconv_bn_relu.1} parent=27 // pred_check_branch
          %270 = sbr.rel (%p268) target = $region74
        $region73: #{fused_bn_relu_dwconv_bn_relu.1} parent=27 // pred_region
          %p271 = scmp.lt.s32.totalorder %s12, 1
          %s272 = scalar_select %p271, %s12, 1
          %s273 = smul.addr %s272, 48
          %s274 = smul.addr %s273, 8
          %s275 = scalar_lea.vmem %s2, %s274
        $region74: #{fused_bn_relu_dwconv_bn_relu.1} parent=27 // pred_fallthru
          _
      $region28: #{fused_bn_relu_dwconv_bn_relu.1} parent=5 // pred_fallthru
        _
      %p276 = scmp.le.s32.totalorder 1, %s12
      %p277 = scmp.lt.s32.totalorder %s12, 3
      %p278 = pnand %p276, %p277
      %p279 = pneg %p278
      // Predicated region
      $region75: #{fused_bn_relu_dwconv_bn_relu.1} parent=5 // pred_check
        _
      $region76: #{fused_bn_relu_dwconv_bn_relu.1} parent=5 // pred_check_branch
        %281 = sbr.rel (%p278) target = $region78
      $region77: #{fused_bn_relu_dwconv_bn_relu.1} parent=5 // pred_region
        %s282 = ssub.s32 %s12, 1
        %s283 = sand.u32 %s25, 1
        %s284 = sand.u32 %s25, 1
        %s285 = smul.addr %s284, 32
        %s286 = scalar_lea.vmem [#allocation2], %s285
        // Predicated region
        $region79: #{fused_bn_relu_dwconv_bn_relu.1} parent=77 // pred_check
          %p287 = pneg %p38
        $region80: #{fused_bn_relu_dwconv_bn_relu.1} parent=77 // pred_check_branch
          %289 = sbr.rel (%p287) target = $region82
        $region81: #{fused_bn_relu_dwconv_bn_relu.1} parent=77 // pred_region
          _
        $region82: #{fused_bn_relu_dwconv_bn_relu.1} parent=77 // pred_fallthru
          _
        %s290 = sand.u32 %s25, 1
        %s291 = sand.u32 %s25, 1
        %s292 = smul.addr %s291, 32
        %s293 = scalar_lea.vmem [#allocation2], %s292
        %p294 = pneg %p38
        %p295 = pneg %p35
        %p296 = scmp.lt.s32.totalorder %s17, 1
        %s297 = scalar_select %p296, %s17, 1
        %s298 = smul.addr %s297, 4
        %s299 = scalar_lea.vmem %s1, %s298
        %p300 = pneg %p64
        %p301 = pneg %p61
        %p302 = scmp.lt.s32.totalorder %s17, 1
        %s303 = scalar_select %p302, %s17, 1
        %s304 = smul.addr %s303, 48
        %s305 = smul.addr %s304, 8
        %s306 = scalar_lea.vmem %s2, %s305
        %p307 = pneg %p90
        %p308 = pneg %p87
        %p309 = pneg %p111
        %p310 = pneg %p108
        %p311 = pneg %p132
        %p312 = pneg %p129
        %p313 = pneg %p153
        %p314 = pneg %p150
        %p315 = pneg %p179
        %p316 = pneg %p176
        %s317 = sand.u32 %s166, 1
        %s318 = sand.u32 %s166, 1
        %s319 = smul.addr %s318, 32
        %s320 = scalar_lea.vmem [#allocation3], %s319
        %p321 = scmp.lt.s32.totalorder %s17, 1
        %s322 = scalar_select %p321, %s17, 1
        %s323 = smul.addr %s322, 4
        %s324 = scalar_lea.vmem %s1, %s323
        %p325 = scmp.lt.s32.totalorder %s17, 1
        %s326 = scalar_select %p325, %s17, 1
        %s327 = smul.addr %s326, 48
        %s328 = smul.addr %s327, 8
        %s329 = scalar_lea.vmem %s2, %s328
        %v330 = vld [vmem:[%s3] sm:$0xff]
        %v331 = vld [vmem:[%s3 + $0x8] sm:$0xff]
        %v332 = vld [vmem:[%s3 + $0x10] sm:$0xff]
        %v333 = vld [vmem:[%s3 + $0x18] sm:$0xff]
        %v334 = vld [vmem:[%s3 + $0x20] sm:$0xff]
        %v335 = vld [vmem:[%s3 + $0x28] sm:$0xff]
        %v336 = vld [vmem:[%s3 + $0x30] sm:$0xff]
        %v337 = vld [vmem:[%s3 + $0x38] sm:$0xff]
        %v338 = vld [vmem:[%s3 + $0x40] sm:$0xff]
        %v339 = vld [vmem:[%s3 + $0x48] sm:$0xff]
        %v340 = vld [vmem:[%s3 + $0x50] sm:$0xff]
        %v341 = vld [vmem:[%s3 + $0x58] sm:$0xff]
        %v342 = vld [vmem:[%s3 + $0x60] sm:$0xff]
        %v343 = vld [vmem:[%s3 + $0x68] sm:$0xff]
        %v344 = vld [vmem:[%s3 + $0x70] sm:$0xff]
        %v345 = vld [vmem:[%s3 + $0x78] sm:$0xff]
        %v346 = vld [vmem:[%s4] sm:$0xff]
        %v347 = vld [vmem:[%s4 + $0x8] sm:$0xff]
        %v348 = vld [vmem:[%s4 + $0x10] sm:$0xff]
        %v349 = vld [vmem:[%s4 + $0x18] sm:$0xff]
        %v350 = vld [vmem:[%s4 + $0x20] sm:$0xff]
        %v351 = vld [vmem:[%s4 + $0x28] sm:$0xff]
        %v352 = vld [vmem:[%s4 + $0x30] sm:$0xff]
        %v353 = vld [vmem:[%s4 + $0x38] sm:$0xff]
        %v354 = vld [vmem:[%s4 + $0x40] sm:$0xff]
        %v355 = vld [vmem:[%s4 + $0x48] sm:$0xff]
        %v356 = vld [vmem:[%s4 + $0x50] sm:$0xff]
        %v357 = vld [vmem:[%s4 + $0x58] sm:$0xff]
        %v358 = vld [vmem:[%s4 + $0x60] sm:$0xff]
        %v359 = vld [vmem:[%s4 + $0x68] sm:$0xff]
        %v360 = vld [vmem:[%s4 + $0x70] sm:$0xff]
        %v361 = vld [vmem:[%s4 + $0x78] sm:$0xff]
        %v362 = vld [vmem:[%s324] sm:$0xf]
        %v363 = vld [vmem:[%s286] sm:$0xff]
        %v364 = vld [vmem:[%s286 + $0x8] sm:$0xff]
        %v365 = vld [vmem:[%s286 + $0x10] sm:$0xff]
        %v366 = vld [vmem:[%s286 + $0x18] sm:$0xff]
        %v367 = vadd.f32 %v363, %v364
        %v368 = vadd.f32 %v367, %v365
        %v369 = vadd.f32 %v368, %v366
        %v370 = vrot.slane %v369, 4
        %v371 = vadd.f32 %v369, %v370
        %v372 = vrot.slane %v371, 2
        %v373 = vadd.f32 %v371, %v372
        %v374 = vrot.slane %v373, 1
        %v375 = vadd.f32 %v373, %v374
        %v376 = vmul.f32 %v363, %v363
        %v377 = vmul.f32 %v364, %v364
        %v378 = vmul.f32 %v365, %v365
        %v379 = vmul.f32 %v366, %v366
        %v380 = vadd.f32 %v376, %v377
        %v381 = vadd.f32 %v380, %v378
        %v382 = vadd.f32 %v381, %v379
        %v383 = vrot.slane %v382, 4
        %v384 = vadd.f32 %v382, %v383
        %v385 = vrot.slane %v384, 2
        %v386 = vadd.f32 %v384, %v385
        %v387 = vrot.slane %v386, 1
        %v388 = vadd.f32 %v386, %v387
        %vm389 = vcmask 1040384
        %v390 = vsel %vm389, %v375, %v388
        %v391 = vand.u32 %v345, 4294901760
        %392 = vmatpush.msra.mxu0 %v391
        %v393 = vand.u32 %v344, 4294901760
        %394 = vmatpush.msra.mxu0 %v393
        %v395 = vand.u32 %v343, 4294901760
        %396 = vmatpush.msra.mxu0 %v395
        %v397 = vand.u32 %v342, 4294901760
        %398 = vmatpush.msra.mxu0 %v397
        %v399 = vand.u32 %v341, 4294901760
        %400 = vmatpush.msra.mxu0 %v399
        %v401 = vand.u32 %v340, 4294901760
        %402 = vmatpush.msra.mxu0 %v401
        %v403 = vand.u32 %v339, 4294901760
        %404 = vmatpush.msra.mxu0 %v403
        %v405 = vand.u32 %v338, 4294901760
        %406 = vmatpush.msra.mxu0 %v405
        %v407 = vand.u32 %v337, 4294901760
        %408 = vmatpush.msra.mxu0 %v407
        %v409 = vand.u32 %v336, 4294901760
        %410 = vmatpush.msra.mxu0 %v409
        %v411 = vand.u32 %v335, 4294901760
        %412 = vmatpush.msra.mxu0 %v411
        %v413 = vand.u32 %v334, 4294901760
        %414 = vmatpush.msra.mxu0 %v413
        %v415 = vand.u32 %v333, 4294901760
        %416 = vmatpush.msra.mxu0 %v415
        %v417 = vand.u32 %v332, 4294901760
        %418 = vmatpush.msra.mxu0 %v417
        %v419 = vand.u32 %v331, 4294901760
        %420 = vmatpush.msra.mxu0 %v419
        %v421 = vand.u32 %v330, 4294901760
        %422 = vmatpush.msra.mxu0 %v421
        %v423 = vand.u32 %v390, 4294901760
        %v424 = vsub.f32 %v390, %v423
        %v425 = vand.u32 %v424, 4294901760
        %v426 = vsub.f32 %v424, %v425
        %v427 = vand.u32 %v426, 4294901760
        %428 = vmatmul.f32.gmra.mxu0 %v427
        %v429 = vpop.f32.mrf.mxu0
        %v430 = vadd.f32 0.0, %v429
        %431 = vdwg.mxu0
        %v432 = vand.u32 %v345, 4294901760
        %v433 = vsub.f32 %v345, %v432
        %v434 = vand.u32 %v433, 4294901760
        %v435 = vsub.f32 %v433, %v434
        %v436 = vand.u32 %v435, 4294901760
        %437 = vmatpush.msra.mxu0 %v436
        %v438 = vand.u32 %v344, 4294901760
        %v439 = vsub.f32 %v344, %v438
        %v440 = vand.u32 %v439, 4294901760
        %v441 = vsub.f32 %v439, %v440
        %v442 = vand.u32 %v441, 4294901760
        %443 = vmatpush.msra.mxu0 %v442
        %v444 = vand.u32 %v343, 4294901760
        %v445 = vsub.f32 %v343, %v444
        %v446 = vand.u32 %v445, 4294901760
        %v447 = vsub.f32 %v445, %v446
        %v448 = vand.u32 %v447, 4294901760
        %449 = vmatpush.msra.mxu0 %v448
        %v450 = vand.u32 %v342, 4294901760
        %v451 = vsub.f32 %v342, %v450
        %v452 = vand.u32 %v451, 4294901760
        %v453 = vsub.f32 %v451, %v452
        %v454 = vand.u32 %v453, 4294901760
        %455 = vmatpush.msra.mxu0 %v454
        %v456 = vand.u32 %v341, 4294901760
        %v457 = vsub.f32 %v341, %v456
        %v458 = vand.u32 %v457, 4294901760
        %v459 = vsub.f32 %v457, %v458
        %v460 = vand.u32 %v459, 4294901760
        %461 = vmatpush.msra.mxu0 %v460
        %v462 = vand.u32 %v340, 4294901760
        %v463 = vsub.f32 %v340, %v462
        %v464 = vand.u32 %v463, 4294901760
        %v465 = vsub.f32 %v463, %v464
        %v466 = vand.u32 %v465, 4294901760
        %467 = vmatpush.msra.mxu0 %v466
        %v468 = vand.u32 %v339, 4294901760
        %v469 = vsub.f32 %v339, %v468
        %v470 = vand.u32 %v469, 4294901760
        %v471 = vsub.f32 %v469, %v470
        %v472 = vand.u32 %v471, 4294901760
        %473 = vmatpush.msra.mxu0 %v472
        %v474 = vand.u32 %v338, 4294901760
        %v475 = vsub.f32 %v338, %v474
        %v476 = vand.u32 %v475, 4294901760
        %v477 = vsub.f32 %v475, %v476
        %v478 = vand.u32 %v477, 4294901760
        %479 = vmatpush.msra.mxu0 %v478
        %v480 = vand.u32 %v337, 4294901760
        %v481 = vsub.f32 %v337, %v480
        %v482 = vand.u32 %v481, 4294901760
        %v483 = vsub.f32 %v481, %v482
        %v484 = vand.u32 %v483, 4294901760
        %485 = vmatpush.msra.mxu0 %v484
        %v486 = vand.u32 %v336, 4294901760
        %v487 = vsub.f32 %v336, %v486
        %v488 = vand.u32 %v487, 4294901760
        %v489 = vsub.f32 %v487, %v488
        %v490 = vand.u32 %v489, 4294901760
        %491 = vmatpush.msra.mxu0 %v490
        %v492 = vand.u32 %v335, 4294901760
        %v493 = vsub.f32 %v335, %v492
        %v494 = vand.u32 %v493, 4294901760
        %v495 = vsub.f32 %v493, %v494
        %v496 = vand.u32 %v495, 4294901760
        %497 = vmatpush.msra.mxu0 %v496
        %v498 = vand.u32 %v334, 4294901760
        %v499 = vsub.f32 %v334, %v498
        %v500 = vand.u32 %v499, 4294901760
        %v501 = vsub.f32 %v499, %v500
        %v502 = vand.u32 %v501, 4294901760
        %503 = vmatpush.msra.mxu0 %v502
        %v504 = vand.u32 %v333, 4294901760
        %v505 = vsub.f32 %v333, %v504
        %v506 = vand.u32 %v505, 4294901760
        %v507 = vsub.f32 %v505, %v506
        %v508 = vand.u32 %v507, 4294901760
        %509 = vmatpush.msra.mxu0 %v508
        %v510 = vand.u32 %v332, 4294901760
        %v511 = vsub.f32 %v332, %v510
        %v512 = vand.u32 %v511, 4294901760
        %v513 = vsub.f32 %v511, %v512
        %v514 = vand.u32 %v513, 4294901760
        %515 = vmatpush.msra.mxu0 %v514
        %v516 = vand.u32 %v331, 4294901760
        %v517 = vsub.f32 %v331, %v516
        %v518 = vand.u32 %v517, 4294901760
        %v519 = vsub.f32 %v517, %v518
        %v520 = vand.u32 %v519, 4294901760
        %521 = vmatpush.msra.mxu0 %v520
        %v522 = vand.u32 %v330, 4294901760
        %v523 = vsub.f32 %v330, %v522
        %v524 = vand.u32 %v523, 4294901760
        %v525 = vsub.f32 %v523, %v524
        %v526 = vand.u32 %v525, 4294901760
        %527 = vmatpush.msra.mxu0 %v526
        %v528 = vand.u32 %v390, 4294901760
        %529 = vmatmul.f32.gmra.mxu0 %v528
        %v530 = vpop.f32.mrf.mxu0
        %v531 = vadd.f32 %v430, %v530
        %532 = vdwg.mxu0
        %v533 = vand.u32 %v345, 4294901760
        %v534 = vsub.f32 %v345, %v533
        %535 = vmatpush.msra.mxu0 %v534
        %v536 = vand.u32 %v344, 4294901760
        %v537 = vsub.f32 %v344, %v536
        %538 = vmatpush.msra.mxu0 %v537
        %v539 = vand.u32 %v343, 4294901760
        %v540 = vsub.f32 %v343, %v539
        %541 = vmatpush.msra.mxu0 %v540
        %v542 = vand.u32 %v342, 4294901760
        %v543 = vsub.f32 %v342, %v542
        %544 = vmatpush.msra.mxu0 %v543
        %v545 = vand.u32 %v341, 4294901760
        %v546 = vsub.f32 %v341, %v545
        %547 = vmatpush.msra.mxu0 %v546
        %v548 = vand.u32 %v340, 4294901760
        %v549 = vsub.f32 %v340, %v548
        %550 = vmatpush.msra.mxu0 %v549
        %v551 = vand.u32 %v339, 4294901760
        %v552 = vsub.f32 %v339, %v551
        %553 = vmatpush.msra.mxu0 %v552
        %v554 = vand.u32 %v338, 4294901760
        %v555 = vsub.f32 %v338, %v554
        %556 = vmatpush.msra.mxu0 %v555
        %v557 = vand.u32 %v337, 4294901760
        %v558 = vsub.f32 %v337, %v557
        %559 = vmatpush.msra.mxu0 %v558
        %v560 = vand.u32 %v336, 4294901760
        %v561 = vsub.f32 %v336, %v560
        %562 = vmatpush.msra.mxu0 %v561
        %v563 = vand.u32 %v335, 4294901760
        %v564 = vsub.f32 %v335, %v563
        %565 = vmatpush.msra.mxu0 %v564
        %v566 = vand.u32 %v334, 4294901760
        %v567 = vsub.f32 %v334, %v566
        %568 = vmatpush.msra.mxu0 %v567
        %v569 = vand.u32 %v333, 4294901760
        %v570 = vsub.f32 %v333, %v569
        %571 = vmatpush.msra.mxu0 %v570
        %v572 = vand.u32 %v332, 4294901760
        %v573 = vsub.f32 %v332, %v572
        %574 = vmatpush.msra.mxu0 %v573
        %v575 = vand.u32 %v331, 4294901760
        %v576 = vsub.f32 %v331, %v575
        %577 = vmatpush.msra.mxu0 %v576
        %v578 = vand.u32 %v330, 4294901760
        %v579 = vsub.f32 %v330, %v578
        %580 = vmatpush.msra.mxu0 %v579
        %v581 = vand.u32 %v390, 4294901760
        %v582 = vsub.f32 %v390, %v581
        %583 = vmatmul.f32.gmra.mxu0 %v582
        %v584 = vpop.f32.mrf.mxu0
        %v585 = vadd.f32 %v531, %v584
        %586 = vdwg.mxu0
        %v587 = vand.u32 %v345, 4294901760
        %588 = vmatpush.msra.mxu0 %v587
        %v589 = vand.u32 %v344, 4294901760
        %590 = vmatpush.msra.mxu0 %v589
        %v591 = vand.u32 %v343, 4294901760
        %592 = vmatpush.msra.mxu0 %v591
        %v593 = vand.u32 %v342, 4294901760
        %594 = vmatpush.msra.mxu0 %v593
        %v595 = vand.u32 %v341, 4294901760
        %596 = vmatpush.msra.mxu0 %v595
        %v597 = vand.u32 %v340, 4294901760
        %598 = vmatpush.msra.mxu0 %v597
        %v599 = vand.u32 %v339, 4294901760
        %600 = vmatpush.msra.mxu0 %v599
        %v601 = vand.u32 %v338, 4294901760
        %602 = vmatpush.msra.mxu0 %v601
        %v603 = vand.u32 %v337, 4294901760
        %604 = vmatpush.msra.mxu0 %v603
        %v605 = vand.u32 %v336, 4294901760
        %606 = vmatpush.msra.mxu0 %v605
        %v607 = vand.u32 %v335, 4294901760
        %608 = vmatpush.msra.mxu0 %v607
        %v609 = vand.u32 %v334, 4294901760
        %610 = vmatpush.msra.mxu0 %v609
        %v611 = vand.u32 %v333, 4294901760
        %612 = vmatpush.msra.mxu0 %v611
        %v613 = vand.u32 %v332, 4294901760
        %614 = vmatpush.msra.mxu0 %v613
        %v615 = vand.u32 %v331, 4294901760
        %616 = vmatpush.msra.mxu0 %v615
        %v617 = vand.u32 %v330, 4294901760
        %618 = vmatpush.msra.mxu0 %v617
        %v619 = vand.u32 %v390, 4294901760
        %v620 = vsub.f32 %v390, %v619
        %v621 = vand.u32 %v620, 4294901760
        %622 = vmatmul.f32.gmra.mxu0 %v621
        %v623 = vpop.f32.mrf.mxu0
        %v624 = vadd.f32 %v585, %v623
        %625 = vdwg.mxu0
        %v626 = vand.u32 %v345, 4294901760
        %v627 = vsub.f32 %v345, %v626
        %v628 = vand.u32 %v627, 4294901760
        %629 = vmatpush.msra.mxu0 %v628
        %v630 = vand.u32 %v344, 4294901760
        %v631 = vsub.f32 %v344, %v630
        %v632 = vand.u32 %v631, 4294901760
        %633 = vmatpush.msra.mxu0 %v632
        %v634 = vand.u32 %v343, 4294901760
        %v635 = vsub.f32 %v343, %v634
        %v636 = vand.u32 %v635, 4294901760
        %637 = vmatpush.msra.mxu0 %v636
        %v638 = vand.u32 %v342, 4294901760
        %v639 = vsub.f32 %v342, %v638
        %v640 = vand.u32 %v639, 4294901760
        %641 = vmatpush.msra.mxu0 %v640
        %v642 = vand.u32 %v341, 4294901760
        %v643 = vsub.f32 %v341, %v642
        %v644 = vand.u32 %v643, 4294901760
        %645 = vmatpush.msra.mxu0 %v644
        %v646 = vand.u32 %v340, 4294901760
        %v647 = vsub.f32 %v340, %v646
        %v648 = vand.u32 %v647, 4294901760
        %649 = vmatpush.msra.mxu0 %v648
        %v650 = vand.u32 %v339, 4294901760
        %v651 = vsub.f32 %v339, %v650
        %v652 = vand.u32 %v651, 4294901760
        %653 = vmatpush.msra.mxu0 %v652
        %v654 = vand.u32 %v338, 4294901760
        %v655 = vsub.f32 %v338, %v654
        %v656 = vand.u32 %v655, 4294901760
        %657 = vmatpush.msra.mxu0 %v656
        %v658 = vand.u32 %v337, 4294901760
        %v659 = vsub.f32 %v337, %v658
        %v660 = vand.u32 %v659, 4294901760
        %661 = vmatpush.msra.mxu0 %v660
        %v662 = vand.u32 %v336, 4294901760
        %v663 = vsub.f32 %v336, %v662
        %v664 = vand.u32 %v663, 4294901760
        %665 = vmatpush.msra.mxu0 %v664
        %v666 = vand.u32 %v335, 4294901760
        %v667 = vsub.f32 %v335, %v666
        %v668 = vand.u32 %v667, 4294901760
        %669 = vmatpush.msra.mxu0 %v668
        %v670 = vand.u32 %v334, 4294901760
        %v671 = vsub.f32 %v334, %v670
        %v672 = vand.u32 %v671, 4294901760
        %673 = vmatpush.msra.mxu0 %v672
        %v674 = vand.u32 %v333, 4294901760
        %v675 = vsub.f32 %v333, %v674
        %v676 = vand.u32 %v675, 4294901760
        %677 = vmatpush.msra.mxu0 %v676
        %v678 = vand.u32 %v332, 4294901760
        %v679 = vsub.f32 %v332, %v678
        %v680 = vand.u32 %v679, 4294901760
        %681 = vmatpush.msra.mxu0 %v680
        %v682 = vand.u32 %v331, 4294901760
        %v683 = vsub.f32 %v331, %v682
        %v684 = vand.u32 %v683, 4294901760
        %685 = vmatpush.msra.mxu0 %v684
        %v686 = vand.u32 %v330, 4294901760
        %v687 = vsub.f32 %v330, %v686
        %v688 = vand.u32 %v687, 4294901760
        %689 = vmatpush.msra.mxu0 %v688
        %v690 = vand.u32 %v390, 4294901760
        %691 = vmatmul.f32.gmra.mxu0 %v690
        %v692 = vpop.f32.mrf.mxu0
        %v693 = vadd.f32 %v624, %v692
        %694 = vdwg.mxu0
        %v695 = vand.u32 %v345, 4294901760
        %696 = vmatpush.msra.mxu0 %v695
        %v697 = vand.u32 %v344, 4294901760
        %698 = vmatpush.msra.mxu0 %v697
        %v699 = vand.u32 %v343, 4294901760
        %700 = vmatpush.msra.mxu0 %v699
        %v701 = vand.u32 %v342, 4294901760
        %702 = vmatpush.msra.mxu0 %v701
        %v703 = vand.u32 %v341, 4294901760
        %704 = vmatpush.msra.mxu0 %v703
        %v705 = vand.u32 %v340, 4294901760
        %706 = vmatpush.msra.mxu0 %v705
        %v707 = vand.u32 %v339, 4294901760
        %708 = vmatpush.msra.mxu0 %v707
        %v709 = vand.u32 %v338, 4294901760
        %710 = vmatpush.msra.mxu0 %v709
        %v711 = vand.u32 %v337, 4294901760
        %712 = vmatpush.msra.mxu0 %v711
        %v713 = vand.u32 %v336, 4294901760
        %714 = vmatpush.msra.mxu0 %v713
        %v715 = vand.u32 %v335, 4294901760
        %716 = vmatpush.msra.mxu0 %v715
        %v717 = vand.u32 %v334, 4294901760
        %718 = vmatpush.msra.mxu0 %v717
        %v719 = vand.u32 %v333, 4294901760
        %720 = vmatpush.msra.mxu0 %v719
        %v721 = vand.u32 %v332, 4294901760
        %722 = vmatpush.msra.mxu0 %v721
        %v723 = vand.u32 %v331, 4294901760
        %724 = vmatpush.msra.mxu0 %v723
        %v725 = vand.u32 %v330, 4294901760
        %726 = vmatpush.msra.mxu0 %v725
        %v727 = vand.u32 %v390, 4294901760
        %728 = vmatmul.f32.gmra.mxu0 %v727
        %v729 = vpop.f32.mrf.mxu0
        %v730 = vadd.f32 %v693, %v729
        %731 = vdwg.mxu0
        %v732 = vmul.f32 %v730, 0.001953125
        %v733 = vmul.f32 %v732, %v732
        %v735 = vrot.slane %v733, 7
        %v737 = vsub.f32 %v732, %v735
        %v738 = vmax.f32 %v737, 0.0
        %v739 = vadd.f32 %v738, 1e-05
        %v740 = vrsqrt.pop %v739
        %v741 = vmul.f32 %v740, %v739
        %v742 = vmul.f32 %v741, %v740
        %v743 = vmul.f32 0.5, %v742
        %v744 = vsub.f32 1.5, %v743
        %v745 = vmul.f32 %v740, %v744
        %vm746 = vweird.f32 %v739
        %vm747 = vweird.f32 %v740
        %vm748 = vmor %vm746, %vm747
        %v749 = vsel %vm748, %v740, %v745
        %v751 = vrot.slane %v749, 1
        %v753 = vmul.f32 %v362, %v751
        %v754 = vmul.f32 %v732, %v753
        %v756 = vrot.slane %v754, 7
        %v758 = vsub.f32 %v362, %v756
        %v759 = vsel %vm389, %v753, %v758
        %v760 = vand.u32 %v361, 4294901760
        %761 = vmatpush.msra.mxu0 %v760
        %v762 = vand.u32 %v360, 4294901760
        %763 = vmatpush.msra.mxu0 %v762
        %v764 = vand.u32 %v359, 4294901760
        %765 = vmatpush.msra.mxu0 %v764
        %v766 = vand.u32 %v358, 4294901760
        %767 = vmatpush.msra.mxu0 %v766
        %v768 = vand.u32 %v357, 4294901760
        %769 = vmatpush.msra.mxu0 %v768
        %v770 = vand.u32 %v356, 4294901760
        %771 = vmatpush.msra.mxu0 %v770
        %v772 = vand.u32 %v355, 4294901760
        %773 = vmatpush.msra.mxu0 %v772
        %v774 = vand.u32 %v354, 4294901760
        %775 = vmatpush.msra.mxu0 %v774
        %v776 = vand.u32 %v353, 4294901760
        %777 = vmatpush.msra.mxu0 %v776
        %v778 = vand.u32 %v352, 4294901760
        %779 = vmatpush.msra.mxu0 %v778
        %v780 = vand.u32 %v351, 4294901760
        %781 = vmatpush.msra.mxu0 %v780
        %v782 = vand.u32 %v350, 4294901760
        %783 = vmatpush.msra.mxu0 %v782
        %v784 = vand.u32 %v349, 4294901760
        %785 = vmatpush.msra.mxu0 %v784
        %v786 = vand.u32 %v348, 4294901760
        %787 = vmatpush.msra.mxu0 %v786
        %v788 = vand.u32 %v347, 4294901760
        %789 = vmatpush.msra.mxu0 %v788
        %v790 = vand.u32 %v346, 4294901760
        %791 = vmatpush.msra.mxu0 %v790
        %v792 = vand.u32 %v759, 4294901760
        %v793 = vsub.f32 %v759, %v792
        %v794 = vand.u32 %v793, 4294901760
        %v795 = vsub.f32 %v793, %v794
        %v796 = vand.u32 %v795, 4294901760
        %797 = vmatmul.f32.gmra.mxu0 %v796
        %v798 = vpop.f32.mrf.mxu0
        %v799 = vadd.f32 0.0, %v798
        %800 = vdwg.mxu0
        %v801 = vand.u32 %v361, 4294901760
        %v802 = vsub.f32 %v361, %v801
        %v803 = vand.u32 %v802, 4294901760
        %v804 = vsub.f32 %v802, %v803
        %v805 = vand.u32 %v804, 4294901760
        %806 = vmatpush.msra.mxu0 %v805
        %v807 = vand.u32 %v360, 4294901760
        %v808 = vsub.f32 %v360, %v807
        %v809 = vand.u32 %v808, 4294901760
        %v810 = vsub.f32 %v808, %v809
        %v811 = vand.u32 %v810, 4294901760
        %812 = vmatpush.msra.mxu0 %v811
        %v813 = vand.u32 %v359, 4294901760
        %v814 = vsub.f32 %v359, %v813
        %v815 = vand.u32 %v814, 4294901760
        %v816 = vsub.f32 %v814, %v815
        %v817 = vand.u32 %v816, 4294901760
        %818 = vmatpush.msra.mxu0 %v817
        %v819 = vand.u32 %v358, 4294901760
        %v820 = vsub.f32 %v358, %v819
        %v821 = vand.u32 %v820, 4294901760
        %v822 = vsub.f32 %v820, %v821
        %v823 = vand.u32 %v822, 4294901760
        %824 = vmatpush.msra.mxu0 %v823
        %v825 = vand.u32 %v357, 4294901760
        %v826 = vsub.f32 %v357, %v825
        %v827 = vand.u32 %v826, 4294901760
        %v828 = vsub.f32 %v826, %v827
        %v829 = vand.u32 %v828, 4294901760
        %830 = vmatpush.msra.mxu0 %v829
        %v831 = vand.u32 %v356, 4294901760
        %v832 = vsub.f32 %v356, %v831
        %v833 = vand.u32 %v832, 4294901760
        %v834 = vsub.f32 %v832, %v833
        %v835 = vand.u32 %v834, 4294901760
        %836 = vmatpush.msra.mxu0 %v835
        %v837 = vand.u32 %v355, 4294901760
        %v838 = vsub.f32 %v355, %v837
        %v839 = vand.u32 %v838, 4294901760
        %v840 = vsub.f32 %v838, %v839
        %v841 = vand.u32 %v840, 4294901760
        %842 = vmatpush.msra.mxu0 %v841
        %v843 = vand.u32 %v354, 4294901760
        %v844 = vsub.f32 %v354, %v843
        %v845 = vand.u32 %v844, 4294901760
        %v846 = vsub.f32 %v844, %v845
        %v847 = vand.u32 %v846, 4294901760
        %848 = vmatpush.msra.mxu0 %v847
        %v849 = vand.u32 %v353, 4294901760
        %v850 = vsub.f32 %v353, %v849
        %v851 = vand.u32 %v850, 4294901760
        %v852 = vsub.f32 %v850, %v851
        %v853 = vand.u32 %v852, 4294901760
        %854 = vmatpush.msra.mxu0 %v853
        %v855 = vand.u32 %v352, 4294901760
        %v856 = vsub.f32 %v352, %v855
        %v857 = vand.u32 %v856, 4294901760
        %v858 = vsub.f32 %v856, %v857
        %v859 = vand.u32 %v858, 4294901760
        %860 = vmatpush.msra.mxu0 %v859
        %v861 = vand.u32 %v351, 4294901760
        %v862 = vsub.f32 %v351, %v861
        %v863 = vand.u32 %v862, 4294901760
        %v864 = vsub.f32 %v862, %v863
        %v865 = vand.u32 %v864, 4294901760
        %866 = vmatpush.msra.mxu0 %v865
        %v867 = vand.u32 %v350, 4294901760
        %v868 = vsub.f32 %v350, %v867
        %v869 = vand.u32 %v868, 4294901760
        %v870 = vsub.f32 %v868, %v869
        %v871 = vand.u32 %v870, 4294901760
        %872 = vmatpush.msra.mxu0 %v871
        %v873 = vand.u32 %v349, 4294901760
        %v874 = vsub.f32 %v349, %v873
        %v875 = vand.u32 %v874, 4294901760
        %v876 = vsub.f32 %v874, %v875
        %v877 = vand.u32 %v876, 4294901760
        %878 = vmatpush.msra.mxu0 %v877
        %v879 = vand.u32 %v348, 4294901760
        %v880 = vsub.f32 %v348, %v879
        %v881 = vand.u32 %v880, 4294901760
        %v882 = vsub.f32 %v880, %v881
        %v883 = vand.u32 %v882, 4294901760
        %884 = vmatpush.msra.mxu0 %v883
        %v885 = vand.u32 %v347, 4294901760
        %v886 = vsub.f32 %v347, %v885
        %v887 = vand.u32 %v886, 4294901760
        %v888 = vsub.f32 %v886, %v887
        %v889 = vand.u32 %v888, 4294901760
        %890 = vmatpush.msra.mxu0 %v889
        %v891 = vand.u32 %v346, 4294901760
        %v892 = vsub.f32 %v346, %v891
        %v893 = vand.u32 %v892, 4294901760
        %v894 = vsub.f32 %v892, %v893
        %v895 = vand.u32 %v894, 4294901760
        %896 = vmatpush.msra.mxu0 %v895
        %v897 = vand.u32 %v759, 4294901760
        %898 = vmatmul.f32.gmra.mxu0 %v897
        %v899 = vpop.f32.mrf.mxu0
        %v900 = vadd.f32 %v799, %v899
        %901 = vdwg.mxu0
        %v902 = vand.u32 %v361, 4294901760
        %v903 = vsub.f32 %v361, %v902
        %904 = vmatpush.msra.mxu0 %v903
        %v905 = vand.u32 %v360, 4294901760
        %v906 = vsub.f32 %v360, %v905
        %907 = vmatpush.msra.mxu0 %v906
        %v908 = vand.u32 %v359, 4294901760
        %v909 = vsub.f32 %v359, %v908
        %910 = vmatpush.msra.mxu0 %v909
        %v911 = vand.u32 %v358, 4294901760
        %v912 = vsub.f32 %v358, %v911
        %913 = vmatpush.msra.mxu0 %v912
        %v914 = vand.u32 %v357, 4294901760
        %v915 = vsub.f32 %v357, %v914
        %916 = vmatpush.msra.mxu0 %v915
        %v917 = vand.u32 %v356, 4294901760
        %v918 = vsub.f32 %v356, %v917
        %919 = vmatpush.msra.mxu0 %v918
        %v920 = vand.u32 %v355, 4294901760
        %v921 = vsub.f32 %v355, %v920
        %922 = vmatpush.msra.mxu0 %v921
        %v923 = vand.u32 %v354, 4294901760
        %v924 = vsub.f32 %v354, %v923
        %925 = vmatpush.msra.mxu0 %v924
        %v926 = vand.u32 %v353, 4294901760
        %v927 = vsub.f32 %v353, %v926
        %928 = vmatpush.msra.mxu0 %v927
        %v929 = vand.u32 %v352, 4294901760
        %v930 = vsub.f32 %v352, %v929
        %931 = vmatpush.msra.mxu0 %v930
        %v932 = vand.u32 %v351, 4294901760
        %v933 = vsub.f32 %v351, %v932
        %934 = vmatpush.msra.mxu0 %v933
        %v935 = vand.u32 %v350, 4294901760
        %v936 = vsub.f32 %v350, %v935
        %937 = vmatpush.msra.mxu0 %v936
        %v938 = vand.u32 %v349, 4294901760
        %v939 = vsub.f32 %v349, %v938
        %940 = vmatpush.msra.mxu0 %v939
        %v941 = vand.u32 %v348, 4294901760
        %v942 = vsub.f32 %v348, %v941
        %943 = vmatpush.msra.mxu0 %v942
        %v944 = vand.u32 %v347, 4294901760
        %v945 = vsub.f32 %v347, %v944
        %946 = vmatpush.msra.mxu0 %v945
        %v947 = vand.u32 %v346, 4294901760
        %v948 = vsub.f32 %v346, %v947
        %949 = vmatpush.msra.mxu0 %v948
        %v950 = vand.u32 %v759, 4294901760
        %v951 = vsub.f32 %v759, %v950
        %952 = vmatmul.f32.gmra.mxu0 %v951
        %v953 = vpop.f32.mrf.mxu0
        %v954 = vadd.f32 %v900, %v953
        %955 = vdwg.mxu0
        %v956 = vand.u32 %v361, 4294901760
        %957 = vmatpush.msra.mxu0 %v956
        %v958 = vand.u32 %v360, 4294901760
        %959 = vmatpush.msra.mxu0 %v958
        %v960 = vand.u32 %v359, 4294901760
        %961 = vmatpush.msra.mxu0 %v960
        %v962 = vand.u32 %v358, 4294901760
        %963 = vmatpush.msra.mxu0 %v962
        %v964 = vand.u32 %v357, 4294901760
        %965 = vmatpush.msra.mxu0 %v964
        %v966 = vand.u32 %v356, 4294901760
        %967 = vmatpush.msra.mxu0 %v966
        %v968 = vand.u32 %v355, 4294901760
        %969 = vmatpush.msra.mxu0 %v968
        %v970 = vand.u32 %v354, 4294901760
        %971 = vmatpush.msra.mxu0 %v970
        %v972 = vand.u32 %v353, 4294901760
        %973 = vmatpush.msra.mxu0 %v972
        %v974 = vand.u32 %v352, 4294901760
        %975 = vmatpush.msra.mxu0 %v974
        %v976 = vand.u32 %v351, 4294901760
        %977 = vmatpush.msra.mxu0 %v976
        %v978 = vand.u32 %v350, 4294901760
        %979 = vmatpush.msra.mxu0 %v978
        %v980 = vand.u32 %v349, 4294901760
        %981 = vmatpush.msra.mxu0 %v980
        %v982 = vand.u32 %v348, 4294901760
        %983 = vmatpush.msra.mxu0 %v982
        %v984 = vand.u32 %v347, 4294901760
        %985 = vmatpush.msra.mxu0 %v984
        %v986 = vand.u32 %v346, 4294901760
        %987 = vmatpush.msra.mxu0 %v986
        %v988 = vand.u32 %v759, 4294901760
        %v989 = vsub.f32 %v759, %v988
        %v990 = vand.u32 %v989, 4294901760
        %991 = vmatmul.f32.gmra.mxu0 %v990
        %v992 = vpop.f32.mrf.mxu0
        %v993 = vadd.f32 %v954, %v992
        %994 = vdwg.mxu0
        %v995 = vand.u32 %v361, 4294901760
        %v996 = vsub.f32 %v361, %v995
        %v997 = vand.u32 %v996, 4294901760
        %998 = vmatpush.msra.mxu0 %v997
        %v999 = vand.u32 %v360, 4294901760
        %v1000 = vsub.f32 %v360, %v999
        %v1001 = vand.u32 %v1000, 4294901760
        %1002 = vmatpush.msra.mxu0 %v1001
        %v1003 = vand.u32 %v359, 4294901760
        %v1004 = vsub.f32 %v359, %v1003
        %v1005 = vand.u32 %v1004, 4294901760
        %1006 = vmatpush.msra.mxu0 %v1005
        %v1007 = vand.u32 %v358, 4294901760
        %v1008 = vsub.f32 %v358, %v1007
        %v1009 = vand.u32 %v1008, 4294901760
        %1010 = vmatpush.msra.mxu0 %v1009
        %v1011 = vand.u32 %v357, 4294901760
        %v1012 = vsub.f32 %v357, %v1011
        %v1013 = vand.u32 %v1012, 4294901760
        %1014 = vmatpush.msra.mxu0 %v1013
        %v1015 = vand.u32 %v356, 4294901760
        %v1016 = vsub.f32 %v356, %v1015
        %v1017 = vand.u32 %v1016, 4294901760
        %1018 = vmatpush.msra.mxu0 %v1017
        %v1019 = vand.u32 %v355, 4294901760
        %v1020 = vsub.f32 %v355, %v1019
        %v1021 = vand.u32 %v1020, 4294901760
        %1022 = vmatpush.msra.mxu0 %v1021
        %v1023 = vand.u32 %v354, 4294901760
        %v1024 = vsub.f32 %v354, %v1023
        %v1025 = vand.u32 %v1024, 4294901760
        %1026 = vmatpush.msra.mxu0 %v1025
        %v1027 = vand.u32 %v353, 4294901760
        %v1028 = vsub.f32 %v353, %v1027
        %v1029 = vand.u32 %v1028, 4294901760
        %1030 = vmatpush.msra.mxu0 %v1029
        %v1031 = vand.u32 %v352, 4294901760
        %v1032 = vsub.f32 %v352, %v1031
        %v1033 = vand.u32 %v1032, 4294901760
        %1034 = vmatpush.msra.mxu0 %v1033
        %v1035 = vand.u32 %v351, 4294901760
        %v1036 = vsub.f32 %v351, %v1035
        %v1037 = vand.u32 %v1036, 4294901760
        %1038 = vmatpush.msra.mxu0 %v1037
        %v1039 = vand.u32 %v350, 4294901760
        %v1040 = vsub.f32 %v350, %v1039
        %v1041 = vand.u32 %v1040, 4294901760
        %1042 = vmatpush.msra.mxu0 %v1041
        %v1043 = vand.u32 %v349, 4294901760
        %v1044 = vsub.f32 %v349, %v1043
        %v1045 = vand.u32 %v1044, 4294901760
        %1046 = vmatpush.msra.mxu0 %v1045
        %v1047 = vand.u32 %v348, 4294901760
        %v1048 = vsub.f32 %v348, %v1047
        %v1049 = vand.u32 %v1048, 4294901760
        %1050 = vmatpush.msra.mxu0 %v1049
        %v1051 = vand.u32 %v347, 4294901760
        %v1052 = vsub.f32 %v347, %v1051
        %v1053 = vand.u32 %v1052, 4294901760
        %1054 = vmatpush.msra.mxu0 %v1053
        %v1055 = vand.u32 %v346, 4294901760
        %v1056 = vsub.f32 %v346, %v1055
        %v1057 = vand.u32 %v1056, 4294901760
        %1058 = vmatpush.msra.mxu0 %v1057
        %v1059 = vand.u32 %v759, 4294901760
        %1060 = vmatmul.f32.gmra.mxu0 %v1059
        %v1061 = vpop.f32.mrf.mxu0
        %v1062 = vadd.f32 %v993, %v1061
        %1063 = vdwg.mxu0
        %v1064 = vand.u32 %v361, 4294901760
        %1065 = vmatpush.msra.mxu0 %v1064
        %v1066 = vand.u32 %v360, 4294901760
        %1067 = vmatpush.msra.mxu0 %v1066
        %v1068 = vand.u32 %v359, 4294901760
        %1069 = vmatpush.msra.mxu0 %v1068
        %v1070 = vand.u32 %v358, 4294901760
        %1071 = vmatpush.msra.mxu0 %v1070
        %v1072 = vand.u32 %v357, 4294901760
        %1073 = vmatpush.msra.mxu0 %v1072
        %v1074 = vand.u32 %v356, 4294901760
        %1075 = vmatpush.msra.mxu0 %v1074
        %v1076 = vand.u32 %v355, 4294901760
        %1077 = vmatpush.msra.mxu0 %v1076
        %v1078 = vand.u32 %v354, 4294901760
        %1079 = vmatpush.msra.mxu0 %v1078
        %v1080 = vand.u32 %v353, 4294901760
        %1081 = vmatpush.msra.mxu0 %v1080
        %v1082 = vand.u32 %v352, 4294901760
        %1083 = vmatpush.msra.mxu0 %v1082
        %v1084 = vand.u32 %v351, 4294901760
        %1085 = vmatpush.msra.mxu0 %v1084
        %v1086 = vand.u32 %v350, 4294901760
        %1087 = vmatpush.msra.mxu0 %v1086
        %v1088 = vand.u32 %v349, 4294901760
        %1089 = vmatpush.msra.mxu0 %v1088
        %v1090 = vand.u32 %v348, 4294901760
        %1091 = vmatpush.msra.mxu0 %v1090
        %v1092 = vand.u32 %v347, 4294901760
        %1093 = vmatpush.msra.mxu0 %v1092
        %v1094 = vand.u32 %v346, 4294901760
        %1095 = vmatpush.msra.mxu0 %v1094
        %v1096 = vand.u32 %v759, 4294901760
        %1097 = vmatmul.f32.gmra.mxu0 %v1096
        %v1098 = vpop.f32.mrf.mxu0
        %v1099 = vadd.f32 %v1062, %v1098
        %1100 = vdwg.mxu0
        %v1101 = vperm.slane %v1099, 0
        %v1102 = vmul.f32 %v363, %v1101
        %v1103 = vmul.f32 %v364, %v1101
        %v1104 = vmul.f32 %v365, %v1101
        %v1105 = vmul.f32 %v366, %v1101
        %v1106 = vperm.slane %v1099, 1
        %v1107 = vadd.f32 %v1102, %v1106
        %v1108 = vadd.f32 %v1103, %v1106
        %v1109 = vadd.f32 %v1104, %v1106
        %v1110 = vadd.f32 %v1105, %v1106
        %v1111 = vmax.f32 %v1107, 0.0
        %v1112 = vmax.f32 %v1108, 0.0
        %v1113 = vmax.f32 %v1109, 0.0
        %v1114 = vmax.f32 %v1110, 0.0
        %v1115 = vld [vmem:[%s5] sm:$0xff]
        %v1116 = vld [vmem:[%s5 + $0x8] sm:$0xff]
        %v1117 = vld [vmem:[%s5 + $0x10] sm:$0xff]
        %v1118 = vld [vmem:[%s5 + $0x18] sm:$0xff]
        %s1119 = scalar_lea.vmem %s5, 32
        %v1120 = vld [vmem:[%s1119] sm:$0xff]
        %v1121 = vld [vmem:[%s1119 + $0x8] sm:$0xff]
        %v1122 = vld [vmem:[%s1119 + $0x10] sm:$0xff]
        %v1123 = vld [vmem:[%s1119 + $0x18] sm:$0xff]
        %vm1124 = vcmask 261120
        %v1126 = vsel %vm1124, %v1115, 0
        %v1129 = vsel %vm1124, %v1116, 0
        %v1132 = vsel %vm1124, %v1117, 0
        %v1135 = vsel %vm1124, %v1118, 0
        %1137 = vmatpush.msra.mxu0 0.0
        %1138 = vmatpush.msra.mxu0 0.0
        %1139 = vmatpush.msra.mxu0 0.0
        %1140 = vmatpush.msra.mxu0 0.0
        %1141 = vmatpush.msra.mxu0 0.0
        %1142 = vmatpush.msra.mxu0 0.0
        %1143 = vmatpush.msra.mxu0 0.0
        %1144 = vmatpush.msra.mxu0 0.0
        %1145 = vmatpush.msra.mxu0 0.0
        %1146 = vmatpush.msra.mxu0 0.0
        %1147 = vmatpush.msra.mxu0 0.0
        %1148 = vmatpush.msra.mxu0 0.0
        %v1149 = vand.u32 %v1114, 4294901760
        %1150 = vmatpush.msra.mxu0 %v1149
        %v1151 = vand.u32 %v1113, 4294901760
        %1152 = vmatpush.msra.mxu0 %v1151
        %v1153 = vand.u32 %v1112, 4294901760
        %1154 = vmatpush.msra.mxu0 %v1153
        %v1155 = vand.u32 %v1111, 4294901760
        %1156 = vmatpush.msra.mxu0 %v1155
        %v1157 = vand.u32 %v1126, 4294901760
        %v1158 = vsub.f32 %v1126, %v1157
        %v1159 = vand.u32 %v1158, 4294901760
        %v1160 = vsub.f32 %v1158, %v1159
        %v1161 = vand.u32 %v1160, 4294901760
        %1162 = vmatmul.f32.gmra.mxu0 %v1161
        %v1163 = vpop.f32.mrf.mxu0
        %v1164 = vadd.f32 0.0, %v1163
        %v1165 = vand.u32 %v1129, 4294901760
        %v1166 = vsub.f32 %v1129, %v1165
        %v1167 = vand.u32 %v1166, 4294901760
        %v1168 = vsub.f32 %v1166, %v1167
        %v1169 = vand.u32 %v1168, 4294901760
        %1170 = vmatmul.f32.gmra.mxu0 %v1169
        %v1171 = vpop.f32.mrf.mxu0
        %v1172 = vadd.f32 0.0, %v1171
        %v1173 = vand.u32 %v1132, 4294901760
        %v1174 = vsub.f32 %v1132, %v1173
        %v1175 = vand.u32 %v1174, 4294901760
        %v1176 = vsub.f32 %v1174, %v1175
        %v1177 = vand.u32 %v1176, 4294901760
        %1178 = vmatmul.f32.gmra.mxu0 %v1177
        %v1179 = vpop.f32.mrf.mxu0
        %v1180 = vadd.f32 0.0, %v1179
        %v1181 = vand.u32 %v1135, 4294901760
        %v1182 = vsub.f32 %v1135, %v1181
        %v1183 = vand.u32 %v1182, 4294901760
        %v1184 = vsub.f32 %v1182, %v1183
        %v1185 = vand.u32 %v1184, 4294901760
        %1186 = vmatmul.f32.gmra.mxu0 %v1185
        %v1187 = vpop.f32.mrf.mxu0
        %v1188 = vadd.f32 0.0, %v1187
        %1189 = vdwg.mxu0
        %1190 = vmatpush.msra.mxu0 0.0
        %1191 = vmatpush.msra.mxu0 0.0
        %1192 = vmatpush.msra.mxu0 0.0
        %1193 = vmatpush.msra.mxu0 0.0
        %1194 = vmatpush.msra.mxu0 0.0
        %1195 = vmatpush.msra.mxu0 0.0
        %1196 = vmatpush.msra.mxu0 0.0
        %1197 = vmatpush.msra.mxu0 0.0
        %1198 = vmatpush.msra.mxu0 0.0
        %1199 = vmatpush.msra.mxu0 0.0
        %1200 = vmatpush.msra.mxu0 0.0
        %1201 = vmatpush.msra.mxu0 0.0
        %v1202 = vand.u32 %v1114, 4294901760
        %v1203 = vsub.f32 %v1114, %v1202
        %v1204 = vand.u32 %v1203, 4294901760
        %v1205 = vsub.f32 %v1203, %v1204
        %v1206 = vand.u32 %v1205, 4294901760
        %1207 = vmatpush.msra.mxu0 %v1206
        %v1208 = vand.u32 %v1113, 4294901760
        %v1209 = vsub.f32 %v1113, %v1208
        %v1210 = vand.u32 %v1209, 4294901760
        %v1211 = vsub.f32 %v1209, %v1210
        %v1212 = vand.u32 %v1211, 4294901760
        %1213 = vmatpush.msra.mxu0 %v1212
        %v1214 = vand.u32 %v1112, 4294901760
        %v1215 = vsub.f32 %v1112, %v1214
        %v1216 = vand.u32 %v1215, 4294901760
        %v1217 = vsub.f32 %v1215, %v1216
        %v1218 = vand.u32 %v1217, 4294901760
        %1219 = vmatpush.msra.mxu0 %v1218
        %v1220 = vand.u32 %v1111, 4294901760
        %v1221 = vsub.f32 %v1111, %v1220
        %v1222 = vand.u32 %v1221, 4294901760
        %v1223 = vsub.f32 %v1221, %v1222
        %v1224 = vand.u32 %v1223, 4294901760
        %1225 = vmatpush.msra.mxu0 %v1224
        %v1226 = vand.u32 %v1126, 4294901760
        %1227 = vmatmul.f32.gmra.mxu0 %v1226
        %v1228 = vpop.f32.mrf.mxu0
        %v1229 = vadd.f32 %v1164, %v1228
        %v1230 = vand.u32 %v1129, 4294901760
        %1231 = vmatmul.f32.gmra.mxu0 %v1230
        %v1232 = vpop.f32.mrf.mxu0
        %v1233 = vadd.f32 %v1172, %v1232
        %v1234 = vand.u32 %v1132, 4294901760
        %1235 = vmatmul.f32.gmra.mxu0 %v1234
        %v1236 = vpop.f32.mrf.mxu0
        %v1237 = vadd.f32 %v1180, %v1236
        %v1238 = vand.u32 %v1135, 4294901760
        %1239 = vmatmul.f32.gmra.mxu0 %v1238
        %v1240 = vpop.f32.mrf.mxu0
        %v1241 = vadd.f32 %v1188, %v1240
        %1242 = vdwg.mxu0
        %1243 = vmatpush.msra.mxu0 0.0
        %1244 = vmatpush.msra.mxu0 0.0
        %1245 = vmatpush.msra.mxu0 0.0
        %1246 = vmatpush.msra.mxu0 0.0
        %1247 = vmatpush.msra.mxu0 0.0
        %1248 = vmatpush.msra.mxu0 0.0
        %1249 = vmatpush.msra.mxu0 0.0
        %1250 = vmatpush.msra.mxu0 0.0
        %1251 = vmatpush.msra.mxu0 0.0
        %1252 = vmatpush.msra.mxu0 0.0
        %1253 = vmatpush.msra.mxu0 0.0
        %1254 = vmatpush.msra.mxu0 0.0
        %v1255 = vand.u32 %v1114, 4294901760
        %v1256 = vsub.f32 %v1114, %v1255
        %1257 = vmatpush.msra.mxu0 %v1256
        %v1258 = vand.u32 %v1113, 4294901760
        %v1259 = vsub.f32 %v1113, %v1258
        %1260 = vmatpush.msra.mxu0 %v1259
        %v1261 = vand.u32 %v1112, 4294901760
        %v1262 = vsub.f32 %v1112, %v1261
        %1263 = vmatpush.msra.mxu0 %v1262
        %v1264 = vand.u32 %v1111, 4294901760
        %v1265 = vsub.f32 %v1111, %v1264
        %1266 = vmatpush.msra.mxu0 %v1265
        %v1267 = vand.u32 %v1126, 4294901760
        %v1268 = vsub.f32 %v1126, %v1267
        %1269 = vmatmul.f32.gmra.mxu0 %v1268
        %v1270 = vpop.f32.mrf.mxu0
        %v1271 = vadd.f32 %v1229, %v1270
        %v1272 = vand.u32 %v1129, 4294901760
        %v1273 = vsub.f32 %v1129, %v1272
        %1274 = vmatmul.f32.gmra.mxu0 %v1273
        %v1275 = vpop.f32.mrf.mxu0
        %v1276 = vadd.f32 %v1233, %v1275
        %v1277 = vand.u32 %v1132, 4294901760
        %v1278 = vsub.f32 %v1132, %v1277
        %1279 = vmatmul.f32.gmra.mxu0 %v1278
        %v1280 = vpop.f32.mrf.mxu0
        %v1281 = vadd.f32 %v1237, %v1280
        %v1282 = vand.u32 %v1135, 4294901760
        %v1283 = vsub.f32 %v1135, %v1282
        %1284 = vmatmul.f32.gmra.mxu0 %v1283
        %v1285 = vpop.f32.mrf.mxu0
        %v1286 = vadd.f32 %v1241, %v1285
        %1287 = vdwg.mxu0
        %1288 = vmatpush.msra.mxu0 0.0
        %1289 = vmatpush.msra.mxu0 0.0
        %1290 = vmatpush.msra.mxu0 0.0
        %1291 = vmatpush.msra.mxu0 0.0
        %1292 = vmatpush.msra.mxu0 0.0
        %1293 = vmatpush.msra.mxu0 0.0
        %1294 = vmatpush.msra.mxu0 0.0
        %1295 = vmatpush.msra.mxu0 0.0
        %1296 = vmatpush.msra.mxu0 0.0
        %1297 = vmatpush.msra.mxu0 0.0
        %1298 = vmatpush.msra.mxu0 0.0
        %1299 = vmatpush.msra.mxu0 0.0
        %v1300 = vand.u32 %v1114, 4294901760
        %1301 = vmatpush.msra.mxu0 %v1300
        %v1302 = vand.u32 %v1113, 4294901760
        %1303 = vmatpush.msra.mxu0 %v1302
        %v1304 = vand.u32 %v1112, 4294901760
        %1305 = vmatpush.msra.mxu0 %v1304
        %v1306 = vand.u32 %v1111, 4294901760
        %1307 = vmatpush.msra.mxu0 %v1306
        %v1308 = vand.u32 %v1126, 4294901760
        %v1309 = vsub.f32 %v1126, %v1308
        %v1310 = vand.u32 %v1309, 4294901760
        %1311 = vmatmul.f32.gmra.mxu0 %v1310
        %v1312 = vpop.f32.mrf.mxu0
        %v1313 = vadd.f32 %v1271, %v1312
        %v1314 = vand.u32 %v1129, 4294901760
        %v1315 = vsub.f32 %v1129, %v1314
        %v1316 = vand.u32 %v1315, 4294901760
        %1317 = vmatmul.f32.gmra.mxu0 %v1316
        %v1318 = vpop.f32.mrf.mxu0
        %v1319 = vadd.f32 %v1276, %v1318
        %v1320 = vand.u32 %v1132, 4294901760
        %v1321 = vsub.f32 %v1132, %v1320
        %v1322 = vand.u32 %v1321, 4294901760
        %1323 = vmatmul.f32.gmra.mxu0 %v1322
        %v1324 = vpop.f32.mrf.mxu0
        %v1325 = vadd.f32 %v1281, %v1324
        %v1326 = vand.u32 %v1135, 4294901760
        %v1327 = vsub.f32 %v1135, %v1326
        %v1328 = vand.u32 %v1327, 4294901760
        %1329 = vmatmul.f32.gmra.mxu0 %v1328
        %v1330 = vpop.f32.mrf.mxu0
        %v1331 = vadd.f32 %v1286, %v1330
        %1332 = vdwg.mxu0
        %1333 = vmatpush.msra.mxu0 0.0
        %1334 = vmatpush.msra.mxu0 0.0
        %1335 = vmatpush.msra.mxu0 0.0
        %1336 = vmatpush.msra.mxu0 0.0
        %1337 = vmatpush.msra.mxu0 0.0
        %1338 = vmatpush.msra.mxu0 0.0
        %1339 = vmatpush.msra.mxu0 0.0
        %1340 = vmatpush.msra.mxu0 0.0
        %1341 = vmatpush.msra.mxu0 0.0
        %1342 = vmatpush.msra.mxu0 0.0
        %1343 = vmatpush.msra.mxu0 0.0
        %1344 = vmatpush.msra.mxu0 0.0
        %v1345 = vand.u32 %v1114, 4294901760
        %v1346 = vsub.f32 %v1114, %v1345
        %v1347 = vand.u32 %v1346, 4294901760
        %1348 = vmatpush.msra.mxu0 %v1347
        %v1349 = vand.u32 %v1113, 4294901760
        %v1350 = vsub.f32 %v1113, %v1349
        %v1351 = vand.u32 %v1350, 4294901760
        %1352 = vmatpush.msra.mxu0 %v1351
        %v1353 = vand.u32 %v1112, 4294901760
        %v1354 = vsub.f32 %v1112, %v1353
        %v1355 = vand.u32 %v1354, 4294901760
        %1356 = vmatpush.msra.mxu0 %v1355
        %v1357 = vand.u32 %v1111, 4294901760
        %v1358 = vsub.f32 %v1111, %v1357
        %v1359 = vand.u32 %v1358, 4294901760
        %1360 = vmatpush.msra.mxu0 %v1359
        %v1361 = vand.u32 %v1126, 4294901760
        %1362 = vmatmul.f32.gmra.mxu0 %v1361
        %v1363 = vpop.f32.mrf.mxu0
        %v1364 = vadd.f32 %v1313, %v1363
        %v1365 = vand.u32 %v1129, 4294901760
        %1366 = vmatmul.f32.gmra.mxu0 %v1365
        %v1367 = vpop.f32.mrf.mxu0
        %v1368 = vadd.f32 %v1319, %v1367
        %v1369 = vand.u32 %v1132, 4294901760
        %1370 = vmatmul.f32.gmra.mxu0 %v1369
        %v1371 = vpop.f32.mrf.mxu0
        %v1372 = vadd.f32 %v1325, %v1371
        %v1373 = vand.u32 %v1135, 4294901760
        %1374 = vmatmul.f32.gmra.mxu0 %v1373
        %v1375 = vpop.f32.mrf.mxu0
        %v1376 = vadd.f32 %v1331, %v1375
        %1377 = vdwg.mxu0
        %1378 = vmatpush.msra.mxu0 0.0
        %1379 = vmatpush.msra.mxu0 0.0
        %1380 = vmatpush.msra.mxu0 0.0
        %1381 = vmatpush.msra.mxu0 0.0
        %1382 = vmatpush.msra.mxu0 0.0
        %1383 = vmatpush.msra.mxu0 0.0
        %1384 = vmatpush.msra.mxu0 0.0
        %1385 = vmatpush.msra.mxu0 0.0
        %1386 = vmatpush.msra.mxu0 0.0
        %1387 = vmatpush.msra.mxu0 0.0
        %1388 = vmatpush.msra.mxu0 0.0
        %1389 = vmatpush.msra.mxu0 0.0
        %v1390 = vand.u32 %v1114, 4294901760
        %1391 = vmatpush.msra.mxu0 %v1390
        %v1392 = vand.u32 %v1113, 4294901760
        %1393 = vmatpush.msra.mxu0 %v1392
        %v1394 = vand.u32 %v1112, 4294901760
        %1395 = vmatpush.msra.mxu0 %v1394
        %v1396 = vand.u32 %v1111, 4294901760
        %1397 = vmatpush.msra.mxu0 %v1396
        %v1398 = vand.u32 %v1126, 4294901760
        %1399 = vmatmul.f32.gmra.mxu0 %v1398
        %v1400 = vpop.f32.mrf.mxu0
        %v1401 = vadd.f32 %v1364, %v1400
        %v1402 = vand.u32 %v1129, 4294901760
        %1403 = vmatmul.f32.gmra.mxu0 %v1402
        %v1404 = vpop.f32.mrf.mxu0
        %v1405 = vadd.f32 %v1368, %v1404
        %v1406 = vand.u32 %v1132, 4294901760
        %1407 = vmatmul.f32.gmra.mxu0 %v1406
        %v1408 = vpop.f32.mrf.mxu0
        %v1409 = vadd.f32 %v1372, %v1408
        %v1410 = vand.u32 %v1135, 4294901760
        %1411 = vmatmul.f32.gmra.mxu0 %v1410
        %v1412 = vpop.f32.mrf.mxu0
        %v1413 = vadd.f32 %v1376, %v1412
        %1414 = vdwg.mxu0
        %v1415 = vld [vmem:[%s329] sm:$0xff]
        %v1416 = vld [vmem:[%s329 + $0x8] sm:$0xff]
        %v1417 = vld [vmem:[%s329 + $0x10] sm:$0xff]
        %v1418 = vld [vmem:[%s329 + $0x18] sm:$0xff]
        %v1419 = vld [vmem:[%s329 + $0x20] sm:$0xff]
        %v1420 = vld [vmem:[%s329 + $0x28] sm:$0xff]
        %v1421 = vld [vmem:[%s329 + $0x30] sm:$0xff]
        %v1422 = vld [vmem:[%s329 + $0x38] sm:$0xff]
        %v1423 = vld [vmem:[%s329 + $0x40] sm:$0xff]
        %v1424 = vld [vmem:[%s329 + $0x48] sm:$0xff]
        %v1425 = vld [vmem:[%s329 + $0x50] sm:$0xff]
        %v1426 = vld [vmem:[%s329 + $0x58] sm:$0xff]
        %v1427 = vld [vmem:[%s329 + $0x60] sm:$0xff]
        %v1428 = vld [vmem:[%s329 + $0x68] sm:$0xff]
        %v1429 = vld [vmem:[%s329 + $0x70] sm:$0xff]
        %v1430 = vld [vmem:[%s329 + $0x78] sm:$0xff]
        %s1431 = scalar_lea.vmem %s329, 128
        %v1432 = vld [vmem:[%s1431] sm:$0xff]
        %v1433 = vld [vmem:[%s1431 + $0x8] sm:$0xff]
        %v1434 = vld [vmem:[%s1431 + $0x10] sm:$0xff]
        %v1435 = vld [vmem:[%s1431 + $0x18] sm:$0xff]
        %v1436 = vld [vmem:[%s1431 + $0x20] sm:$0xff]
        %v1437 = vld [vmem:[%s1431 + $0x28] sm:$0xff]
        %v1438 = vld [vmem:[%s1431 + $0x30] sm:$0xff]
        %v1439 = vld [vmem:[%s1431 + $0x38] sm:$0xff]
        %v1440 = vld [vmem:[%s1431 + $0x40] sm:$0xff]
        %v1441 = vld [vmem:[%s1431 + $0x48] sm:$0xff]
        %v1442 = vld [vmem:[%s1431 + $0x50] sm:$0xff]
        %v1443 = vld [vmem:[%s1431 + $0x58] sm:$0xff]
        %v1444 = vld [vmem:[%s1431 + $0x60] sm:$0xff]
        %v1445 = vld [vmem:[%s1431 + $0x68] sm:$0xff]
        %v1446 = vld [vmem:[%s1431 + $0x70] sm:$0xff]
        %v1447 = vld [vmem:[%s1431 + $0x78] sm:$0xff]
        %v1448 = vand.u32 %v1447, 4294901760
        %1449 = vmatpush.msra.mxu0 %v1448
        %v1450 = vand.u32 %v1446, 4294901760
        %1451 = vmatpush.msra.mxu0 %v1450
        %v1452 = vand.u32 %v1445, 4294901760
        %1453 = vmatpush.msra.mxu0 %v1452
        %v1454 = vand.u32 %v1444, 4294901760
        %1455 = vmatpush.msra.mxu0 %v1454
        %v1456 = vand.u32 %v1443, 4294901760
        %1457 = vmatpush.msra.mxu0 %v1456
        %v1458 = vand.u32 %v1442, 4294901760
        %1459 = vmatpush.msra.mxu0 %v1458
        %v1460 = vand.u32 %v1441, 4294901760
        %1461 = vmatpush.msra.mxu0 %v1460
        %v1462 = vand.u32 %v1440, 4294901760
        %1463 = vmatpush.msra.mxu0 %v1462
        %v1464 = vand.u32 %v1439, 4294901760
        %1465 = vmatpush.msra.mxu0 %v1464
        %v1466 = vand.u32 %v1438, 4294901760
        %1467 = vmatpush.msra.mxu0 %v1466
        %v1468 = vand.u32 %v1437, 4294901760
        %1469 = vmatpush.msra.mxu0 %v1468
        %v1470 = vand.u32 %v1436, 4294901760
        %1471 = vmatpush.msra.mxu0 %v1470
        %v1472 = vand.u32 %v1435, 4294901760
        %1473 = vmatpush.msra.mxu0 %v1472
        %v1474 = vand.u32 %v1434, 4294901760
        %1475 = vmatpush.msra.mxu0 %v1474
        %v1476 = vand.u32 %v1433, 4294901760
        %1477 = vmatpush.msra.mxu0 %v1476
        %v1478 = vand.u32 %v1432, 4294901760
        %1479 = vmatpush.msra.mxu0 %v1478
        %v1480 = vand.u32 %v1111, 4294901760
        %v1481 = vsub.f32 %v1111, %v1480
        %v1482 = vand.u32 %v1481, 4294901760
        %v1483 = vsub.f32 %v1481, %v1482
        %v1484 = vand.u32 %v1483, 4294901760
        %1485 = vmatmul.f32.gmra.mxu0 %v1484
        %v1486 = vpop.f32.mrf.mxu0
        %v1487 = vadd.f32 0.0, %v1486
        %v1488 = vand.u32 %v1112, 4294901760
        %v1489 = vsub.f32 %v1112, %v1488
        %v1490 = vand.u32 %v1489, 4294901760
        %v1491 = vsub.f32 %v1489, %v1490
        %v1492 = vand.u32 %v1491, 4294901760
        %1493 = vmatmul.f32.gmra.mxu0 %v1492
        %v1494 = vpop.f32.mrf.mxu0
        %v1495 = vadd.f32 0.0, %v1494
        %v1496 = vand.u32 %v1113, 4294901760
        %v1497 = vsub.f32 %v1113, %v1496
        %v1498 = vand.u32 %v1497, 4294901760
        %v1499 = vsub.f32 %v1497, %v1498
        %v1500 = vand.u32 %v1499, 4294901760
        %1501 = vmatmul.f32.gmra.mxu0 %v1500
        %v1502 = vpop.f32.mrf.mxu0
        %v1503 = vadd.f32 0.0, %v1502
        %v1504 = vand.u32 %v1114, 4294901760
        %v1505 = vsub.f32 %v1114, %v1504
        %v1506 = vand.u32 %v1505, 4294901760
        %v1507 = vsub.f32 %v1505, %v1506
        %v1508 = vand.u32 %v1507, 4294901760
        %1509 = vmatmul.f32.gmra.mxu0 %v1508
        %v1510 = vpop.f32.mrf.mxu0
        %v1511 = vadd.f32 0.0, %v1510
        %1512 = vdwg.mxu0
        %v1513 = vand.u32 %v1447, 4294901760
        %v1514 = vsub.f32 %v1447, %v1513
        %v1515 = vand.u32 %v1514, 4294901760
        %v1516 = vsub.f32 %v1514, %v1515
        %v1517 = vand.u32 %v1516, 4294901760
        %1518 = vmatpush.msra.mxu0 %v1517
        %v1519 = vand.u32 %v1446, 4294901760
        %v1520 = vsub.f32 %v1446, %v1519
        %v1521 = vand.u32 %v1520, 4294901760
        %v1522 = vsub.f32 %v1520, %v1521
        %v1523 = vand.u32 %v1522, 4294901760
        %1524 = vmatpush.msra.mxu0 %v1523
        %v1525 = vand.u32 %v1445, 4294901760
        %v1526 = vsub.f32 %v1445, %v1525
        %v1527 = vand.u32 %v1526, 4294901760
        %v1528 = vsub.f32 %v1526, %v1527
        %v1529 = vand.u32 %v1528, 4294901760
        %1530 = vmatpush.msra.mxu0 %v1529
        %v1531 = vand.u32 %v1444, 4294901760
        %v1532 = vsub.f32 %v1444, %v1531
        %v1533 = vand.u32 %v1532, 4294901760
        %v1534 = vsub.f32 %v1532, %v1533
        %v1535 = vand.u32 %v1534, 4294901760
        %1536 = vmatpush.msra.mxu0 %v1535
        %v1537 = vand.u32 %v1443, 4294901760
        %v1538 = vsub.f32 %v1443, %v1537
        %v1539 = vand.u32 %v1538, 4294901760
        %v1540 = vsub.f32 %v1538, %v1539
        %v1541 = vand.u32 %v1540, 4294901760
        %1542 = vmatpush.msra.mxu0 %v1541
        %v1543 = vand.u32 %v1442, 4294901760
        %v1544 = vsub.f32 %v1442, %v1543
        %v1545 = vand.u32 %v1544, 4294901760
        %v1546 = vsub.f32 %v1544, %v1545
        %v1547 = vand.u32 %v1546, 4294901760
        %1548 = vmatpush.msra.mxu0 %v1547
        %v1549 = vand.u32 %v1441, 4294901760
        %v1550 = vsub.f32 %v1441, %v1549
        %v1551 = vand.u32 %v1550, 4294901760
        %v1552 = vsub.f32 %v1550, %v1551
        %v1553 = vand.u32 %v1552, 4294901760
        %1554 = vmatpush.msra.mxu0 %v1553
        %v1555 = vand.u32 %v1440, 4294901760
        %v1556 = vsub.f32 %v1440, %v1555
        %v1557 = vand.u32 %v1556, 4294901760
        %v1558 = vsub.f32 %v1556, %v1557
        %v1559 = vand.u32 %v1558, 4294901760
        %1560 = vmatpush.msra.mxu0 %v1559
        %v1561 = vand.u32 %v1439, 4294901760
        %v1562 = vsub.f32 %v1439, %v1561
        %v1563 = vand.u32 %v1562, 4294901760
        %v1564 = vsub.f32 %v1562, %v1563
        %v1565 = vand.u32 %v1564, 4294901760
        %1566 = vmatpush.msra.mxu0 %v1565
        %v1567 = vand.u32 %v1438, 4294901760
        %v1568 = vsub.f32 %v1438, %v1567
        %v1569 = vand.u32 %v1568, 4294901760
        %v1570 = vsub.f32 %v1568, %v1569
        %v1571 = vand.u32 %v1570, 4294901760
        %1572 = vmatpush.msra.mxu0 %v1571
        %v1573 = vand.u32 %v1437, 4294901760
        %v1574 = vsub.f32 %v1437, %v1573
        %v1575 = vand.u32 %v1574, 4294901760
        %v1576 = vsub.f32 %v1574, %v1575
        %v1577 = vand.u32 %v1576, 4294901760
        %1578 = vmatpush.msra.mxu0 %v1577
        %v1579 = vand.u32 %v1436, 4294901760
        %v1580 = vsub.f32 %v1436, %v1579
        %v1581 = vand.u32 %v1580, 4294901760
        %v1582 = vsub.f32 %v1580, %v1581
        %v1583 = vand.u32 %v1582, 4294901760
        %1584 = vmatpush.msra.mxu0 %v1583
        %v1585 = vand.u32 %v1435, 4294901760
        %v1586 = vsub.f32 %v1435, %v1585
        %v1587 = vand.u32 %v1586, 4294901760
        %v1588 = vsub.f32 %v1586, %v1587
        %v1589 = vand.u32 %v1588, 4294901760
        %1590 = vmatpush.msra.mxu0 %v1589
        %v1591 = vand.u32 %v1434, 4294901760
        %v1592 = vsub.f32 %v1434, %v1591
        %v1593 = vand.u32 %v1592, 4294901760
        %v1594 = vsub.f32 %v1592, %v1593
        %v1595 = vand.u32 %v1594, 4294901760
        %1596 = vmatpush.msra.mxu0 %v1595
        %v1597 = vand.u32 %v1433, 4294901760
        %v1598 = vsub.f32 %v1433, %v1597
        %v1599 = vand.u32 %v1598, 4294901760
        %v1600 = vsub.f32 %v1598, %v1599
        %v1601 = vand.u32 %v1600, 4294901760
        %1602 = vmatpush.msra.mxu0 %v1601
        %v1603 = vand.u32 %v1432, 4294901760
        %v1604 = vsub.f32 %v1432, %v1603
        %v1605 = vand.u32 %v1604, 4294901760
        %v1606 = vsub.f32 %v1604, %v1605
        %v1607 = vand.u32 %v1606, 4294901760
        %1608 = vmatpush.msra.mxu0 %v1607
        %v1609 = vand.u32 %v1111, 4294901760
        %1610 = vmatmul.f32.gmra.mxu0 %v1609
        %v1611 = vpop.f32.mrf.mxu0
        %v1612 = vadd.f32 %v1487, %v1611
        %v1613 = vand.u32 %v1112, 4294901760
        %1614 = vmatmul.f32.gmra.mxu0 %v1613
        %v1615 = vpop.f32.mrf.mxu0
        %v1616 = vadd.f32 %v1495, %v1615
        %v1617 = vand.u32 %v1113, 4294901760
        %1618 = vmatmul.f32.gmra.mxu0 %v1617
        %v1619 = vpop.f32.mrf.mxu0
        %v1620 = vadd.f32 %v1503, %v1619
        %v1621 = vand.u32 %v1114, 4294901760
        %1622 = vmatmul.f32.gmra.mxu0 %v1621
        %v1623 = vpop.f32.mrf.mxu0
        %v1624 = vadd.f32 %v1511, %v1623
        %1625 = vdwg.mxu0
        %v1626 = vand.u32 %v1447, 4294901760
        %v1627 = vsub.f32 %v1447, %v1626
        %1628 = vmatpush.msra.mxu0 %v1627
        %v1629 = vand.u32 %v1446, 4294901760
        %v1630 = vsub.f32 %v1446, %v1629
        %1631 = vmatpush.msra.mxu0 %v1630
        %v1632 = vand.u32 %v1445, 4294901760
        %v1633 = vsub.f32 %v1445, %v1632
        %1634 = vmatpush.msra.mxu0 %v1633
        %v1635 = vand.u32 %v1444, 4294901760
        %v1636 = vsub.f32 %v1444, %v1635
        %1637 = vmatpush.msra.mxu0 %v1636
        %v1638 = vand.u32 %v1443, 4294901760
        %v1639 = vsub.f32 %v1443, %v1638
        %1640 = vmatpush.msra.mxu0 %v1639
        %v1641 = vand.u32 %v1442, 4294901760
        %v1642 = vsub.f32 %v1442, %v1641
        %1643 = vmatpush.msra.mxu0 %v1642
        %v1644 = vand.u32 %v1441, 4294901760
        %v1645 = vsub.f32 %v1441, %v1644
        %1646 = vmatpush.msra.mxu0 %v1645
        %v1647 = vand.u32 %v1440, 4294901760
        %v1648 = vsub.f32 %v1440, %v1647
        %1649 = vmatpush.msra.mxu0 %v1648
        %v1650 = vand.u32 %v1439, 4294901760
        %v1651 = vsub.f32 %v1439, %v1650
        %1652 = vmatpush.msra.mxu0 %v1651
        %v1653 = vand.u32 %v1438, 4294901760
        %v1654 = vsub.f32 %v1438, %v1653
        %1655 = vmatpush.msra.mxu0 %v1654
        %v1656 = vand.u32 %v1437, 4294901760
        %v1657 = vsub.f32 %v1437, %v1656
        %1658 = vmatpush.msra.mxu0 %v1657
        %v1659 = vand.u32 %v1436, 4294901760
        %v1660 = vsub.f32 %v1436, %v1659
        %1661 = vmatpush.msra.mxu0 %v1660
        %v1662 = vand.u32 %v1435, 4294901760
        %v1663 = vsub.f32 %v1435, %v1662
        %1664 = vmatpush.msra.mxu0 %v1663
        %v1665 = vand.u32 %v1434, 4294901760
        %v1666 = vsub.f32 %v1434, %v1665
        %1667 = vmatpush.msra.mxu0 %v1666
        %v1668 = vand.u32 %v1433, 4294901760
        %v1669 = vsub.f32 %v1433, %v1668
        %1670 = vmatpush.msra.mxu0 %v1669
        %v1671 = vand.u32 %v1432, 4294901760
        %v1672 = vsub.f32 %v1432, %v1671
        %1673 = vmatpush.msra.mxu0 %v1672
        %v1674 = vand.u32 %v1111, 4294901760
        %v1675 = vsub.f32 %v1111, %v1674
        %1676 = vmatmul.f32.gmra.mxu0 %v1675
        %v1677 = vpop.f32.mrf.mxu0
        %v1678 = vadd.f32 %v1612, %v1677
        %v1679 = vand.u32 %v1112, 4294901760
        %v1680 = vsub.f32 %v1112, %v1679
        %1681 = vmatmul.f32.gmra.mxu0 %v1680
        %v1682 = vpop.f32.mrf.mxu0
        %v1683 = vadd.f32 %v1616, %v1682
        %v1684 = vand.u32 %v1113, 4294901760
        %v1685 = vsub.f32 %v1113, %v1684
        %1686 = vmatmul.f32.gmra.mxu0 %v1685
        %v1687 = vpop.f32.mrf.mxu0
        %v1688 = vadd.f32 %v1620, %v1687
        %v1689 = vand.u32 %v1114, 4294901760
        %v1690 = vsub.f32 %v1114, %v1689
        %1691 = vmatmul.f32.gmra.mxu0 %v1690
        %v1692 = vpop.f32.mrf.mxu0
        %v1693 = vadd.f32 %v1624, %v1692
        %1694 = vdwg.mxu0
        %v1695 = vand.u32 %v1447, 4294901760
        %1696 = vmatpush.msra.mxu0 %v1695
        %v1697 = vand.u32 %v1446, 4294901760
        %1698 = vmatpush.msra.mxu0 %v1697
        %v1699 = vand.u32 %v1445, 4294901760
        %1700 = vmatpush.msra.mxu0 %v1699
        %v1701 = vand.u32 %v1444, 4294901760
        %1702 = vmatpush.msra.mxu0 %v1701
        %v1703 = vand.u32 %v1443, 4294901760
        %1704 = vmatpush.msra.mxu0 %v1703
        %v1705 = vand.u32 %v1442, 4294901760
        %1706 = vmatpush.msra.mxu0 %v1705
        %v1707 = vand.u32 %v1441, 4294901760
        %1708 = vmatpush.msra.mxu0 %v1707
        %v1709 = vand.u32 %v1440, 4294901760
        %1710 = vmatpush.msra.mxu0 %v1709
        %v1711 = vand.u32 %v1439, 4294901760
        %1712 = vmatpush.msra.mxu0 %v1711
        %v1713 = vand.u32 %v1438, 4294901760
        %1714 = vmatpush.msra.mxu0 %v1713
        %v1715 = vand.u32 %v1437, 4294901760
        %1716 = vmatpush.msra.mxu0 %v1715
        %v1717 = vand.u32 %v1436, 4294901760
        %1718 = vmatpush.msra.mxu0 %v1717
        %v1719 = vand.u32 %v1435, 4294901760
        %1720 = vmatpush.msra.mxu0 %v1719
        %v1721 = vand.u32 %v1434, 4294901760
        %1722 = vmatpush.msra.mxu0 %v1721
        %v1723 = vand.u32 %v1433, 4294901760
        %1724 = vmatpush.msra.mxu0 %v1723
        %v1725 = vand.u32 %v1432, 4294901760
        %1726 = vmatpush.msra.mxu0 %v1725
        %v1727 = vand.u32 %v1111, 4294901760
        %v1728 = vsub.f32 %v1111, %v1727
        %v1729 = vand.u32 %v1728, 4294901760
        %1730 = vmatmul.f32.gmra.mxu0 %v1729
        %v1731 = vpop.f32.mrf.mxu0
        %v1732 = vadd.f32 %v1678, %v1731
        %v1733 = vand.u32 %v1112, 4294901760
        %v1734 = vsub.f32 %v1112, %v1733
        %v1735 = vand.u32 %v1734, 4294901760
        %1736 = vmatmul.f32.gmra.mxu0 %v1735
        %v1737 = vpop.f32.mrf.mxu0
        %v1738 = vadd.f32 %v1683, %v1737
        %v1739 = vand.u32 %v1113, 4294901760
        %v1740 = vsub.f32 %v1113, %v1739
        %v1741 = vand.u32 %v1740, 4294901760
        %1742 = vmatmul.f32.gmra.mxu0 %v1741
        %v1743 = vpop.f32.mrf.mxu0
        %v1744 = vadd.f32 %v1688, %v1743
        %v1745 = vand.u32 %v1114, 4294901760
        %v1746 = vsub.f32 %v1114, %v1745
        %v1747 = vand.u32 %v1746, 4294901760
        %1748 = vmatmul.f32.gmra.mxu0 %v1747
        %v1749 = vpop.f32.mrf.mxu0
        %v1750 = vadd.f32 %v1693, %v1749
        %1751 = vdwg.mxu0
        %v1752 = vand.u32 %v1447, 4294901760
        %v1753 = vsub.f32 %v1447, %v1752
        %v1754 = vand.u32 %v1753, 4294901760
        %1755 = vmatpush.msra.mxu0 %v1754
        %v1756 = vand.u32 %v1446, 4294901760
        %v1757 = vsub.f32 %v1446, %v1756
        %v1758 = vand.u32 %v1757, 4294901760
        %1759 = vmatpush.msra.mxu0 %v1758
        %v1760 = vand.u32 %v1445, 4294901760
        %v1761 = vsub.f32 %v1445, %v1760
        %v1762 = vand.u32 %v1761, 4294901760
        %1763 = vmatpush.msra.mxu0 %v1762
        %v1764 = vand.u32 %v1444, 4294901760
        %v1765 = vsub.f32 %v1444, %v1764
        %v1766 = vand.u32 %v1765, 4294901760
        %1767 = vmatpush.msra.mxu0 %v1766
        %v1768 = vand.u32 %v1443, 4294901760
        %v1769 = vsub.f32 %v1443, %v1768
        %v1770 = vand.u32 %v1769, 4294901760
        %1771 = vmatpush.msra.mxu0 %v1770
        %v1772 = vand.u32 %v1442, 4294901760
        %v1773 = vsub.f32 %v1442, %v1772
        %v1774 = vand.u32 %v1773, 4294901760
        %1775 = vmatpush.msra.mxu0 %v1774
        %v1776 = vand.u32 %v1441, 4294901760
        %v1777 = vsub.f32 %v1441, %v1776
        %v1778 = vand.u32 %v1777, 4294901760
        %1779 = vmatpush.msra.mxu0 %v1778
        %v1780 = vand.u32 %v1440, 4294901760
        %v1781 = vsub.f32 %v1440, %v1780
        %v1782 = vand.u32 %v1781, 4294901760
        %1783 = vmatpush.msra.mxu0 %v1782
        %v1784 = vand.u32 %v1439, 4294901760
        %v1785 = vsub.f32 %v1439, %v1784
        %v1786 = vand.u32 %v1785, 4294901760
        %1787 = vmatpush.msra.mxu0 %v1786
        %v1788 = vand.u32 %v1438, 4294901760
        %v1789 = vsub.f32 %v1438, %v1788
        %v1790 = vand.u32 %v1789, 4294901760
        %1791 = vmatpush.msra.mxu0 %v1790
        %v1792 = vand.u32 %v1437, 4294901760
        %v1793 = vsub.f32 %v1437, %v1792
        %v1794 = vand.u32 %v1793, 4294901760
        %1795 = vmatpush.msra.mxu0 %v1794
        %v1796 = vand.u32 %v1436, 4294901760
        %v1797 = vsub.f32 %v1436, %v1796
        %v1798 = vand.u32 %v1797, 4294901760
        %1799 = vmatpush.msra.mxu0 %v1798
        %v1800 = vand.u32 %v1435, 4294901760
        %v1801 = vsub.f32 %v1435, %v1800
        %v1802 = vand.u32 %v1801, 4294901760
        %1803 = vmatpush.msra.mxu0 %v1802
        %v1804 = vand.u32 %v1434, 4294901760
        %v1805 = vsub.f32 %v1434, %v1804
        %v1806 = vand.u32 %v1805, 4294901760
        %1807 = vmatpush.msra.mxu0 %v1806
        %v1808 = vand.u32 %v1433, 4294901760
        %v1809 = vsub.f32 %v1433, %v1808
        %v1810 = vand.u32 %v1809, 4294901760
        %1811 = vmatpush.msra.mxu0 %v1810
        %v1812 = vand.u32 %v1432, 4294901760
        %v1813 = vsub.f32 %v1432, %v1812
        %v1814 = vand.u32 %v1813, 4294901760
        %1815 = vmatpush.msra.mxu0 %v1814
        %v1816 = vand.u32 %v1111, 4294901760
        %1817 = vmatmul.f32.gmra.mxu0 %v1816
        %v1818 = vpop.f32.mrf.mxu0
        %v1819 = vadd.f32 %v1732, %v1818
        %v1820 = vand.u32 %v1112, 4294901760
        %1821 = vmatmul.f32.gmra.mxu0 %v1820
        %v1822 = vpop.f32.mrf.mxu0
        %v1823 = vadd.f32 %v1738, %v1822
        %v1824 = vand.u32 %v1113, 4294901760
        %1825 = vmatmul.f32.gmra.mxu0 %v1824
        %v1826 = vpop.f32.mrf.mxu0
        %v1827 = vadd.f32 %v1744, %v1826
        %v1828 = vand.u32 %v1114, 4294901760
        %1829 = vmatmul.f32.gmra.mxu0 %v1828
        %v1830 = vpop.f32.mrf.mxu0
        %v1831 = vadd.f32 %v1750, %v1830
        %1832 = vdwg.mxu0
        %v1833 = vand.u32 %v1447, 4294901760
        %1834 = vmatpush.msra.mxu0 %v1833
        %v1835 = vand.u32 %v1446, 4294901760
        %1836 = vmatpush.msra.mxu0 %v1835
        %v1837 = vand.u32 %v1445, 4294901760
        %1838 = vmatpush.msra.mxu0 %v1837
        %v1839 = vand.u32 %v1444, 4294901760
        %1840 = vmatpush.msra.mxu0 %v1839
        %v1841 = vand.u32 %v1443, 4294901760
        %1842 = vmatpush.msra.mxu0 %v1841
        %v1843 = vand.u32 %v1442, 4294901760
        %1844 = vmatpush.msra.mxu0 %v1843
        %v1845 = vand.u32 %v1441, 4294901760
        %1846 = vmatpush.msra.mxu0 %v1845
        %v1847 = vand.u32 %v1440, 4294901760
        %1848 = vmatpush.msra.mxu0 %v1847
        %v1849 = vand.u32 %v1439, 4294901760
        %1850 = vmatpush.msra.mxu0 %v1849
        %v1851 = vand.u32 %v1438, 4294901760
        %1852 = vmatpush.msra.mxu0 %v1851
        %v1853 = vand.u32 %v1437, 4294901760
        %1854 = vmatpush.msra.mxu0 %v1853
        %v1855 = vand.u32 %v1436, 4294901760
        %1856 = vmatpush.msra.mxu0 %v1855
        %v1857 = vand.u32 %v1435, 4294901760
        %1858 = vmatpush.msra.mxu0 %v1857
        %v1859 = vand.u32 %v1434, 4294901760
        %1860 = vmatpush.msra.mxu0 %v1859
        %v1861 = vand.u32 %v1433, 4294901760
        %1862 = vmatpush.msra.mxu0 %v1861
        %v1863 = vand.u32 %v1432, 4294901760
        %1864 = vmatpush.msra.mxu0 %v1863
        %v1865 = vand.u32 %v1111, 4294901760
        %1866 = vmatmul.f32.gmra.mxu0 %v1865
        %v1867 = vpop.f32.mrf.mxu0
        %v1868 = vadd.f32 %v1819, %v1867
        %v1869 = vand.u32 %v1112, 4294901760
        %1870 = vmatmul.f32.gmra.mxu0 %v1869
        %v1871 = vpop.f32.mrf.mxu0
        %v1872 = vadd.f32 %v1823, %v1871
        %v1873 = vand.u32 %v1113, 4294901760
        %1874 = vmatmul.f32.gmra.mxu0 %v1873
        %v1875 = vpop.f32.mrf.mxu0
        %v1876 = vadd.f32 %v1827, %v1875
        %v1877 = vand.u32 %v1114, 4294901760
        %1878 = vmatmul.f32.gmra.mxu0 %v1877
        %v1879 = vpop.f32.mrf.mxu0
        %v1880 = vadd.f32 %v1831, %v1879
        %1881 = vdwg.mxu0
        %v1882 = vand.u32 %v1430, 4294901760
        %1883 = vmatpush.msra.mxu0 %v1882
        %v1884 = vand.u32 %v1429, 4294901760
        %1885 = vmatpush.msra.mxu0 %v1884
        %v1886 = vand.u32 %v1428, 4294901760
        %1887 = vmatpush.msra.mxu0 %v1886
        %v1888 = vand.u32 %v1427, 4294901760
        %1889 = vmatpush.msra.mxu0 %v1888
        %v1890 = vand.u32 %v1426, 4294901760
        %1891 = vmatpush.msra.mxu0 %v1890
        %v1892 = vand.u32 %v1425, 4294901760
        %1893 = vmatpush.msra.mxu0 %v1892
        %v1894 = vand.u32 %v1424, 4294901760
        %1895 = vmatpush.msra.mxu0 %v1894
        %v1896 = vand.u32 %v1423, 4294901760
        %1897 = vmatpush.msra.mxu0 %v1896
        %v1898 = vand.u32 %v1422, 4294901760
        %1899 = vmatpush.msra.mxu0 %v1898
        %v1900 = vand.u32 %v1421, 4294901760
        %1901 = vmatpush.msra.mxu0 %v1900
        %v1902 = vand.u32 %v1420, 4294901760
        %1903 = vmatpush.msra.mxu0 %v1902
        %v1904 = vand.u32 %v1419, 4294901760
        %1905 = vmatpush.msra.mxu0 %v1904
        %v1906 = vand.u32 %v1418, 4294901760
        %1907 = vmatpush.msra.mxu0 %v1906
        %v1908 = vand.u32 %v1417, 4294901760
        %1909 = vmatpush.msra.mxu0 %v1908
        %v1910 = vand.u32 %v1416, 4294901760
        %1911 = vmatpush.msra.mxu0 %v1910
        %v1912 = vand.u32 %v1415, 4294901760
        %1913 = vmatpush.msra.mxu0 %v1912
        %v1914 = vand.u32 %v1401, 4294901760
        %v1915 = vsub.f32 %v1401, %v1914
        %v1916 = vand.u32 %v1915, 4294901760
        %v1917 = vsub.f32 %v1915, %v1916
        %v1918 = vand.u32 %v1917, 4294901760
        %1919 = vmatmul.f32.gmra.mxu0 %v1918
        %v1920 = vpop.f32.mrf.mxu0
        %v1921 = vadd.f32 %v1868, %v1920
        %v1922 = vand.u32 %v1405, 4294901760
        %v1923 = vsub.f32 %v1405, %v1922
        %v1924 = vand.u32 %v1923, 4294901760
        %v1925 = vsub.f32 %v1923, %v1924
        %v1926 = vand.u32 %v1925, 4294901760
        %1927 = vmatmul.f32.gmra.mxu0 %v1926
        %v1928 = vpop.f32.mrf.mxu0
        %v1929 = vadd.f32 %v1872, %v1928
        %v1930 = vand.u32 %v1409, 4294901760
        %v1931 = vsub.f32 %v1409, %v1930
        %v1932 = vand.u32 %v1931, 4294901760
        %v1933 = vsub.f32 %v1931, %v1932
        %v1934 = vand.u32 %v1933, 4294901760
        %1935 = vmatmul.f32.gmra.mxu0 %v1934
        %v1936 = vpop.f32.mrf.mxu0
        %v1937 = vadd.f32 %v1876, %v1936
        %v1938 = vand.u32 %v1413, 4294901760
        %v1939 = vsub.f32 %v1413, %v1938
        %v1940 = vand.u32 %v1939, 4294901760
        %v1941 = vsub.f32 %v1939, %v1940
        %v1942 = vand.u32 %v1941, 4294901760
        %1943 = vmatmul.f32.gmra.mxu0 %v1942
        %v1944 = vpop.f32.mrf.mxu0
        %v1945 = vadd.f32 %v1880, %v1944
        %1946 = vdwg.mxu0
        %v1947 = vand.u32 %v1430, 4294901760
        %v1948 = vsub.f32 %v1430, %v1947
        %v1949 = vand.u32 %v1948, 4294901760
        %v1950 = vsub.f32 %v1948, %v1949
        %v1951 = vand.u32 %v1950, 4294901760
        %1952 = vmatpush.msra.mxu0 %v1951
        %v1953 = vand.u32 %v1429, 4294901760
        %v1954 = vsub.f32 %v1429, %v1953
        %v1955 = vand.u32 %v1954, 4294901760
        %v1956 = vsub.f32 %v1954, %v1955
        %v1957 = vand.u32 %v1956, 4294901760
        %1958 = vmatpush.msra.mxu0 %v1957
        %v1959 = vand.u32 %v1428, 4294901760
        %v1960 = vsub.f32 %v1428, %v1959
        %v1961 = vand.u32 %v1960, 4294901760
        %v1962 = vsub.f32 %v1960, %v1961
        %v1963 = vand.u32 %v1962, 4294901760
        %1964 = vmatpush.msra.mxu0 %v1963
        %v1965 = vand.u32 %v1427, 4294901760
        %v1966 = vsub.f32 %v1427, %v1965
        %v1967 = vand.u32 %v1966, 4294901760
        %v1968 = vsub.f32 %v1966, %v1967
        %v1969 = vand.u32 %v1968, 4294901760
        %1970 = vmatpush.msra.mxu0 %v1969
        %v1971 = vand.u32 %v1426, 4294901760
        %v1972 = vsub.f32 %v1426, %v1971
        %v1973 = vand.u32 %v1972, 4294901760
        %v1974 = vsub.f32 %v1972, %v1973
        %v1975 = vand.u32 %v1974, 4294901760
        %1976 = vmatpush.msra.mxu0 %v1975
        %v1977 = vand.u32 %v1425, 4294901760
        %v1978 = vsub.f32 %v1425, %v1977
        %v1979 = vand.u32 %v1978, 4294901760
        %v1980 = vsub.f32 %v1978, %v1979
        %v1981 = vand.u32 %v1980, 4294901760
        %1982 = vmatpush.msra.mxu0 %v1981
        %v1983 = vand.u32 %v1424, 4294901760
        %v1984 = vsub.f32 %v1424, %v1983
        %v1985 = vand.u32 %v1984, 4294901760
        %v1986 = vsub.f32 %v1984, %v1985
        %v1987 = vand.u32 %v1986, 4294901760
        %1988 = vmatpush.msra.mxu0 %v1987
        %v1989 = vand.u32 %v1423, 4294901760
        %v1990 = vsub.f32 %v1423, %v1989
        %v1991 = vand.u32 %v1990, 4294901760
        %v1992 = vsub.f32 %v1990, %v1991
        %v1993 = vand.u32 %v1992, 4294901760
        %1994 = vmatpush.msra.mxu0 %v1993
        %v1995 = vand.u32 %v1422, 4294901760
        %v1996 = vsub.f32 %v1422, %v1995
        %v1997 = vand.u32 %v1996, 4294901760
        %v1998 = vsub.f32 %v1996, %v1997
        %v1999 = vand.u32 %v1998, 4294901760
        %2000 = vmatpush.msra.mxu0 %v1999
        %v2001 = vand.u32 %v1421, 4294901760
        %v2002 = vsub.f32 %v1421, %v2001
        %v2003 = vand.u32 %v2002, 4294901760
        %v2004 = vsub.f32 %v2002, %v2003
        %v2005 = vand.u32 %v2004, 4294901760
        %2006 = vmatpush.msra.mxu0 %v2005
        %v2007 = vand.u32 %v1420, 4294901760
        %v2008 = vsub.f32 %v1420, %v2007
        %v2009 = vand.u32 %v2008, 4294901760
        %v2010 = vsub.f32 %v2008, %v2009
        %v2011 = vand.u32 %v2010, 4294901760
        %2012 = vmatpush.msra.mxu0 %v2011
        %v2013 = vand.u32 %v1419, 4294901760
        %v2014 = vsub.f32 %v1419, %v2013
        %v2015 = vand.u32 %v2014, 4294901760
        %v2016 = vsub.f32 %v2014, %v2015
        %v2017 = vand.u32 %v2016, 4294901760
        %2018 = vmatpush.msra.mxu0 %v2017
        %v2019 = vand.u32 %v1418, 4294901760
        %v2020 = vsub.f32 %v1418, %v2019
        %v2021 = vand.u32 %v2020, 4294901760
        %v2022 = vsub.f32 %v2020, %v2021
        %v2023 = vand.u32 %v2022, 4294901760
        %2024 = vmatpush.msra.mxu0 %v2023
        %v2025 = vand.u32 %v1417, 4294901760
        %v2026 = vsub.f32 %v1417, %v2025
        %v2027 = vand.u32 %v2026, 4294901760
        %v2028 = vsub.f32 %v2026, %v2027
        %v2029 = vand.u32 %v2028, 4294901760
        %2030 = vmatpush.msra.mxu0 %v2029
        %v2031 = vand.u32 %v1416, 4294901760
        %v2032 = vsub.f32 %v1416, %v2031
        %v2033 = vand.u32 %v2032, 4294901760
        %v2034 = vsub.f32 %v2032, %v2033
        %v2035 = vand.u32 %v2034, 4294901760
        %2036 = vmatpush.msra.mxu0 %v2035
        %v2037 = vand.u32 %v1415, 4294901760
        %v2038 = vsub.f32 %v1415, %v2037
        %v2039 = vand.u32 %v2038, 4294901760
        %v2040 = vsub.f32 %v2038, %v2039
        %v2041 = vand.u32 %v2040, 4294901760
        %2042 = vmatpush.msra.mxu0 %v2041
        %v2043 = vand.u32 %v1401, 4294901760
        %2044 = vmatmul.f32.gmra.mxu0 %v2043
        %v2045 = vpop.f32.mrf.mxu0
        %v2046 = vadd.f32 %v1921, %v2045
        %v2047 = vand.u32 %v1405, 4294901760
        %2048 = vmatmul.f32.gmra.mxu0 %v2047
        %v2049 = vpop.f32.mrf.mxu0
        %v2050 = vadd.f32 %v1929, %v2049
        %v2051 = vand.u32 %v1409, 4294901760
        %2052 = vmatmul.f32.gmra.mxu0 %v2051
        %v2053 = vpop.f32.mrf.mxu0
        %v2054 = vadd.f32 %v1937, %v2053
        %v2055 = vand.u32 %v1413, 4294901760
        %2056 = vmatmul.f32.gmra.mxu0 %v2055
        %v2057 = vpop.f32.mrf.mxu0
        %v2058 = vadd.f32 %v1945, %v2057
        %2059 = vdwg.mxu0
        %v2060 = vand.u32 %v1430, 4294901760
        %v2061 = vsub.f32 %v1430, %v2060
        %2062 = vmatpush.msra.mxu0 %v2061
        %v2063 = vand.u32 %v1429, 4294901760
        %v2064 = vsub.f32 %v1429, %v2063
        %2065 = vmatpush.msra.mxu0 %v2064
        %v2066 = vand.u32 %v1428, 4294901760
        %v2067 = vsub.f32 %v1428, %v2066
        %2068 = vmatpush.msra.mxu0 %v2067
        %v2069 = vand.u32 %v1427, 4294901760
        %v2070 = vsub.f32 %v1427, %v2069
        %2071 = vmatpush.msra.mxu0 %v2070
        %v2072 = vand.u32 %v1426, 4294901760
        %v2073 = vsub.f32 %v1426, %v2072
        %2074 = vmatpush.msra.mxu0 %v2073
        %v2075 = vand.u32 %v1425, 4294901760
        %v2076 = vsub.f32 %v1425, %v2075
        %2077 = vmatpush.msra.mxu0 %v2076
        %v2078 = vand.u32 %v1424, 4294901760
        %v2079 = vsub.f32 %v1424, %v2078
        %2080 = vmatpush.msra.mxu0 %v2079
        %v2081 = vand.u32 %v1423, 4294901760
        %v2082 = vsub.f32 %v1423, %v2081
        %2083 = vmatpush.msra.mxu0 %v2082
        %v2084 = vand.u32 %v1422, 4294901760
        %v2085 = vsub.f32 %v1422, %v2084
        %2086 = vmatpush.msra.mxu0 %v2085
        %v2087 = vand.u32 %v1421, 4294901760
        %v2088 = vsub.f32 %v1421, %v2087
        %2089 = vmatpush.msra.mxu0 %v2088
        %v2090 = vand.u32 %v1420, 4294901760
        %v2091 = vsub.f32 %v1420, %v2090
        %2092 = vmatpush.msra.mxu0 %v2091
        %v2093 = vand.u32 %v1419, 4294901760
        %v2094 = vsub.f32 %v1419, %v2093
        %2095 = vmatpush.msra.mxu0 %v2094
        %v2096 = vand.u32 %v1418, 4294901760
        %v2097 = vsub.f32 %v1418, %v2096
        %2098 = vmatpush.msra.mxu0 %v2097
        %v2099 = vand.u32 %v1417, 4294901760
        %v2100 = vsub.f32 %v1417, %v2099
        %2101 = vmatpush.msra.mxu0 %v2100
        %v2102 = vand.u32 %v1416, 4294901760
        %v2103 = vsub.f32 %v1416, %v2102
        %2104 = vmatpush.msra.mxu0 %v2103
        %v2105 = vand.u32 %v1415, 4294901760
        %v2106 = vsub.f32 %v1415, %v2105
        %2107 = vmatpush.msra.mxu0 %v2106
        %v2108 = vand.u32 %v1401, 4294901760
        %v2109 = vsub.f32 %v1401, %v2108
        %2110 = vmatmul.f32.gmra.mxu0 %v2109
        %v2111 = vpop.f32.mrf.mxu0
        %v2112 = vadd.f32 %v2046, %v2111
        %v2113 = vand.u32 %v1405, 4294901760
        %v2114 = vsub.f32 %v1405, %v2113
        %2115 = vmatmul.f32.gmra.mxu0 %v2114
        %v2116 = vpop.f32.mrf.mxu0
        %v2117 = vadd.f32 %v2050, %v2116
        %v2118 = vand.u32 %v1409, 4294901760
        %v2119 = vsub.f32 %v1409, %v2118
        %2120 = vmatmul.f32.gmra.mxu0 %v2119
        %v2121 = vpop.f32.mrf.mxu0
        %v2122 = vadd.f32 %v2054, %v2121
        %v2123 = vand.u32 %v1413, 4294901760
        %v2124 = vsub.f32 %v1413, %v2123
        %2125 = vmatmul.f32.gmra.mxu0 %v2124
        %v2126 = vpop.f32.mrf.mxu0
        %v2127 = vadd.f32 %v2058, %v2126
        %2128 = vdwg.mxu0
        %v2129 = vand.u32 %v1430, 4294901760
        %2130 = vmatpush.msra.mxu0 %v2129
        %v2131 = vand.u32 %v1429, 4294901760
        %2132 = vmatpush.msra.mxu0 %v2131
        %v2133 = vand.u32 %v1428, 4294901760
        %2134 = vmatpush.msra.mxu0 %v2133
        %v2135 = vand.u32 %v1427, 4294901760
        %2136 = vmatpush.msra.mxu0 %v2135
        %v2137 = vand.u32 %v1426, 4294901760
        %2138 = vmatpush.msra.mxu0 %v2137
        %v2139 = vand.u32 %v1425, 4294901760
        %2140 = vmatpush.msra.mxu0 %v2139
        %v2141 = vand.u32 %v1424, 4294901760
        %2142 = vmatpush.msra.mxu0 %v2141
        %v2143 = vand.u32 %v1423, 4294901760
        %2144 = vmatpush.msra.mxu0 %v2143
        %v2145 = vand.u32 %v1422, 4294901760
        %2146 = vmatpush.msra.mxu0 %v2145
        %v2147 = vand.u32 %v1421, 4294901760
        %2148 = vmatpush.msra.mxu0 %v2147
        %v2149 = vand.u32 %v1420, 4294901760
        %2150 = vmatpush.msra.mxu0 %v2149
        %v2151 = vand.u32 %v1419, 4294901760
        %2152 = vmatpush.msra.mxu0 %v2151
        %v2153 = vand.u32 %v1418, 4294901760
        %2154 = vmatpush.msra.mxu0 %v2153
        %v2155 = vand.u32 %v1417, 4294901760
        %2156 = vmatpush.msra.mxu0 %v2155
        %v2157 = vand.u32 %v1416, 4294901760
        %2158 = vmatpush.msra.mxu0 %v2157
        %v2159 = vand.u32 %v1415, 4294901760
        %2160 = vmatpush.msra.mxu0 %v2159
        %v2161 = vand.u32 %v1401, 4294901760
        %v2162 = vsub.f32 %v1401, %v2161
        %v2163 = vand.u32 %v2162, 4294901760
        %2164 = vmatmul.f32.gmra.mxu0 %v2163
        %v2165 = vpop.f32.mrf.mxu0
        %v2166 = vadd.f32 %v2112, %v2165
        %v2167 = vand.u32 %v1405, 4294901760
        %v2168 = vsub.f32 %v1405, %v2167
        %v2169 = vand.u32 %v2168, 4294901760
        %2170 = vmatmul.f32.gmra.mxu0 %v2169
        %v2171 = vpop.f32.mrf.mxu0
        %v2172 = vadd.f32 %v2117, %v2171
        %v2173 = vand.u32 %v1409, 4294901760
        %v2174 = vsub.f32 %v1409, %v2173
        %v2175 = vand.u32 %v2174, 4294901760
        %2176 = vmatmul.f32.gmra.mxu0 %v2175
        %v2177 = vpop.f32.mrf.mxu0
        %v2178 = vadd.f32 %v2122, %v2177
        %v2179 = vand.u32 %v1413, 4294901760
        %v2180 = vsub.f32 %v1413, %v2179
        %v2181 = vand.u32 %v2180, 4294901760
        %2182 = vmatmul.f32.gmra.mxu0 %v2181
        %v2183 = vpop.f32.mrf.mxu0
        %v2184 = vadd.f32 %v2127, %v2183
        %2185 = vdwg.mxu0
        %v2186 = vand.u32 %v1430, 4294901760
        %v2187 = vsub.f32 %v1430, %v2186
        %v2188 = vand.u32 %v2187, 4294901760
        %2189 = vmatpush.msra.mxu0 %v2188
        %v2190 = vand.u32 %v1429, 4294901760
        %v2191 = vsub.f32 %v1429, %v2190
        %v2192 = vand.u32 %v2191, 4294901760
        %2193 = vmatpush.msra.mxu0 %v2192
        %v2194 = vand.u32 %v1428, 4294901760
        %v2195 = vsub.f32 %v1428, %v2194
        %v2196 = vand.u32 %v2195, 4294901760
        %2197 = vmatpush.msra.mxu0 %v2196
        %v2198 = vand.u32 %v1427, 4294901760
        %v2199 = vsub.f32 %v1427, %v2198
        %v2200 = vand.u32 %v2199, 4294901760
        %2201 = vmatpush.msra.mxu0 %v2200
        %v2202 = vand.u32 %v1426, 4294901760
        %v2203 = vsub.f32 %v1426, %v2202
        %v2204 = vand.u32 %v2203, 4294901760
        %2205 = vmatpush.msra.mxu0 %v2204
        %v2206 = vand.u32 %v1425, 4294901760
        %v2207 = vsub.f32 %v1425, %v2206
        %v2208 = vand.u32 %v2207, 4294901760
        %2209 = vmatpush.msra.mxu0 %v2208
        %v2210 = vand.u32 %v1424, 4294901760
        %v2211 = vsub.f32 %v1424, %v2210
        %v2212 = vand.u32 %v2211, 4294901760
        %2213 = vmatpush.msra.mxu0 %v2212
        %v2214 = vand.u32 %v1423, 4294901760
        %v2215 = vsub.f32 %v1423, %v2214
        %v2216 = vand.u32 %v2215, 4294901760
        %2217 = vmatpush.msra.mxu0 %v2216
        %v2218 = vand.u32 %v1422, 4294901760
        %v2219 = vsub.f32 %v1422, %v2218
        %v2220 = vand.u32 %v2219, 4294901760
        %2221 = vmatpush.msra.mxu0 %v2220
        %v2222 = vand.u32 %v1421, 4294901760
        %v2223 = vsub.f32 %v1421, %v2222
        %v2224 = vand.u32 %v2223, 4294901760
        %2225 = vmatpush.msra.mxu0 %v2224
        %v2226 = vand.u32 %v1420, 4294901760
        %v2227 = vsub.f32 %v1420, %v2226
        %v2228 = vand.u32 %v2227, 4294901760
        %2229 = vmatpush.msra.mxu0 %v2228
        %v2230 = vand.u32 %v1419, 4294901760
        %v2231 = vsub.f32 %v1419, %v2230
        %v2232 = vand.u32 %v2231, 4294901760
        %2233 = vmatpush.msra.mxu0 %v2232
        %v2234 = vand.u32 %v1418, 4294901760
        %v2235 = vsub.f32 %v1418, %v2234
        %v2236 = vand.u32 %v2235, 4294901760
        %2237 = vmatpush.msra.mxu0 %v2236
        %v2238 = vand.u32 %v1417, 4294901760
        %v2239 = vsub.f32 %v1417, %v2238
        %v2240 = vand.u32 %v2239, 4294901760
        %2241 = vmatpush.msra.mxu0 %v2240
        %v2242 = vand.u32 %v1416, 4294901760
        %v2243 = vsub.f32 %v1416, %v2242
        %v2244 = vand.u32 %v2243, 4294901760
        %2245 = vmatpush.msra.mxu0 %v2244
        %v2246 = vand.u32 %v1415, 4294901760
        %v2247 = vsub.f32 %v1415, %v2246
        %v2248 = vand.u32 %v2247, 4294901760
        %2249 = vmatpush.msra.mxu0 %v2248
        %v2250 = vand.u32 %v1401, 4294901760
        %2251 = vmatmul.f32.gmra.mxu0 %v2250
        %v2252 = vpop.f32.mrf.mxu0
        %v2253 = vadd.f32 %v2166, %v2252
        %v2254 = vand.u32 %v1405, 4294901760
        %2255 = vmatmul.f32.gmra.mxu0 %v2254
        %v2256 = vpop.f32.mrf.mxu0
        %v2257 = vadd.f32 %v2172, %v2256
        %v2258 = vand.u32 %v1409, 4294901760
        %2259 = vmatmul.f32.gmra.mxu0 %v2258
        %v2260 = vpop.f32.mrf.mxu0
        %v2261 = vadd.f32 %v2178, %v2260
        %v2262 = vand.u32 %v1413, 4294901760
        %2263 = vmatmul.f32.gmra.mxu0 %v2262
        %v2264 = vpop.f32.mrf.mxu0
        %v2265 = vadd.f32 %v2184, %v2264
        %2266 = vdwg.mxu0
        %v2267 = vand.u32 %v1430, 4294901760
        %2268 = vmatpush.msra.mxu0 %v2267
        %v2269 = vand.u32 %v1429, 4294901760
        %2270 = vmatpush.msra.mxu0 %v2269
        %v2271 = vand.u32 %v1428, 4294901760
        %2272 = vmatpush.msra.mxu0 %v2271
        %v2273 = vand.u32 %v1427, 4294901760
        %2274 = vmatpush.msra.mxu0 %v2273
        %v2275 = vand.u32 %v1426, 4294901760
        %2276 = vmatpush.msra.mxu0 %v2275
        %v2277 = vand.u32 %v1425, 4294901760
        %2278 = vmatpush.msra.mxu0 %v2277
        %v2279 = vand.u32 %v1424, 4294901760
        %2280 = vmatpush.msra.mxu0 %v2279
        %v2281 = vand.u32 %v1423, 4294901760
        %2282 = vmatpush.msra.mxu0 %v2281
        %v2283 = vand.u32 %v1422, 4294901760
        %2284 = vmatpush.msra.mxu0 %v2283
        %v2285 = vand.u32 %v1421, 4294901760
        %2286 = vmatpush.msra.mxu0 %v2285
        %v2287 = vand.u32 %v1420, 4294901760
        %2288 = vmatpush.msra.mxu0 %v2287
        %v2289 = vand.u32 %v1419, 4294901760
        %2290 = vmatpush.msra.mxu0 %v2289
        %v2291 = vand.u32 %v1418, 4294901760
        %2292 = vmatpush.msra.mxu0 %v2291
        %v2293 = vand.u32 %v1417, 4294901760
        %2294 = vmatpush.msra.mxu0 %v2293
        %v2295 = vand.u32 %v1416, 4294901760
        %2296 = vmatpush.msra.mxu0 %v2295
        %v2297 = vand.u32 %v1415, 4294901760
        %2298 = vmatpush.msra.mxu0 %v2297
        %v2299 = vand.u32 %v1401, 4294901760
        %2300 = vmatmul.f32.gmra.mxu0 %v2299
        %v2301 = vpop.f32.mrf.mxu0
        %v2302 = vadd.f32 %v2253, %v2301
        %v2303 = vand.u32 %v1405, 4294901760
        %2304 = vmatmul.f32.gmra.mxu0 %v2303
        %v2305 = vpop.f32.mrf.mxu0
        %v2306 = vadd.f32 %v2257, %v2305
        %v2307 = vand.u32 %v1409, 4294901760
        %2308 = vmatmul.f32.gmra.mxu0 %v2307
        %v2309 = vpop.f32.mrf.mxu0
        %v2310 = vadd.f32 %v2261, %v2309
        %v2311 = vand.u32 %v1413, 4294901760
        %2312 = vmatmul.f32.gmra.mxu0 %v2311
        %v2313 = vpop.f32.mrf.mxu0
        %v2314 = vadd.f32 %v2265, %v2313
        %2315 = vdwg.mxu0
        %v2317 = vsel %vm1124, %v1120, 0
        %v2320 = vsel %vm1124, %v1121, 0
        %v2323 = vsel %vm1124, %v1122, 0
        %v2326 = vsel %vm1124, %v1123, 0
        %2328 = vmatpush.msra.mxu0 0.0
        %2329 = vmatpush.msra.mxu0 0.0
        %2330 = vmatpush.msra.mxu0 0.0
        %2331 = vmatpush.msra.mxu0 0.0
        %2332 = vmatpush.msra.mxu0 0.0
        %2333 = vmatpush.msra.mxu0 0.0
        %2334 = vmatpush.msra.mxu0 0.0
        %2335 = vmatpush.msra.mxu0 0.0
        %2336 = vmatpush.msra.mxu0 0.0
        %2337 = vmatpush.msra.mxu0 0.0
        %2338 = vmatpush.msra.mxu0 0.0
        %2339 = vmatpush.msra.mxu0 0.0
        %v2340 = vand.u32 %v1114, 4294901760
        %2341 = vmatpush.msra.mxu0 %v2340
        %v2342 = vand.u32 %v1113, 4294901760
        %2343 = vmatpush.msra.mxu0 %v2342
        %v2344 = vand.u32 %v1112, 4294901760
        %2345 = vmatpush.msra.mxu0 %v2344
        %v2346 = vand.u32 %v1111, 4294901760
        %2347 = vmatpush.msra.mxu0 %v2346
        %v2348 = vand.u32 %v2317, 4294901760
        %v2349 = vsub.f32 %v2317, %v2348
        %v2350 = vand.u32 %v2349, 4294901760
        %v2351 = vsub.f32 %v2349, %v2350
        %v2352 = vand.u32 %v2351, 4294901760
        %2353 = vmatmul.f32.gmra.mxu0 %v2352
        %v2354 = vpop.f32.mrf.mxu0
        %v2355 = vadd.f32 0.0, %v2354
        %v2356 = vand.u32 %v2320, 4294901760
        %v2357 = vsub.f32 %v2320, %v2356
        %v2358 = vand.u32 %v2357, 4294901760
        %v2359 = vsub.f32 %v2357, %v2358
        %v2360 = vand.u32 %v2359, 4294901760
        %2361 = vmatmul.f32.gmra.mxu0 %v2360
        %v2362 = vpop.f32.mrf.mxu0
        %v2363 = vadd.f32 0.0, %v2362
        %v2364 = vand.u32 %v2323, 4294901760
        %v2365 = vsub.f32 %v2323, %v2364
        %v2366 = vand.u32 %v2365, 4294901760
        %v2367 = vsub.f32 %v2365, %v2366
        %v2368 = vand.u32 %v2367, 4294901760
        %2369 = vmatmul.f32.gmra.mxu0 %v2368
        %v2370 = vpop.f32.mrf.mxu0
        %v2371 = vadd.f32 0.0, %v2370
        %v2372 = vand.u32 %v2326, 4294901760
        %v2373 = vsub.f32 %v2326, %v2372
        %v2374 = vand.u32 %v2373, 4294901760
        %v2375 = vsub.f32 %v2373, %v2374
        %v2376 = vand.u32 %v2375, 4294901760
        %2377 = vmatmul.f32.gmra.mxu0 %v2376
        %v2378 = vpop.f32.mrf.mxu0
        %v2379 = vadd.f32 0.0, %v2378
        %2380 = vdwg.mxu0
        %2381 = vmatpush.msra.mxu0 0.0
        %2382 = vmatpush.msra.mxu0 0.0
        %2383 = vmatpush.msra.mxu0 0.0
        %2384 = vmatpush.msra.mxu0 0.0
        %2385 = vmatpush.msra.mxu0 0.0
        %2386 = vmatpush.msra.mxu0 0.0
        %2387 = vmatpush.msra.mxu0 0.0
        %2388 = vmatpush.msra.mxu0 0.0
        %2389 = vmatpush.msra.mxu0 0.0
        %2390 = vmatpush.msra.mxu0 0.0
        %2391 = vmatpush.msra.mxu0 0.0
        %2392 = vmatpush.msra.mxu0 0.0
        %v2393 = vand.u32 %v1114, 4294901760
        %v2394 = vsub.f32 %v1114, %v2393
        %v2395 = vand.u32 %v2394, 4294901760
        %v2396 = vsub.f32 %v2394, %v2395
        %v2397 = vand.u32 %v2396, 4294901760
        %2398 = vmatpush.msra.mxu0 %v2397
        %v2399 = vand.u32 %v1113, 4294901760
        %v2400 = vsub.f32 %v1113, %v2399
        %v2401 = vand.u32 %v2400, 4294901760
        %v2402 = vsub.f32 %v2400, %v2401
        %v2403 = vand.u32 %v2402, 4294901760
        %2404 = vmatpush.msra.mxu0 %v2403
        %v2405 = vand.u32 %v1112, 4294901760
        %v2406 = vsub.f32 %v1112, %v2405
        %v2407 = vand.u32 %v2406, 4294901760
        %v2408 = vsub.f32 %v2406, %v2407
        %v2409 = vand.u32 %v2408, 4294901760
        %2410 = vmatpush.msra.mxu0 %v2409
        %v2411 = vand.u32 %v1111, 4294901760
        %v2412 = vsub.f32 %v1111, %v2411
        %v2413 = vand.u32 %v2412, 4294901760
        %v2414 = vsub.f32 %v2412, %v2413
        %v2415 = vand.u32 %v2414, 4294901760
        %2416 = vmatpush.msra.mxu0 %v2415
        %v2417 = vand.u32 %v2317, 4294901760
        %2418 = vmatmul.f32.gmra.mxu0 %v2417
        %v2419 = vpop.f32.mrf.mxu0
        %v2420 = vadd.f32 %v2355, %v2419
        %v2421 = vand.u32 %v2320, 4294901760
        %2422 = vmatmul.f32.gmra.mxu0 %v2421
        %v2423 = vpop.f32.mrf.mxu0
        %v2424 = vadd.f32 %v2363, %v2423
        %v2425 = vand.u32 %v2323, 4294901760
        %2426 = vmatmul.f32.gmra.mxu0 %v2425
        %v2427 = vpop.f32.mrf.mxu0
        %v2428 = vadd.f32 %v2371, %v2427
        %v2429 = vand.u32 %v2326, 4294901760
        %2430 = vmatmul.f32.gmra.mxu0 %v2429
        %v2431 = vpop.f32.mrf.mxu0
        %v2432 = vadd.f32 %v2379, %v2431
        %2433 = vdwg.mxu0
        %2434 = vmatpush.msra.mxu0 0.0
        %2435 = vmatpush.msra.mxu0 0.0
        %2436 = vmatpush.msra.mxu0 0.0
        %2437 = vmatpush.msra.mxu0 0.0
        %2438 = vmatpush.msra.mxu0 0.0
        %2439 = vmatpush.msra.mxu0 0.0
        %2440 = vmatpush.msra.mxu0 0.0
        %2441 = vmatpush.msra.mxu0 0.0
        %2442 = vmatpush.msra.mxu0 0.0
        %2443 = vmatpush.msra.mxu0 0.0
        %2444 = vmatpush.msra.mxu0 0.0
        %2445 = vmatpush.msra.mxu0 0.0
        %v2446 = vand.u32 %v1114, 4294901760
        %v2447 = vsub.f32 %v1114, %v2446
        %2448 = vmatpush.msra.mxu0 %v2447
        %v2449 = vand.u32 %v1113, 4294901760
        %v2450 = vsub.f32 %v1113, %v2449
        %2451 = vmatpush.msra.mxu0 %v2450
        %v2452 = vand.u32 %v1112, 4294901760
        %v2453 = vsub.f32 %v1112, %v2452
        %2454 = vmatpush.msra.mxu0 %v2453
        %v2455 = vand.u32 %v1111, 4294901760
        %v2456 = vsub.f32 %v1111, %v2455
        %2457 = vmatpush.msra.mxu0 %v2456
        %v2458 = vand.u32 %v2317, 4294901760
        %v2459 = vsub.f32 %v2317, %v2458
        %2460 = vmatmul.f32.gmra.mxu0 %v2459
        %v2461 = vpop.f32.mrf.mxu0
        %v2462 = vadd.f32 %v2420, %v2461
        %v2463 = vand.u32 %v2320, 4294901760
        %v2464 = vsub.f32 %v2320, %v2463
        %2465 = vmatmul.f32.gmra.mxu0 %v2464
        %v2466 = vpop.f32.mrf.mxu0
        %v2467 = vadd.f32 %v2424, %v2466
        %v2468 = vand.u32 %v2323, 4294901760
        %v2469 = vsub.f32 %v2323, %v2468
        %2470 = vmatmul.f32.gmra.mxu0 %v2469
        %v2471 = vpop.f32.mrf.mxu0
        %v2472 = vadd.f32 %v2428, %v2471
        %v2473 = vand.u32 %v2326, 4294901760
        %v2474 = vsub.f32 %v2326, %v2473
        %2475 = vmatmul.f32.gmra.mxu0 %v2474
        %v2476 = vpop.f32.mrf.mxu0
        %v2477 = vadd.f32 %v2432, %v2476
        %2478 = vdwg.mxu0
        %2479 = vmatpush.msra.mxu0 0.0
        %2480 = vmatpush.msra.mxu0 0.0
        %2481 = vmatpush.msra.mxu0 0.0
        %2482 = vmatpush.msra.mxu0 0.0
        %2483 = vmatpush.msra.mxu0 0.0
        %2484 = vmatpush.msra.mxu0 0.0
        %2485 = vmatpush.msra.mxu0 0.0
        %2486 = vmatpush.msra.mxu0 0.0
        %2487 = vmatpush.msra.mxu0 0.0
        %2488 = vmatpush.msra.mxu0 0.0
        %2489 = vmatpush.msra.mxu0 0.0
        %2490 = vmatpush.msra.mxu0 0.0
        %v2491 = vand.u32 %v1114, 4294901760
        %2492 = vmatpush.msra.mxu0 %v2491
        %v2493 = vand.u32 %v1113, 4294901760
        %2494 = vmatpush.msra.mxu0 %v2493
        %v2495 = vand.u32 %v1112, 4294901760
        %2496 = vmatpush.msra.mxu0 %v2495
        %v2497 = vand.u32 %v1111, 4294901760
        %2498 = vmatpush.msra.mxu0 %v2497
        %v2499 = vand.u32 %v2317, 4294901760
        %v2500 = vsub.f32 %v2317, %v2499
        %v2501 = vand.u32 %v2500, 4294901760
        %2502 = vmatmul.f32.gmra.mxu0 %v2501
        %v2503 = vpop.f32.mrf.mxu0
        %v2504 = vadd.f32 %v2462, %v2503
        %v2505 = vand.u32 %v2320, 4294901760
        %v2506 = vsub.f32 %v2320, %v2505
        %v2507 = vand.u32 %v2506, 4294901760
        %2508 = vmatmul.f32.gmra.mxu0 %v2507
        %v2509 = vpop.f32.mrf.mxu0
        %v2510 = vadd.f32 %v2467, %v2509
        %v2511 = vand.u32 %v2323, 4294901760
        %v2512 = vsub.f32 %v2323, %v2511
        %v2513 = vand.u32 %v2512, 4294901760
        %2514 = vmatmul.f32.gmra.mxu0 %v2513
        %v2515 = vpop.f32.mrf.mxu0
        %v2516 = vadd.f32 %v2472, %v2515
        %v2517 = vand.u32 %v2326, 4294901760
        %v2518 = vsub.f32 %v2326, %v2517
        %v2519 = vand.u32 %v2518, 4294901760
        %2520 = vmatmul.f32.gmra.mxu0 %v2519
        %v2521 = vpop.f32.mrf.mxu0
        %v2522 = vadd.f32 %v2477, %v2521
        %2523 = vdwg.mxu0
        %2524 = vmatpush.msra.mxu0 0.0
        %2525 = vmatpush.msra.mxu0 0.0
        %2526 = vmatpush.msra.mxu0 0.0
        %2527 = vmatpush.msra.mxu0 0.0
        %2528 = vmatpush.msra.mxu0 0.0
        %2529 = vmatpush.msra.mxu0 0.0
        %2530 = vmatpush.msra.mxu0 0.0
        %2531 = vmatpush.msra.mxu0 0.0
        %2532 = vmatpush.msra.mxu0 0.0
        %2533 = vmatpush.msra.mxu0 0.0
        %2534 = vmatpush.msra.mxu0 0.0
        %2535 = vmatpush.msra.mxu0 0.0
        %v2536 = vand.u32 %v1114, 4294901760
        %v2537 = vsub.f32 %v1114, %v2536
        %v2538 = vand.u32 %v2537, 4294901760
        %2539 = vmatpush.msra.mxu0 %v2538
        %v2540 = vand.u32 %v1113, 4294901760
        %v2541 = vsub.f32 %v1113, %v2540
        %v2542 = vand.u32 %v2541, 4294901760
        %2543 = vmatpush.msra.mxu0 %v2542
        %v2544 = vand.u32 %v1112, 4294901760
        %v2545 = vsub.f32 %v1112, %v2544
        %v2546 = vand.u32 %v2545, 4294901760
        %2547 = vmatpush.msra.mxu0 %v2546
        %v2548 = vand.u32 %v1111, 4294901760
        %v2549 = vsub.f32 %v1111, %v2548
        %v2550 = vand.u32 %v2549, 4294901760
        %2551 = vmatpush.msra.mxu0 %v2550
        %v2552 = vand.u32 %v2317, 4294901760
        %2553 = vmatmul.f32.gmra.mxu0 %v2552
        %v2554 = vpop.f32.mrf.mxu0
        %v2555 = vadd.f32 %v2504, %v2554
        %v2556 = vand.u32 %v2320, 4294901760
        %2557 = vmatmul.f32.gmra.mxu0 %v2556
        %v2558 = vpop.f32.mrf.mxu0
        %v2559 = vadd.f32 %v2510, %v2558
        %v2560 = vand.u32 %v2323, 4294901760
        %2561 = vmatmul.f32.gmra.mxu0 %v2560
        %v2562 = vpop.f32.mrf.mxu0
        %v2563 = vadd.f32 %v2516, %v2562
        %v2564 = vand.u32 %v2326, 4294901760
        %2565 = vmatmul.f32.gmra.mxu0 %v2564
        %v2566 = vpop.f32.mrf.mxu0
        %v2567 = vadd.f32 %v2522, %v2566
        %2568 = vdwg.mxu0
        %2569 = vmatpush.msra.mxu0 0.0
        %2570 = vmatpush.msra.mxu0 0.0
        %2571 = vmatpush.msra.mxu0 0.0
        %2572 = vmatpush.msra.mxu0 0.0
        %2573 = vmatpush.msra.mxu0 0.0
        %2574 = vmatpush.msra.mxu0 0.0
        %2575 = vmatpush.msra.mxu0 0.0
        %2576 = vmatpush.msra.mxu0 0.0
        %2577 = vmatpush.msra.mxu0 0.0
        %2578 = vmatpush.msra.mxu0 0.0
        %2579 = vmatpush.msra.mxu0 0.0
        %2580 = vmatpush.msra.mxu0 0.0
        %v2581 = vand.u32 %v1114, 4294901760
        %2582 = vmatpush.msra.mxu0 %v2581
        %v2583 = vand.u32 %v1113, 4294901760
        %2584 = vmatpush.msra.mxu0 %v2583
        %v2585 = vand.u32 %v1112, 4294901760
        %2586 = vmatpush.msra.mxu0 %v2585
        %v2587 = vand.u32 %v1111, 4294901760
        %2588 = vmatpush.msra.mxu0 %v2587
        %v2589 = vand.u32 %v2317, 4294901760
        %2590 = vmatmul.f32.gmra.mxu0 %v2589
        %v2591 = vpop.f32.mrf.mxu0
        %v2592 = vadd.f32 %v2555, %v2591
        %v2593 = vand.u32 %v2320, 4294901760
        %2594 = vmatmul.f32.gmra.mxu0 %v2593
        %v2595 = vpop.f32.mrf.mxu0
        %v2596 = vadd.f32 %v2559, %v2595
        %v2597 = vand.u32 %v2323, 4294901760
        %2598 = vmatmul.f32.gmra.mxu0 %v2597
        %v2599 = vpop.f32.mrf.mxu0
        %v2600 = vadd.f32 %v2563, %v2599
        %v2601 = vand.u32 %v2326, 4294901760
        %2602 = vmatmul.f32.gmra.mxu0 %v2601
        %v2603 = vpop.f32.mrf.mxu0
        %v2604 = vadd.f32 %v2567, %v2603
        %2605 = vdwg.mxu0
        %s2606 = scalar_lea.vmem %s329, 256
        %v2607 = vld [vmem:[%s2606] sm:$0xff]
        %v2608 = vld [vmem:[%s2606 + $0x8] sm:$0xff]
        %v2609 = vld [vmem:[%s2606 + $0x10] sm:$0xff]
        %v2610 = vld [vmem:[%s2606 + $0x18] sm:$0xff]
        %v2611 = vld [vmem:[%s2606 + $0x20] sm:$0xff]
        %v2612 = vld [vmem:[%s2606 + $0x28] sm:$0xff]
        %v2613 = vld [vmem:[%s2606 + $0x30] sm:$0xff]
        %v2614 = vld [vmem:[%s2606 + $0x38] sm:$0xff]
        %v2615 = vld [vmem:[%s2606 + $0x40] sm:$0xff]
        %v2616 = vld [vmem:[%s2606 + $0x48] sm:$0xff]
        %v2617 = vld [vmem:[%s2606 + $0x50] sm:$0xff]
        %v2618 = vld [vmem:[%s2606 + $0x58] sm:$0xff]
        %v2619 = vld [vmem:[%s2606 + $0x60] sm:$0xff]
        %v2620 = vld [vmem:[%s2606 + $0x68] sm:$0xff]
        %v2621 = vld [vmem:[%s2606 + $0x70] sm:$0xff]
        %v2622 = vld [vmem:[%s2606 + $0x78] sm:$0xff]
        %v2623 = vand.u32 %v2622, 4294901760
        %2624 = vmatpush.msra.mxu0 %v2623
        %v2625 = vand.u32 %v2621, 4294901760
        %2626 = vmatpush.msra.mxu0 %v2625
        %v2627 = vand.u32 %v2620, 4294901760
        %2628 = vmatpush.msra.mxu0 %v2627
        %v2629 = vand.u32 %v2619, 4294901760
        %2630 = vmatpush.msra.mxu0 %v2629
        %v2631 = vand.u32 %v2618, 4294901760
        %2632 = vmatpush.msra.mxu0 %v2631
        %v2633 = vand.u32 %v2617, 4294901760
        %2634 = vmatpush.msra.mxu0 %v2633
        %v2635 = vand.u32 %v2616, 4294901760
        %2636 = vmatpush.msra.mxu0 %v2635
        %v2637 = vand.u32 %v2615, 4294901760
        %2638 = vmatpush.msra.mxu0 %v2637
        %v2639 = vand.u32 %v2614, 4294901760
        %2640 = vmatpush.msra.mxu0 %v2639
        %v2641 = vand.u32 %v2613, 4294901760
        %2642 = vmatpush.msra.mxu0 %v2641
        %v2643 = vand.u32 %v2612, 4294901760
        %2644 = vmatpush.msra.mxu0 %v2643
        %v2645 = vand.u32 %v2611, 4294901760
        %2646 = vmatpush.msra.mxu0 %v2645
        %v2647 = vand.u32 %v2610, 4294901760
        %2648 = vmatpush.msra.mxu0 %v2647
        %v2649 = vand.u32 %v2609, 4294901760
        %2650 = vmatpush.msra.mxu0 %v2649
        %v2651 = vand.u32 %v2608, 4294901760
        %2652 = vmatpush.msra.mxu0 %v2651
        %v2653 = vand.u32 %v2607, 4294901760
        %2654 = vmatpush.msra.mxu0 %v2653
        %v2655 = vand.u32 %v2592, 4294901760
        %v2656 = vsub.f32 %v2592, %v2655
        %v2657 = vand.u32 %v2656, 4294901760
        %v2658 = vsub.f32 %v2656, %v2657
        %v2659 = vand.u32 %v2658, 4294901760
        %2660 = vmatmul.f32.gmra.mxu0 %v2659
        %v2661 = vpop.f32.mrf.mxu0
        %v2662 = vadd.f32 0.0, %v2661
        %v2663 = vand.u32 %v2596, 4294901760
        %v2664 = vsub.f32 %v2596, %v2663
        %v2665 = vand.u32 %v2664, 4294901760
        %v2666 = vsub.f32 %v2664, %v2665
        %v2667 = vand.u32 %v2666, 4294901760
        %2668 = vmatmul.f32.gmra.mxu0 %v2667
        %v2669 = vpop.f32.mrf.mxu0
        %v2670 = vadd.f32 0.0, %v2669
        %v2671 = vand.u32 %v2600, 4294901760
        %v2672 = vsub.f32 %v2600, %v2671
        %v2673 = vand.u32 %v2672, 4294901760
        %v2674 = vsub.f32 %v2672, %v2673
        %v2675 = vand.u32 %v2674, 4294901760
        %2676 = vmatmul.f32.gmra.mxu0 %v2675
        %v2677 = vpop.f32.mrf.mxu0
        %v2678 = vadd.f32 0.0, %v2677
        %v2679 = vand.u32 %v2604, 4294901760
        %v2680 = vsub.f32 %v2604, %v2679
        %v2681 = vand.u32 %v2680, 4294901760
        %v2682 = vsub.f32 %v2680, %v2681
        %v2683 = vand.u32 %v2682, 4294901760
        %2684 = vmatmul.f32.gmra.mxu0 %v2683
        %v2685 = vpop.f32.mrf.mxu0
        %v2686 = vadd.f32 0.0, %v2685
        %2687 = vdwg.mxu0
        %v2688 = vand.u32 %v2622, 4294901760
        %v2689 = vsub.f32 %v2622, %v2688
        %v2690 = vand.u32 %v2689, 4294901760
        %v2691 = vsub.f32 %v2689, %v2690
        %v2692 = vand.u32 %v2691, 4294901760
        %2693 = vmatpush.msra.mxu0 %v2692
        %v2694 = vand.u32 %v2621, 4294901760
        %v2695 = vsub.f32 %v2621, %v2694
        %v2696 = vand.u32 %v2695, 4294901760
        %v2697 = vsub.f32 %v2695, %v2696
        %v2698 = vand.u32 %v2697, 4294901760
        %2699 = vmatpush.msra.mxu0 %v2698
        %v2700 = vand.u32 %v2620, 4294901760
        %v2701 = vsub.f32 %v2620, %v2700
        %v2702 = vand.u32 %v2701, 4294901760
        %v2703 = vsub.f32 %v2701, %v2702
        %v2704 = vand.u32 %v2703, 4294901760
        %2705 = vmatpush.msra.mxu0 %v2704
        %v2706 = vand.u32 %v2619, 4294901760
        %v2707 = vsub.f32 %v2619, %v2706
        %v2708 = vand.u32 %v2707, 4294901760
        %v2709 = vsub.f32 %v2707, %v2708
        %v2710 = vand.u32 %v2709, 4294901760
        %2711 = vmatpush.msra.mxu0 %v2710
        %v2712 = vand.u32 %v2618, 4294901760
        %v2713 = vsub.f32 %v2618, %v2712
        %v2714 = vand.u32 %v2713, 4294901760
        %v2715 = vsub.f32 %v2713, %v2714
        %v2716 = vand.u32 %v2715, 4294901760
        %2717 = vmatpush.msra.mxu0 %v2716
        %v2718 = vand.u32 %v2617, 4294901760
        %v2719 = vsub.f32 %v2617, %v2718
        %v2720 = vand.u32 %v2719, 4294901760
        %v2721 = vsub.f32 %v2719, %v2720
        %v2722 = vand.u32 %v2721, 4294901760
        %2723 = vmatpush.msra.mxu0 %v2722
        %v2724 = vand.u32 %v2616, 4294901760
        %v2725 = vsub.f32 %v2616, %v2724
        %v2726 = vand.u32 %v2725, 4294901760
        %v2727 = vsub.f32 %v2725, %v2726
        %v2728 = vand.u32 %v2727, 4294901760
        %2729 = vmatpush.msra.mxu0 %v2728
        %v2730 = vand.u32 %v2615, 4294901760
        %v2731 = vsub.f32 %v2615, %v2730
        %v2732 = vand.u32 %v2731, 4294901760
        %v2733 = vsub.f32 %v2731, %v2732
        %v2734 = vand.u32 %v2733, 4294901760
        %2735 = vmatpush.msra.mxu0 %v2734
        %v2736 = vand.u32 %v2614, 4294901760
        %v2737 = vsub.f32 %v2614, %v2736
        %v2738 = vand.u32 %v2737, 4294901760
        %v2739 = vsub.f32 %v2737, %v2738
        %v2740 = vand.u32 %v2739, 4294901760
        %2741 = vmatpush.msra.mxu0 %v2740
        %v2742 = vand.u32 %v2613, 4294901760
        %v2743 = vsub.f32 %v2613, %v2742
        %v2744 = vand.u32 %v2743, 4294901760
        %v2745 = vsub.f32 %v2743, %v2744
        %v2746 = vand.u32 %v2745, 4294901760
        %2747 = vmatpush.msra.mxu0 %v2746
        %v2748 = vand.u32 %v2612, 4294901760
        %v2749 = vsub.f32 %v2612, %v2748
        %v2750 = vand.u32 %v2749, 4294901760
        %v2751 = vsub.f32 %v2749, %v2750
        %v2752 = vand.u32 %v2751, 4294901760
        %2753 = vmatpush.msra.mxu0 %v2752
        %v2754 = vand.u32 %v2611, 4294901760
        %v2755 = vsub.f32 %v2611, %v2754
        %v2756 = vand.u32 %v2755, 4294901760
        %v2757 = vsub.f32 %v2755, %v2756
        %v2758 = vand.u32 %v2757, 4294901760
        %2759 = vmatpush.msra.mxu0 %v2758
        %v2760 = vand.u32 %v2610, 4294901760
        %v2761 = vsub.f32 %v2610, %v2760
        %v2762 = vand.u32 %v2761, 4294901760
        %v2763 = vsub.f32 %v2761, %v2762
        %v2764 = vand.u32 %v2763, 4294901760
        %2765 = vmatpush.msra.mxu0 %v2764
        %v2766 = vand.u32 %v2609, 4294901760
        %v2767 = vsub.f32 %v2609, %v2766
        %v2768 = vand.u32 %v2767, 4294901760
        %v2769 = vsub.f32 %v2767, %v2768
        %v2770 = vand.u32 %v2769, 4294901760
        %2771 = vmatpush.msra.mxu0 %v2770
        %v2772 = vand.u32 %v2608, 4294901760
        %v2773 = vsub.f32 %v2608, %v2772
        %v2774 = vand.u32 %v2773, 4294901760
        %v2775 = vsub.f32 %v2773, %v2774
        %v2776 = vand.u32 %v2775, 4294901760
        %2777 = vmatpush.msra.mxu0 %v2776
        %v2778 = vand.u32 %v2607, 4294901760
        %v2779 = vsub.f32 %v2607, %v2778
        %v2780 = vand.u32 %v2779, 4294901760
        %v2781 = vsub.f32 %v2779, %v2780
        %v2782 = vand.u32 %v2781, 4294901760
        %2783 = vmatpush.msra.mxu0 %v2782
        %v2784 = vand.u32 %v2592, 4294901760
        %2785 = vmatmul.f32.gmra.mxu0 %v2784
        %v2786 = vpop.f32.mrf.mxu0
        %v2787 = vadd.f32 %v2662, %v2786
        %v2788 = vand.u32 %v2596, 4294901760
        %2789 = vmatmul.f32.gmra.mxu0 %v2788
        %v2790 = vpop.f32.mrf.mxu0
        %v2791 = vadd.f32 %v2670, %v2790
        %v2792 = vand.u32 %v2600, 4294901760
        %2793 = vmatmul.f32.gmra.mxu0 %v2792
        %v2794 = vpop.f32.mrf.mxu0
        %v2795 = vadd.f32 %v2678, %v2794
        %v2796 = vand.u32 %v2604, 4294901760
        %2797 = vmatmul.f32.gmra.mxu0 %v2796
        %v2798 = vpop.f32.mrf.mxu0
        %v2799 = vadd.f32 %v2686, %v2798
        %2800 = vdwg.mxu0
        %v2801 = vand.u32 %v2622, 4294901760
        %v2802 = vsub.f32 %v2622, %v2801
        %2803 = vmatpush.msra.mxu0 %v2802
        %v2804 = vand.u32 %v2621, 4294901760
        %v2805 = vsub.f32 %v2621, %v2804
        %2806 = vmatpush.msra.mxu0 %v2805
        %v2807 = vand.u32 %v2620, 4294901760
        %v2808 = vsub.f32 %v2620, %v2807
        %2809 = vmatpush.msra.mxu0 %v2808
        %v2810 = vand.u32 %v2619, 4294901760
        %v2811 = vsub.f32 %v2619, %v2810
        %2812 = vmatpush.msra.mxu0 %v2811
        %v2813 = vand.u32 %v2618, 4294901760
        %v2814 = vsub.f32 %v2618, %v2813
        %2815 = vmatpush.msra.mxu0 %v2814
        %v2816 = vand.u32 %v2617, 4294901760
        %v2817 = vsub.f32 %v2617, %v2816
        %2818 = vmatpush.msra.mxu0 %v2817
        %v2819 = vand.u32 %v2616, 4294901760
        %v2820 = vsub.f32 %v2616, %v2819
        %2821 = vmatpush.msra.mxu0 %v2820
        %v2822 = vand.u32 %v2615, 4294901760
        %v2823 = vsub.f32 %v2615, %v2822
        %2824 = vmatpush.msra.mxu0 %v2823
        %v2825 = vand.u32 %v2614, 4294901760
        %v2826 = vsub.f32 %v2614, %v2825
        %2827 = vmatpush.msra.mxu0 %v2826
        %v2828 = vand.u32 %v2613, 4294901760
        %v2829 = vsub.f32 %v2613, %v2828
        %2830 = vmatpush.msra.mxu0 %v2829
        %v2831 = vand.u32 %v2612, 4294901760
        %v2832 = vsub.f32 %v2612, %v2831
        %2833 = vmatpush.msra.mxu0 %v2832
        %v2834 = vand.u32 %v2611, 4294901760
        %v2835 = vsub.f32 %v2611, %v2834
        %2836 = vmatpush.msra.mxu0 %v2835
        %v2837 = vand.u32 %v2610, 4294901760
        %v2838 = vsub.f32 %v2610, %v2837
        %2839 = vmatpush.msra.mxu0 %v2838
        %v2840 = vand.u32 %v2609, 4294901760
        %v2841 = vsub.f32 %v2609, %v2840
        %2842 = vmatpush.msra.mxu0 %v2841
        %v2843 = vand.u32 %v2608, 4294901760
        %v2844 = vsub.f32 %v2608, %v2843
        %2845 = vmatpush.msra.mxu0 %v2844
        %v2846 = vand.u32 %v2607, 4294901760
        %v2847 = vsub.f32 %v2607, %v2846
        %2848 = vmatpush.msra.mxu0 %v2847
        %v2849 = vand.u32 %v2592, 4294901760
        %v2850 = vsub.f32 %v2592, %v2849
        %2851 = vmatmul.f32.gmra.mxu0 %v2850
        %v2852 = vpop.f32.mrf.mxu0
        %v2853 = vadd.f32 %v2787, %v2852
        %v2854 = vand.u32 %v2596, 4294901760
        %v2855 = vsub.f32 %v2596, %v2854
        %2856 = vmatmul.f32.gmra.mxu0 %v2855
        %v2857 = vpop.f32.mrf.mxu0
        %v2858 = vadd.f32 %v2791, %v2857
        %v2859 = vand.u32 %v2600, 4294901760
        %v2860 = vsub.f32 %v2600, %v2859
        %2861 = vmatmul.f32.gmra.mxu0 %v2860
        %v2862 = vpop.f32.mrf.mxu0
        %v2863 = vadd.f32 %v2795, %v2862
        %v2864 = vand.u32 %v2604, 4294901760
        %v2865 = vsub.f32 %v2604, %v2864
        %2866 = vmatmul.f32.gmra.mxu0 %v2865
        %v2867 = vpop.f32.mrf.mxu0
        %v2868 = vadd.f32 %v2799, %v2867
        %2869 = vdwg.mxu0
        %v2870 = vand.u32 %v2622, 4294901760
        %2871 = vmatpush.msra.mxu0 %v2870
        %v2872 = vand.u32 %v2621, 4294901760
        %2873 = vmatpush.msra.mxu0 %v2872
        %v2874 = vand.u32 %v2620, 4294901760
        %2875 = vmatpush.msra.mxu0 %v2874
        %v2876 = vand.u32 %v2619, 4294901760
        %2877 = vmatpush.msra.mxu0 %v2876
        %v2878 = vand.u32 %v2618, 4294901760
        %2879 = vmatpush.msra.mxu0 %v2878
        %v2880 = vand.u32 %v2617, 4294901760
        %2881 = vmatpush.msra.mxu0 %v2880
        %v2882 = vand.u32 %v2616, 4294901760
        %2883 = vmatpush.msra.mxu0 %v2882
        %v2884 = vand.u32 %v2615, 4294901760
        %2885 = vmatpush.msra.mxu0 %v2884
        %v2886 = vand.u32 %v2614, 4294901760
        %2887 = vmatpush.msra.mxu0 %v2886
        %v2888 = vand.u32 %v2613, 4294901760
        %2889 = vmatpush.msra.mxu0 %v2888
        %v2890 = vand.u32 %v2612, 4294901760
        %2891 = vmatpush.msra.mxu0 %v2890
        %v2892 = vand.u32 %v2611, 4294901760
        %2893 = vmatpush.msra.mxu0 %v2892
        %v2894 = vand.u32 %v2610, 4294901760
        %2895 = vmatpush.msra.mxu0 %v2894
        %v2896 = vand.u32 %v2609, 4294901760
        %2897 = vmatpush.msra.mxu0 %v2896
        %v2898 = vand.u32 %v2608, 4294901760
        %2899 = vmatpush.msra.mxu0 %v2898
        %v2900 = vand.u32 %v2607, 4294901760
        %2901 = vmatpush.msra.mxu0 %v2900
        %v2902 = vand.u32 %v2592, 4294901760
        %v2903 = vsub.f32 %v2592, %v2902
        %v2904 = vand.u32 %v2903, 4294901760
        %2905 = vmatmul.f32.gmra.mxu0 %v2904
        %v2906 = vpop.f32.mrf.mxu0
        %v2907 = vadd.f32 %v2853, %v2906
        %v2908 = vand.u32 %v2596, 4294901760
        %v2909 = vsub.f32 %v2596, %v2908
        %v2910 = vand.u32 %v2909, 4294901760
        %2911 = vmatmul.f32.gmra.mxu0 %v2910
        %v2912 = vpop.f32.mrf.mxu0
        %v2913 = vadd.f32 %v2858, %v2912
        %v2914 = vand.u32 %v2600, 4294901760
        %v2915 = vsub.f32 %v2600, %v2914
        %v2916 = vand.u32 %v2915, 4294901760
        %2917 = vmatmul.f32.gmra.mxu0 %v2916
        %v2918 = vpop.f32.mrf.mxu0
        %v2919 = vadd.f32 %v2863, %v2918
        %v2920 = vand.u32 %v2604, 4294901760
        %v2921 = vsub.f32 %v2604, %v2920
        %v2922 = vand.u32 %v2921, 4294901760
        %2923 = vmatmul.f32.gmra.mxu0 %v2922
        %v2924 = vpop.f32.mrf.mxu0
        %v2925 = vadd.f32 %v2868, %v2924
        %2926 = vdwg.mxu0
        %v2927 = vand.u32 %v2622, 4294901760
        %v2928 = vsub.f32 %v2622, %v2927
        %v2929 = vand.u32 %v2928, 4294901760
        %2930 = vmatpush.msra.mxu0 %v2929
        %v2931 = vand.u32 %v2621, 4294901760
        %v2932 = vsub.f32 %v2621, %v2931
        %v2933 = vand.u32 %v2932, 4294901760
        %2934 = vmatpush.msra.mxu0 %v2933
        %v2935 = vand.u32 %v2620, 4294901760
        %v2936 = vsub.f32 %v2620, %v2935
        %v2937 = vand.u32 %v2936, 4294901760
        %2938 = vmatpush.msra.mxu0 %v2937
        %v2939 = vand.u32 %v2619, 4294901760
        %v2940 = vsub.f32 %v2619, %v2939
        %v2941 = vand.u32 %v2940, 4294901760
        %2942 = vmatpush.msra.mxu0 %v2941
        %v2943 = vand.u32 %v2618, 4294901760
        %v2944 = vsub.f32 %v2618, %v2943
        %v2945 = vand.u32 %v2944, 4294901760
        %2946 = vmatpush.msra.mxu0 %v2945
        %v2947 = vand.u32 %v2617, 4294901760
        %v2948 = vsub.f32 %v2617, %v2947
        %v2949 = vand.u32 %v2948, 4294901760
        %2950 = vmatpush.msra.mxu0 %v2949
        %v2951 = vand.u32 %v2616, 4294901760
        %v2952 = vsub.f32 %v2616, %v2951
        %v2953 = vand.u32 %v2952, 4294901760
        %2954 = vmatpush.msra.mxu0 %v2953
        %v2955 = vand.u32 %v2615, 4294901760
        %v2956 = vsub.f32 %v2615, %v2955
        %v2957 = vand.u32 %v2956, 4294901760
        %2958 = vmatpush.msra.mxu0 %v2957
        %v2959 = vand.u32 %v2614, 4294901760
        %v2960 = vsub.f32 %v2614, %v2959
        %v2961 = vand.u32 %v2960, 4294901760
        %2962 = vmatpush.msra.mxu0 %v2961
        %v2963 = vand.u32 %v2613, 4294901760
        %v2964 = vsub.f32 %v2613, %v2963
        %v2965 = vand.u32 %v2964, 4294901760
        %2966 = vmatpush.msra.mxu0 %v2965
        %v2967 = vand.u32 %v2612, 4294901760
        %v2968 = vsub.f32 %v2612, %v2967
        %v2969 = vand.u32 %v2968, 4294901760
        %2970 = vmatpush.msra.mxu0 %v2969
        %v2971 = vand.u32 %v2611, 4294901760
        %v2972 = vsub.f32 %v2611, %v2971
        %v2973 = vand.u32 %v2972, 4294901760
        %2974 = vmatpush.msra.mxu0 %v2973
        %v2975 = vand.u32 %v2610, 4294901760
        %v2976 = vsub.f32 %v2610, %v2975
        %v2977 = vand.u32 %v2976, 4294901760
        %2978 = vmatpush.msra.mxu0 %v2977
        %v2979 = vand.u32 %v2609, 4294901760
        %v2980 = vsub.f32 %v2609, %v2979
        %v2981 = vand.u32 %v2980, 4294901760
        %2982 = vmatpush.msra.mxu0 %v2981
        %v2983 = vand.u32 %v2608, 4294901760
        %v2984 = vsub.f32 %v2608, %v2983
        %v2985 = vand.u32 %v2984, 4294901760
        %2986 = vmatpush.msra.mxu0 %v2985
        %v2987 = vand.u32 %v2607, 4294901760
        %v2988 = vsub.f32 %v2607, %v2987
        %v2989 = vand.u32 %v2988, 4294901760
        %2990 = vmatpush.msra.mxu0 %v2989
        %v2991 = vand.u32 %v2592, 4294901760
        %2992 = vmatmul.f32.gmra.mxu0 %v2991
        %v2993 = vpop.f32.mrf.mxu0
        %v2994 = vadd.f32 %v2907, %v2993
        %v2995 = vand.u32 %v2596, 4294901760
        %2996 = vmatmul.f32.gmra.mxu0 %v2995
        %v2997 = vpop.f32.mrf.mxu0
        %v2998 = vadd.f32 %v2913, %v2997
        %v2999 = vand.u32 %v2600, 4294901760
        %3000 = vmatmul.f32.gmra.mxu0 %v2999
        %v3001 = vpop.f32.mrf.mxu0
        %v3002 = vadd.f32 %v2919, %v3001
        %v3003 = vand.u32 %v2604, 4294901760
        %3004 = vmatmul.f32.gmra.mxu0 %v3003
        %v3005 = vpop.f32.mrf.mxu0
        %v3006 = vadd.f32 %v2925, %v3005
        %3007 = vdwg.mxu0
        %v3008 = vand.u32 %v2622, 4294901760
        %3009 = vmatpush.msra.mxu0 %v3008
        %v3010 = vand.u32 %v2621, 4294901760
        %3011 = vmatpush.msra.mxu0 %v3010
        %v3012 = vand.u32 %v2620, 4294901760
        %3013 = vmatpush.msra.mxu0 %v3012
        %v3014 = vand.u32 %v2619, 4294901760
        %3015 = vmatpush.msra.mxu0 %v3014
        %v3016 = vand.u32 %v2618, 4294901760
        %3017 = vmatpush.msra.mxu0 %v3016
        %v3018 = vand.u32 %v2617, 4294901760
        %3019 = vmatpush.msra.mxu0 %v3018
        %v3020 = vand.u32 %v2616, 4294901760
        %3021 = vmatpush.msra.mxu0 %v3020
        %v3022 = vand.u32 %v2615, 4294901760
        %3023 = vmatpush.msra.mxu0 %v3022
        %v3024 = vand.u32 %v2614, 4294901760
        %3025 = vmatpush.msra.mxu0 %v3024
        %v3026 = vand.u32 %v2613, 4294901760
        %3027 = vmatpush.msra.mxu0 %v3026
        %v3028 = vand.u32 %v2612, 4294901760
        %3029 = vmatpush.msra.mxu0 %v3028
        %v3030 = vand.u32 %v2611, 4294901760
        %3031 = vmatpush.msra.mxu0 %v3030
        %v3032 = vand.u32 %v2610, 4294901760
        %3033 = vmatpush.msra.mxu0 %v3032
        %v3034 = vand.u32 %v2609, 4294901760
        %3035 = vmatpush.msra.mxu0 %v3034
        %v3036 = vand.u32 %v2608, 4294901760
        %3037 = vmatpush.msra.mxu0 %v3036
        %v3038 = vand.u32 %v2607, 4294901760
        %3039 = vmatpush.msra.mxu0 %v3038
        %v3040 = vand.u32 %v2592, 4294901760
        %3041 = vmatmul.f32.gmra.mxu0 %v3040
        %v3042 = vpop.f32.mrf.mxu0
        %v3043 = vadd.f32 %v2994, %v3042
        %v3044 = vand.u32 %v2596, 4294901760
        %3045 = vmatmul.f32.gmra.mxu0 %v3044
        %v3046 = vpop.f32.mrf.mxu0
        %v3047 = vadd.f32 %v2998, %v3046
        %v3048 = vand.u32 %v2600, 4294901760
        %3049 = vmatmul.f32.gmra.mxu0 %v3048
        %v3050 = vpop.f32.mrf.mxu0
        %v3051 = vadd.f32 %v3002, %v3050
        %v3052 = vand.u32 %v2604, 4294901760
        %3053 = vmatmul.f32.gmra.mxu0 %v3052
        %v3054 = vpop.f32.mrf.mxu0
        %v3055 = vadd.f32 %v3006, %v3054
        %3056 = vdwg.mxu0
        %v3057 = vadd.f32 %v2302, %v3043
        %v3058 = vadd.f32 %v2306, %v3047
        %v3059 = vadd.f32 %v2310, %v3051
        %v3060 = vadd.f32 %v2314, %v3055
        %v3061 = vadd.f32 %v3057, %v3058
        %v3062 = vadd.f32 %v3061, %v3059
        %v3063 = vadd.f32 %v3062, %v3060
        %v3064 = vrot.slane %v3063, 4
        %v3065 = vadd.f32 %v3063, %v3064
        %v3066 = vrot.slane %v3065, 2
        %v3067 = vadd.f32 %v3065, %v3066
        %v3068 = vrot.slane %v3067, 1
        %v3069 = vadd.f32 %v3067, %v3068
        %v3070 = vmul.f32 %v3057, %v3057
        %v3071 = vmul.f32 %v3058, %v3058
        %v3072 = vmul.f32 %v3059, %v3059
        %v3073 = vmul.f32 %v3060, %v3060
        %v3074 = vadd.f32 %v3070, %v3071
        %v3075 = vadd.f32 %v3074, %v3072
        %v3076 = vadd.f32 %v3075, %v3073
        %v3077 = vrot.slane %v3076, 4
        %v3078 = vadd.f32 %v3076, %v3077
        %v3079 = vrot.slane %v3078, 2
        %v3080 = vadd.f32 %v3078, %v3079
        %v3081 = vrot.slane %v3080, 1
        %v3082 = vadd.f32 %v3080, %v3081
        %v3083 = vsel %vm389, %v3069, %v3082
        %v3084 = vand.u32 %v345, 4294901760
        %3085 = vmatpush.msra.mxu0 %v3084
        %v3086 = vand.u32 %v344, 4294901760
        %3087 = vmatpush.msra.mxu0 %v3086
        %v3088 = vand.u32 %v343, 4294901760
        %3089 = vmatpush.msra.mxu0 %v3088
        %v3090 = vand.u32 %v342, 4294901760
        %3091 = vmatpush.msra.mxu0 %v3090
        %v3092 = vand.u32 %v341, 4294901760
        %3093 = vmatpush.msra.mxu0 %v3092
        %v3094 = vand.u32 %v340, 4294901760
        %3095 = vmatpush.msra.mxu0 %v3094
        %v3096 = vand.u32 %v339, 4294901760
        %3097 = vmatpush.msra.mxu0 %v3096
        %v3098 = vand.u32 %v338, 4294901760
        %3099 = vmatpush.msra.mxu0 %v3098
        %v3100 = vand.u32 %v337, 4294901760
        %3101 = vmatpush.msra.mxu0 %v3100
        %v3102 = vand.u32 %v336, 4294901760
        %3103 = vmatpush.msra.mxu0 %v3102
        %v3104 = vand.u32 %v335, 4294901760
        %3105 = vmatpush.msra.mxu0 %v3104
        %v3106 = vand.u32 %v334, 4294901760
        %3107 = vmatpush.msra.mxu0 %v3106
        %v3108 = vand.u32 %v333, 4294901760
        %3109 = vmatpush.msra.mxu0 %v3108
        %v3110 = vand.u32 %v332, 4294901760
        %3111 = vmatpush.msra.mxu0 %v3110
        %v3112 = vand.u32 %v331, 4294901760
        %3113 = vmatpush.msra.mxu0 %v3112
        %v3114 = vand.u32 %v330, 4294901760
        %3115 = vmatpush.msra.mxu0 %v3114
        %v3116 = vand.u32 %v3083, 4294901760
        %v3117 = vsub.f32 %v3083, %v3116
        %v3118 = vand.u32 %v3117, 4294901760
        %v3119 = vsub.f32 %v3117, %v3118
        %v3120 = vand.u32 %v3119, 4294901760
        %3121 = vmatmul.f32.gmra.mxu0 %v3120
        %v3122 = vpop.f32.mrf.mxu0
        %v3123 = vadd.f32 0.0, %v3122
        %3124 = vdwg.mxu0
        %v3125 = vand.u32 %v345, 4294901760
        %v3126 = vsub.f32 %v345, %v3125
        %v3127 = vand.u32 %v3126, 4294901760
        %v3128 = vsub.f32 %v3126, %v3127
        %v3129 = vand.u32 %v3128, 4294901760
        %3130 = vmatpush.msra.mxu0 %v3129
        %v3131 = vand.u32 %v344, 4294901760
        %v3132 = vsub.f32 %v344, %v3131
        %v3133 = vand.u32 %v3132, 4294901760
        %v3134 = vsub.f32 %v3132, %v3133
        %v3135 = vand.u32 %v3134, 4294901760
        %3136 = vmatpush.msra.mxu0 %v3135
        %v3137 = vand.u32 %v343, 4294901760
        %v3138 = vsub.f32 %v343, %v3137
        %v3139 = vand.u32 %v3138, 4294901760
        %v3140 = vsub.f32 %v3138, %v3139
        %v3141 = vand.u32 %v3140, 4294901760
        %3142 = vmatpush.msra.mxu0 %v3141
        %v3143 = vand.u32 %v342, 4294901760
        %v3144 = vsub.f32 %v342, %v3143
        %v3145 = vand.u32 %v3144, 4294901760
        %v3146 = vsub.f32 %v3144, %v3145
        %v3147 = vand.u32 %v3146, 4294901760
        %3148 = vmatpush.msra.mxu0 %v3147
        %v3149 = vand.u32 %v341, 4294901760
        %v3150 = vsub.f32 %v341, %v3149
        %v3151 = vand.u32 %v3150, 4294901760
        %v3152 = vsub.f32 %v3150, %v3151
        %v3153 = vand.u32 %v3152, 4294901760
        %3154 = vmatpush.msra.mxu0 %v3153
        %v3155 = vand.u32 %v340, 4294901760
        %v3156 = vsub.f32 %v340, %v3155
        %v3157 = vand.u32 %v3156, 4294901760
        %v3158 = vsub.f32 %v3156, %v3157
        %v3159 = vand.u32 %v3158, 4294901760
        %3160 = vmatpush.msra.mxu0 %v3159
        %v3161 = vand.u32 %v339, 4294901760
        %v3162 = vsub.f32 %v339, %v3161
        %v3163 = vand.u32 %v3162, 4294901760
        %v3164 = vsub.f32 %v3162, %v3163
        %v3165 = vand.u32 %v3164, 4294901760
        %3166 = vmatpush.msra.mxu0 %v3165
        %v3167 = vand.u32 %v338, 4294901760
        %v3168 = vsub.f32 %v338, %v3167
        %v3169 = vand.u32 %v3168, 4294901760
        %v3170 = vsub.f32 %v3168, %v3169
        %v3171 = vand.u32 %v3170, 4294901760
        %3172 = vmatpush.msra.mxu0 %v3171
        %v3173 = vand.u32 %v337, 4294901760
        %v3174 = vsub.f32 %v337, %v3173
        %v3175 = vand.u32 %v3174, 4294901760
        %v3176 = vsub.f32 %v3174, %v3175
        %v3177 = vand.u32 %v3176, 4294901760
        %3178 = vmatpush.msra.mxu0 %v3177
        %v3179 = vand.u32 %v336, 4294901760
        %v3180 = vsub.f32 %v336, %v3179
        %v3181 = vand.u32 %v3180, 4294901760
        %v3182 = vsub.f32 %v3180, %v3181
        %v3183 = vand.u32 %v3182, 4294901760
        %3184 = vmatpush.msra.mxu0 %v3183
        %v3185 = vand.u32 %v335, 4294901760
        %v3186 = vsub.f32 %v335, %v3185
        %v3187 = vand.u32 %v3186, 4294901760
        %v3188 = vsub.f32 %v3186, %v3187
        %v3189 = vand.u32 %v3188, 4294901760
        %3190 = vmatpush.msra.mxu0 %v3189
        %v3191 = vand.u32 %v334, 4294901760
        %v3192 = vsub.f32 %v334, %v3191
        %v3193 = vand.u32 %v3192, 4294901760
        %v3194 = vsub.f32 %v3192, %v3193
        %v3195 = vand.u32 %v3194, 4294901760
        %3196 = vmatpush.msra.mxu0 %v3195
        %v3197 = vand.u32 %v333, 4294901760
        %v3198 = vsub.f32 %v333, %v3197
        %v3199 = vand.u32 %v3198, 4294901760
        %v3200 = vsub.f32 %v3198, %v3199
        %v3201 = vand.u32 %v3200, 4294901760
        %3202 = vmatpush.msra.mxu0 %v3201
        %v3203 = vand.u32 %v332, 4294901760
        %v3204 = vsub.f32 %v332, %v3203
        %v3205 = vand.u32 %v3204, 4294901760
        %v3206 = vsub.f32 %v3204, %v3205
        %v3207 = vand.u32 %v3206, 4294901760
        %3208 = vmatpush.msra.mxu0 %v3207
        %v3209 = vand.u32 %v331, 4294901760
        %v3210 = vsub.f32 %v331, %v3209
        %v3211 = vand.u32 %v3210, 4294901760
        %v3212 = vsub.f32 %v3210, %v3211
        %v3213 = vand.u32 %v3212, 4294901760
        %3214 = vmatpush.msra.mxu0 %v3213
        %v3215 = vand.u32 %v330, 4294901760
        %v3216 = vsub.f32 %v330, %v3215
        %v3217 = vand.u32 %v3216, 4294901760
        %v3218 = vsub.f32 %v3216, %v3217
        %v3219 = vand.u32 %v3218, 4294901760
        %3220 = vmatpush.msra.mxu0 %v3219
        %v3221 = vand.u32 %v3083, 4294901760
        %3222 = vmatmul.f32.gmra.mxu0 %v3221
        %v3223 = vpop.f32.mrf.mxu0
        %v3224 = vadd.f32 %v3123, %v3223
        %3225 = vdwg.mxu0
        %v3226 = vand.u32 %v345, 4294901760
        %v3227 = vsub.f32 %v345, %v3226
        %3228 = vmatpush.msra.mxu0 %v3227
        %v3229 = vand.u32 %v344, 4294901760
        %v3230 = vsub.f32 %v344, %v3229
        %3231 = vmatpush.msra.mxu0 %v3230
        %v3232 = vand.u32 %v343, 4294901760
        %v3233 = vsub.f32 %v343, %v3232
        %3234 = vmatpush.msra.mxu0 %v3233
        %v3235 = vand.u32 %v342, 4294901760
        %v3236 = vsub.f32 %v342, %v3235
        %3237 = vmatpush.msra.mxu0 %v3236
        %v3238 = vand.u32 %v341, 4294901760
        %v3239 = vsub.f32 %v341, %v3238
        %3240 = vmatpush.msra.mxu0 %v3239
        %v3241 = vand.u32 %v340, 4294901760
        %v3242 = vsub.f32 %v340, %v3241
        %3243 = vmatpush.msra.mxu0 %v3242
        %v3244 = vand.u32 %v339, 4294901760
        %v3245 = vsub.f32 %v339, %v3244
        %3246 = vmatpush.msra.mxu0 %v3245
        %v3247 = vand.u32 %v338, 4294901760
        %v3248 = vsub.f32 %v338, %v3247
        %3249 = vmatpush.msra.mxu0 %v3248
        %v3250 = vand.u32 %v337, 4294901760
        %v3251 = vsub.f32 %v337, %v3250
        %3252 = vmatpush.msra.mxu0 %v3251
        %v3253 = vand.u32 %v336, 4294901760
        %v3254 = vsub.f32 %v336, %v3253
        %3255 = vmatpush.msra.mxu0 %v3254
        %v3256 = vand.u32 %v335, 4294901760
        %v3257 = vsub.f32 %v335, %v3256
        %3258 = vmatpush.msra.mxu0 %v3257
        %v3259 = vand.u32 %v334, 4294901760
        %v3260 = vsub.f32 %v334, %v3259
        %3261 = vmatpush.msra.mxu0 %v3260
        %v3262 = vand.u32 %v333, 4294901760
        %v3263 = vsub.f32 %v333, %v3262
        %3264 = vmatpush.msra.mxu0 %v3263
        %v3265 = vand.u32 %v332, 4294901760
        %v3266 = vsub.f32 %v332, %v3265
        %3267 = vmatpush.msra.mxu0 %v3266
        %v3268 = vand.u32 %v331, 4294901760
        %v3269 = vsub.f32 %v331, %v3268
        %3270 = vmatpush.msra.mxu0 %v3269
        %v3271 = vand.u32 %v330, 4294901760
        %v3272 = vsub.f32 %v330, %v3271
        %3273 = vmatpush.msra.mxu0 %v3272
        %v3274 = vand.u32 %v3083, 4294901760
        %v3275 = vsub.f32 %v3083, %v3274
        %3276 = vmatmul.f32.gmra.mxu0 %v3275
        %v3277 = vpop.f32.mrf.mxu0
        %v3278 = vadd.f32 %v3224, %v3277
        %3279 = vdwg.mxu0
        %v3280 = vand.u32 %v345, 4294901760
        %3281 = vmatpush.msra.mxu0 %v3280
        %v3282 = vand.u32 %v344, 4294901760
        %3283 = vmatpush.msra.mxu0 %v3282
        %v3284 = vand.u32 %v343, 4294901760
        %3285 = vmatpush.msra.mxu0 %v3284
        %v3286 = vand.u32 %v342, 4294901760
        %3287 = vmatpush.msra.mxu0 %v3286
        %v3288 = vand.u32 %v341, 4294901760
        %3289 = vmatpush.msra.mxu0 %v3288
        %v3290 = vand.u32 %v340, 4294901760
        %3291 = vmatpush.msra.mxu0 %v3290
        %v3292 = vand.u32 %v339, 4294901760
        %3293 = vmatpush.msra.mxu0 %v3292
        %v3294 = vand.u32 %v338, 4294901760
        %3295 = vmatpush.msra.mxu0 %v3294
        %v3296 = vand.u32 %v337, 4294901760
        %3297 = vmatpush.msra.mxu0 %v3296
        %v3298 = vand.u32 %v336, 4294901760
        %3299 = vmatpush.msra.mxu0 %v3298
        %v3300 = vand.u32 %v335, 4294901760
        %3301 = vmatpush.msra.mxu0 %v3300
        %v3302 = vand.u32 %v334, 4294901760
        %3303 = vmatpush.msra.mxu0 %v3302
        %v3304 = vand.u32 %v333, 4294901760
        %3305 = vmatpush.msra.mxu0 %v3304
        %v3306 = vand.u32 %v332, 4294901760
        %3307 = vmatpush.msra.mxu0 %v3306
        %v3308 = vand.u32 %v331, 4294901760
        %3309 = vmatpush.msra.mxu0 %v3308
        %v3310 = vand.u32 %v330, 4294901760
        %3311 = vmatpush.msra.mxu0 %v3310
        %v3312 = vand.u32 %v3083, 4294901760
        %v3313 = vsub.f32 %v3083, %v3312
        %v3314 = vand.u32 %v3313, 4294901760
        %3315 = vmatmul.f32.gmra.mxu0 %v3314
        %v3316 = vpop.f32.mrf.mxu0
        %v3317 = vadd.f32 %v3278, %v3316
        %3318 = vdwg.mxu0
        %v3319 = vand.u32 %v345, 4294901760
        %v3320 = vsub.f32 %v345, %v3319
        %v3321 = vand.u32 %v3320, 4294901760
        %3322 = vmatpush.msra.mxu0 %v3321
        %v3323 = vand.u32 %v344, 4294901760
        %v3324 = vsub.f32 %v344, %v3323
        %v3325 = vand.u32 %v3324, 4294901760
        %3326 = vmatpush.msra.mxu0 %v3325
        %v3327 = vand.u32 %v343, 4294901760
        %v3328 = vsub.f32 %v343, %v3327
        %v3329 = vand.u32 %v3328, 4294901760
        %3330 = vmatpush.msra.mxu0 %v3329
        %v3331 = vand.u32 %v342, 4294901760
        %v3332 = vsub.f32 %v342, %v3331
        %v3333 = vand.u32 %v3332, 4294901760
        %3334 = vmatpush.msra.mxu0 %v3333
        %v3335 = vand.u32 %v341, 4294901760
        %v3336 = vsub.f32 %v341, %v3335
        %v3337 = vand.u32 %v3336, 4294901760
        %3338 = vmatpush.msra.mxu0 %v3337
        %v3339 = vand.u32 %v340, 4294901760
        %v3340 = vsub.f32 %v340, %v3339
        %v3341 = vand.u32 %v3340, 4294901760
        %3342 = vmatpush.msra.mxu0 %v3341
        %v3343 = vand.u32 %v339, 4294901760
        %v3344 = vsub.f32 %v339, %v3343
        %v3345 = vand.u32 %v3344, 4294901760
        %3346 = vmatpush.msra.mxu0 %v3345
        %v3347 = vand.u32 %v338, 4294901760
        %v3348 = vsub.f32 %v338, %v3347
        %v3349 = vand.u32 %v3348, 4294901760
        %3350 = vmatpush.msra.mxu0 %v3349
        %v3351 = vand.u32 %v337, 4294901760
        %v3352 = vsub.f32 %v337, %v3351
        %v3353 = vand.u32 %v3352, 4294901760
        %3354 = vmatpush.msra.mxu0 %v3353
        %v3355 = vand.u32 %v336, 4294901760
        %v3356 = vsub.f32 %v336, %v3355
        %v3357 = vand.u32 %v3356, 4294901760
        %3358 = vmatpush.msra.mxu0 %v3357
        %v3359 = vand.u32 %v335, 4294901760
        %v3360 = vsub.f32 %v335, %v3359
        %v3361 = vand.u32 %v3360, 4294901760
        %3362 = vmatpush.msra.mxu0 %v3361
        %v3363 = vand.u32 %v334, 4294901760
        %v3364 = vsub.f32 %v334, %v3363
        %v3365 = vand.u32 %v3364, 4294901760
        %3366 = vmatpush.msra.mxu0 %v3365
        %v3367 = vand.u32 %v333, 4294901760
        %v3368 = vsub.f32 %v333, %v3367
        %v3369 = vand.u32 %v3368, 4294901760
        %3370 = vmatpush.msra.mxu0 %v3369
        %v3371 = vand.u32 %v332, 4294901760
        %v3372 = vsub.f32 %v332, %v3371
        %v3373 = vand.u32 %v3372, 4294901760
        %3374 = vmatpush.msra.mxu0 %v3373
        %v3375 = vand.u32 %v331, 4294901760
        %v3376 = vsub.f32 %v331, %v3375
        %v3377 = vand.u32 %v3376, 4294901760
        %3378 = vmatpush.msra.mxu0 %v3377
        %v3379 = vand.u32 %v330, 4294901760
        %v3380 = vsub.f32 %v330, %v3379
        %v3381 = vand.u32 %v3380, 4294901760
        %3382 = vmatpush.msra.mxu0 %v3381
        %v3383 = vand.u32 %v3083, 4294901760
        %3384 = vmatmul.f32.gmra.mxu0 %v3383
        %v3385 = vpop.f32.mrf.mxu0
        %v3386 = vadd.f32 %v3317, %v3385
        %3387 = vdwg.mxu0
        %v3388 = vand.u32 %v345, 4294901760
        %3389 = vmatpush.msra.mxu0 %v3388
        %v3390 = vand.u32 %v344, 4294901760
        %3391 = vmatpush.msra.mxu0 %v3390
        %v3392 = vand.u32 %v343, 4294901760
        %3393 = vmatpush.msra.mxu0 %v3392
        %v3394 = vand.u32 %v342, 4294901760
        %3395 = vmatpush.msra.mxu0 %v3394
        %v3396 = vand.u32 %v341, 4294901760
        %3397 = vmatpush.msra.mxu0 %v3396
        %v3398 = vand.u32 %v340, 4294901760
        %3399 = vmatpush.msra.mxu0 %v3398
        %v3400 = vand.u32 %v339, 4294901760
        %3401 = vmatpush.msra.mxu0 %v3400
        %v3402 = vand.u32 %v338, 4294901760
        %3403 = vmatpush.msra.mxu0 %v3402
        %v3404 = vand.u32 %v337, 4294901760
        %3405 = vmatpush.msra.mxu0 %v3404
        %v3406 = vand.u32 %v336, 4294901760
        %3407 = vmatpush.msra.mxu0 %v3406
        %v3408 = vand.u32 %v335, 4294901760
        %3409 = vmatpush.msra.mxu0 %v3408
        %v3410 = vand.u32 %v334, 4294901760
        %3411 = vmatpush.msra.mxu0 %v3410
        %v3412 = vand.u32 %v333, 4294901760
        %3413 = vmatpush.msra.mxu0 %v3412
        %v3414 = vand.u32 %v332, 4294901760
        %3415 = vmatpush.msra.mxu0 %v3414
        %v3416 = vand.u32 %v331, 4294901760
        %3417 = vmatpush.msra.mxu0 %v3416
        %v3418 = vand.u32 %v330, 4294901760
        %3419 = vmatpush.msra.mxu0 %v3418
        %v3420 = vand.u32 %v3083, 4294901760
        %3421 = vmatmul.f32.gmra.mxu0 %v3420
        %v3422 = vpop.f32.mrf.mxu0
        %v3423 = vadd.f32 %v3386, %v3422
        %3424 = vdwg.mxu0
        %v3425 = vmul.f32 %v3423, 0.001953125
        %v3426 = vmul.f32 %v3425, %v3425
        %v3428 = vrot.slane %v3426, 7
        %v3430 = vsub.f32 %v3425, %v3428
        %v3431 = vmax.f32 %v3430, 0.0
        %v3432 = vadd.f32 %v3431, 1e-05
        %v3433 = vrsqrt.pop %v3432
        %v3434 = vmul.f32 %v3433, %v3432
        %v3435 = vmul.f32 %v3434, %v3433
        %v3436 = vmul.f32 0.5, %v3435
        %v3437 = vsub.f32 1.5, %v3436
        %v3438 = vmul.f32 %v3433, %v3437
        %vm3439 = vweird.f32 %v3432
        %vm3440 = vweird.f32 %v3433
        %vm3441 = vmor %vm3439, %vm3440
        %v3442 = vsel %vm3441, %v3433, %v3438
        %v3444 = vrot.slane %v3442, 7
        %v3446 = vmul.f32 %v362, %v3444
        %v3448 = vrot.slane %v3446, 2
        %v3450 = vmul.f32 %v3425, %v3448
        %v3452 = vrot.slane %v3450, 5
        %v3454 = vsub.f32 %v362, %v3452
        %v3456 = vrot.slane %v3454, 2
        %v3458 = vsel %vm389, %v3448, %v3456
        %v3459 = vand.u32 %v361, 4294901760
        %3460 = vmatpush.msra.mxu0 %v3459
        %v3461 = vand.u32 %v360, 4294901760
        %3462 = vmatpush.msra.mxu0 %v3461
        %v3463 = vand.u32 %v359, 4294901760
        %3464 = vmatpush.msra.mxu0 %v3463
        %v3465 = vand.u32 %v358, 4294901760
        %3466 = vmatpush.msra.mxu0 %v3465
        %v3467 = vand.u32 %v357, 4294901760
        %3468 = vmatpush.msra.mxu0 %v3467
        %v3469 = vand.u32 %v356, 4294901760
        %3470 = vmatpush.msra.mxu0 %v3469
        %v3471 = vand.u32 %v355, 4294901760
        %3472 = vmatpush.msra.mxu0 %v3471
        %v3473 = vand.u32 %v354, 4294901760
        %3474 = vmatpush.msra.mxu0 %v3473
        %v3475 = vand.u32 %v353, 4294901760
        %3476 = vmatpush.msra.mxu0 %v3475
        %v3477 = vand.u32 %v352, 4294901760
        %3478 = vmatpush.msra.mxu0 %v3477
        %v3479 = vand.u32 %v351, 4294901760
        %3480 = vmatpush.msra.mxu0 %v3479
        %v3481 = vand.u32 %v350, 4294901760
        %3482 = vmatpush.msra.mxu0 %v3481
        %v3483 = vand.u32 %v349, 4294901760
        %3484 = vmatpush.msra.mxu0 %v3483
        %v3485 = vand.u32 %v348, 4294901760
        %3486 = vmatpush.msra.mxu0 %v3485
        %v3487 = vand.u32 %v347, 4294901760
        %3488 = vmatpush.msra.mxu0 %v3487
        %v3489 = vand.u32 %v346, 4294901760
        %3490 = vmatpush.msra.mxu0 %v3489
        %v3491 = vand.u32 %v3458, 4294901760
        %v3492 = vsub.f32 %v3458, %v3491
        %v3493 = vand.u32 %v3492, 4294901760
        %v3494 = vsub.f32 %v3492, %v3493
        %v3495 = vand.u32 %v3494, 4294901760
        %3496 = vmatmul.f32.gmra.mxu0 %v3495
        %v3497 = vpop.f32.mrf.mxu0
        %v3498 = vadd.f32 0.0, %v3497
        %3499 = vdwg.mxu0
        %v3500 = vand.u32 %v361, 4294901760
        %v3501 = vsub.f32 %v361, %v3500
        %v3502 = vand.u32 %v3501, 4294901760
        %v3503 = vsub.f32 %v3501, %v3502
        %v3504 = vand.u32 %v3503, 4294901760
        %3505 = vmatpush.msra.mxu0 %v3504
        %v3506 = vand.u32 %v360, 4294901760
        %v3507 = vsub.f32 %v360, %v3506
        %v3508 = vand.u32 %v3507, 4294901760
        %v3509 = vsub.f32 %v3507, %v3508
        %v3510 = vand.u32 %v3509, 4294901760
        %3511 = vmatpush.msra.mxu0 %v3510
        %v3512 = vand.u32 %v359, 4294901760
        %v3513 = vsub.f32 %v359, %v3512
        %v3514 = vand.u32 %v3513, 4294901760
        %v3515 = vsub.f32 %v3513, %v3514
        %v3516 = vand.u32 %v3515, 4294901760
        %3517 = vmatpush.msra.mxu0 %v3516
        %v3518 = vand.u32 %v358, 4294901760
        %v3519 = vsub.f32 %v358, %v3518
        %v3520 = vand.u32 %v3519, 4294901760
        %v3521 = vsub.f32 %v3519, %v3520
        %v3522 = vand.u32 %v3521, 4294901760
        %3523 = vmatpush.msra.mxu0 %v3522
        %v3524 = vand.u32 %v357, 4294901760
        %v3525 = vsub.f32 %v357, %v3524
        %v3526 = vand.u32 %v3525, 4294901760
        %v3527 = vsub.f32 %v3525, %v3526
        %v3528 = vand.u32 %v3527, 4294901760
        %3529 = vmatpush.msra.mxu0 %v3528
        %v3530 = vand.u32 %v356, 4294901760
        %v3531 = vsub.f32 %v356, %v3530
        %v3532 = vand.u32 %v3531, 4294901760
        %v3533 = vsub.f32 %v3531, %v3532
        %v3534 = vand.u32 %v3533, 4294901760
        %3535 = vmatpush.msra.mxu0 %v3534
        %v3536 = vand.u32 %v355, 4294901760
        %v3537 = vsub.f32 %v355, %v3536
        %v3538 = vand.u32 %v3537, 4294901760
        %v3539 = vsub.f32 %v3537, %v3538
        %v3540 = vand.u32 %v3539, 4294901760
        %3541 = vmatpush.msra.mxu0 %v3540
        %v3542 = vand.u32 %v354, 4294901760
        %v3543 = vsub.f32 %v354, %v3542
        %v3544 = vand.u32 %v3543, 4294901760
        %v3545 = vsub.f32 %v3543, %v3544
        %v3546 = vand.u32 %v3545, 4294901760
        %3547 = vmatpush.msra.mxu0 %v3546
        %v3548 = vand.u32 %v353, 4294901760
        %v3549 = vsub.f32 %v353, %v3548
        %v3550 = vand.u32 %v3549, 4294901760
        %v3551 = vsub.f32 %v3549, %v3550
        %v3552 = vand.u32 %v3551, 4294901760
        %3553 = vmatpush.msra.mxu0 %v3552
        %v3554 = vand.u32 %v352, 4294901760
        %v3555 = vsub.f32 %v352, %v3554
        %v3556 = vand.u32 %v3555, 4294901760
        %v3557 = vsub.f32 %v3555, %v3556
        %v3558 = vand.u32 %v3557, 4294901760
        %3559 = vmatpush.msra.mxu0 %v3558
        %v3560 = vand.u32 %v351, 4294901760
        %v3561 = vsub.f32 %v351, %v3560
        %v3562 = vand.u32 %v3561, 4294901760
        %v3563 = vsub.f32 %v3561, %v3562
        %v3564 = vand.u32 %v3563, 4294901760
        %3565 = vmatpush.msra.mxu0 %v3564
        %v3566 = vand.u32 %v350, 4294901760
        %v3567 = vsub.f32 %v350, %v3566
        %v3568 = vand.u32 %v3567, 4294901760
        %v3569 = vsub.f32 %v3567, %v3568
        %v3570 = vand.u32 %v3569, 4294901760
        %3571 = vmatpush.msra.mxu0 %v3570
        %v3572 = vand.u32 %v349, 4294901760
        %v3573 = vsub.f32 %v349, %v3572
        %v3574 = vand.u32 %v3573, 4294901760
        %v3575 = vsub.f32 %v3573, %v3574
        %v3576 = vand.u32 %v3575, 4294901760
        %3577 = vmatpush.msra.mxu0 %v3576
        %v3578 = vand.u32 %v348, 4294901760
        %v3579 = vsub.f32 %v348, %v3578
        %v3580 = vand.u32 %v3579, 4294901760
        %v3581 = vsub.f32 %v3579, %v3580
        %v3582 = vand.u32 %v3581, 4294901760
        %3583 = vmatpush.msra.mxu0 %v3582
        %v3584 = vand.u32 %v347, 4294901760
        %v3585 = vsub.f32 %v347, %v3584
        %v3586 = vand.u32 %v3585, 4294901760
        %v3587 = vsub.f32 %v3585, %v3586
        %v3588 = vand.u32 %v3587, 4294901760
        %3589 = vmatpush.msra.mxu0 %v3588
        %v3590 = vand.u32 %v346, 4294901760
        %v3591 = vsub.f32 %v346, %v3590
        %v3592 = vand.u32 %v3591, 4294901760
        %v3593 = vsub.f32 %v3591, %v3592
        %v3594 = vand.u32 %v3593, 4294901760
        %3595 = vmatpush.msra.mxu0 %v3594
        %v3596 = vand.u32 %v3458, 4294901760
        %3597 = vmatmul.f32.gmra.mxu0 %v3596
        %v3598 = vpop.f32.mrf.mxu0
        %v3599 = vadd.f32 %v3498, %v3598
        %3600 = vdwg.mxu0
        %v3601 = vand.u32 %v361, 4294901760
        %v3602 = vsub.f32 %v361, %v3601
        %3603 = vmatpush.msra.mxu0 %v3602
        %v3604 = vand.u32 %v360, 4294901760
        %v3605 = vsub.f32 %v360, %v3604
        %3606 = vmatpush.msra.mxu0 %v3605
        %v3607 = vand.u32 %v359, 4294901760
        %v3608 = vsub.f32 %v359, %v3607
        %3609 = vmatpush.msra.mxu0 %v3608
        %v3610 = vand.u32 %v358, 4294901760
        %v3611 = vsub.f32 %v358, %v3610
        %3612 = vmatpush.msra.mxu0 %v3611
        %v3613 = vand.u32 %v357, 4294901760
        %v3614 = vsub.f32 %v357, %v3613
        %3615 = vmatpush.msra.mxu0 %v3614
        %v3616 = vand.u32 %v356, 4294901760
        %v3617 = vsub.f32 %v356, %v3616
        %3618 = vmatpush.msra.mxu0 %v3617
        %v3619 = vand.u32 %v355, 4294901760
        %v3620 = vsub.f32 %v355, %v3619
        %3621 = vmatpush.msra.mxu0 %v3620
        %v3622 = vand.u32 %v354, 4294901760
        %v3623 = vsub.f32 %v354, %v3622
        %3624 = vmatpush.msra.mxu0 %v3623
        %v3625 = vand.u32 %v353, 4294901760
        %v3626 = vsub.f32 %v353, %v3625
        %3627 = vmatpush.msra.mxu0 %v3626
        %v3628 = vand.u32 %v352, 4294901760
        %v3629 = vsub.f32 %v352, %v3628
        %3630 = vmatpush.msra.mxu0 %v3629
        %v3631 = vand.u32 %v351, 4294901760
        %v3632 = vsub.f32 %v351, %v3631
        %3633 = vmatpush.msra.mxu0 %v3632
        %v3634 = vand.u32 %v350, 4294901760
        %v3635 = vsub.f32 %v350, %v3634
        %3636 = vmatpush.msra.mxu0 %v3635
        %v3637 = vand.u32 %v349, 4294901760
        %v3638 = vsub.f32 %v349, %v3637
        %3639 = vmatpush.msra.mxu0 %v3638
        %v3640 = vand.u32 %v348, 4294901760
        %v3641 = vsub.f32 %v348, %v3640
        %3642 = vmatpush.msra.mxu0 %v3641
        %v3643 = vand.u32 %v347, 4294901760
        %v3644 = vsub.f32 %v347, %v3643
        %3645 = vmatpush.msra.mxu0 %v3644
        %v3646 = vand.u32 %v346, 4294901760
        %v3647 = vsub.f32 %v346, %v3646
        %3648 = vmatpush.msra.mxu0 %v3647
        %v3649 = vand.u32 %v3458, 4294901760
        %v3650 = vsub.f32 %v3458, %v3649
        %3651 = vmatmul.f32.gmra.mxu0 %v3650
        %v3652 = vpop.f32.mrf.mxu0
        %v3653 = vadd.f32 %v3599, %v3652
        %3654 = vdwg.mxu0
        %v3655 = vand.u32 %v361, 4294901760
        %3656 = vmatpush.msra.mxu0 %v3655
        %v3657 = vand.u32 %v360, 4294901760
        %3658 = vmatpush.msra.mxu0 %v3657
        %v3659 = vand.u32 %v359, 4294901760
        %3660 = vmatpush.msra.mxu0 %v3659
        %v3661 = vand.u32 %v358, 4294901760
        %3662 = vmatpush.msra.mxu0 %v3661
        %v3663 = vand.u32 %v357, 4294901760
        %3664 = vmatpush.msra.mxu0 %v3663
        %v3665 = vand.u32 %v356, 4294901760
        %3666 = vmatpush.msra.mxu0 %v3665
        %v3667 = vand.u32 %v355, 4294901760
        %3668 = vmatpush.msra.mxu0 %v3667
        %v3669 = vand.u32 %v354, 4294901760
        %3670 = vmatpush.msra.mxu0 %v3669
        %v3671 = vand.u32 %v353, 4294901760
        %3672 = vmatpush.msra.mxu0 %v3671
        %v3673 = vand.u32 %v352, 4294901760
        %3674 = vmatpush.msra.mxu0 %v3673
        %v3675 = vand.u32 %v351, 4294901760
        %3676 = vmatpush.msra.mxu0 %v3675
        %v3677 = vand.u32 %v350, 4294901760
        %3678 = vmatpush.msra.mxu0 %v3677
        %v3679 = vand.u32 %v349, 4294901760
        %3680 = vmatpush.msra.mxu0 %v3679
        %v3681 = vand.u32 %v348, 4294901760
        %3682 = vmatpush.msra.mxu0 %v3681
        %v3683 = vand.u32 %v347, 4294901760
        %3684 = vmatpush.msra.mxu0 %v3683
        %v3685 = vand.u32 %v346, 4294901760
        %3686 = vmatpush.msra.mxu0 %v3685
        %v3687 = vand.u32 %v3458, 4294901760
        %v3688 = vsub.f32 %v3458, %v3687
        %v3689 = vand.u32 %v3688, 4294901760
        %3690 = vmatmul.f32.gmra.mxu0 %v3689
        %v3691 = vpop.f32.mrf.mxu0
        %v3692 = vadd.f32 %v3653, %v3691
        %3693 = vdwg.mxu0
        %v3694 = vand.u32 %v361, 4294901760
        %v3695 = vsub.f32 %v361, %v3694
        %v3696 = vand.u32 %v3695, 4294901760
        %3697 = vmatpush.msra.mxu0 %v3696
        %v3698 = vand.u32 %v360, 4294901760
        %v3699 = vsub.f32 %v360, %v3698
        %v3700 = vand.u32 %v3699, 4294901760
        %3701 = vmatpush.msra.mxu0 %v3700
        %v3702 = vand.u32 %v359, 4294901760
        %v3703 = vsub.f32 %v359, %v3702
        %v3704 = vand.u32 %v3703, 4294901760
        %3705 = vmatpush.msra.mxu0 %v3704
        %v3706 = vand.u32 %v358, 4294901760
        %v3707 = vsub.f32 %v358, %v3706
        %v3708 = vand.u32 %v3707, 4294901760
        %3709 = vmatpush.msra.mxu0 %v3708
        %v3710 = vand.u32 %v357, 4294901760
        %v3711 = vsub.f32 %v357, %v3710
        %v3712 = vand.u32 %v3711, 4294901760
        %3713 = vmatpush.msra.mxu0 %v3712
        %v3714 = vand.u32 %v356, 4294901760
        %v3715 = vsub.f32 %v356, %v3714
        %v3716 = vand.u32 %v3715, 4294901760
        %3717 = vmatpush.msra.mxu0 %v3716
        %v3718 = vand.u32 %v355, 4294901760
        %v3719 = vsub.f32 %v355, %v3718
        %v3720 = vand.u32 %v3719, 4294901760
        %3721 = vmatpush.msra.mxu0 %v3720
        %v3722 = vand.u32 %v354, 4294901760
        %v3723 = vsub.f32 %v354, %v3722
        %v3724 = vand.u32 %v3723, 4294901760
        %3725 = vmatpush.msra.mxu0 %v3724
        %v3726 = vand.u32 %v353, 4294901760
        %v3727 = vsub.f32 %v353, %v3726
        %v3728 = vand.u32 %v3727, 4294901760
        %3729 = vmatpush.msra.mxu0 %v3728
        %v3730 = vand.u32 %v352, 4294901760
        %v3731 = vsub.f32 %v352, %v3730
        %v3732 = vand.u32 %v3731, 4294901760
        %3733 = vmatpush.msra.mxu0 %v3732
        %v3734 = vand.u32 %v351, 4294901760
        %v3735 = vsub.f32 %v351, %v3734
        %v3736 = vand.u32 %v3735, 4294901760
        %3737 = vmatpush.msra.mxu0 %v3736
        %v3738 = vand.u32 %v350, 4294901760
        %v3739 = vsub.f32 %v350, %v3738
        %v3740 = vand.u32 %v3739, 4294901760
        %3741 = vmatpush.msra.mxu0 %v3740
        %v3742 = vand.u32 %v349, 4294901760
        %v3743 = vsub.f32 %v349, %v3742
        %v3744 = vand.u32 %v3743, 4294901760
        %3745 = vmatpush.msra.mxu0 %v3744
        %v3746 = vand.u32 %v348, 4294901760
        %v3747 = vsub.f32 %v348, %v3746
        %v3748 = vand.u32 %v3747, 4294901760
        %3749 = vmatpush.msra.mxu0 %v3748
        %v3750 = vand.u32 %v347, 4294901760
        %v3751 = vsub.f32 %v347, %v3750
        %v3752 = vand.u32 %v3751, 4294901760
        %3753 = vmatpush.msra.mxu0 %v3752
        %v3754 = vand.u32 %v346, 4294901760
        %v3755 = vsub.f32 %v346, %v3754
        %v3756 = vand.u32 %v3755, 4294901760
        %3757 = vmatpush.msra.mxu0 %v3756
        %v3758 = vand.u32 %v3458, 4294901760
        %3759 = vmatmul.f32.gmra.mxu0 %v3758
        %v3760 = vpop.f32.mrf.mxu0
        %v3761 = vadd.f32 %v3692, %v3760
        %3762 = vdwg.mxu0
        %v3763 = vand.u32 %v361, 4294901760
        %3764 = vmatpush.msra.mxu0 %v3763
        %v3765 = vand.u32 %v360, 4294901760
        %3766 = vmatpush.msra.mxu0 %v3765
        %v3767 = vand.u32 %v359, 4294901760
        %3768 = vmatpush.msra.mxu0 %v3767
        %v3769 = vand.u32 %v358, 4294901760
        %3770 = vmatpush.msra.mxu0 %v3769
        %v3771 = vand.u32 %v357, 4294901760
        %3772 = vmatpush.msra.mxu0 %v3771
        %v3773 = vand.u32 %v356, 4294901760
        %3774 = vmatpush.msra.mxu0 %v3773
        %v3775 = vand.u32 %v355, 4294901760
        %3776 = vmatpush.msra.mxu0 %v3775
        %v3777 = vand.u32 %v354, 4294901760
        %3778 = vmatpush.msra.mxu0 %v3777
        %v3779 = vand.u32 %v353, 4294901760
        %3780 = vmatpush.msra.mxu0 %v3779
        %v3781 = vand.u32 %v352, 4294901760
        %3782 = vmatpush.msra.mxu0 %v3781
        %v3783 = vand.u32 %v351, 4294901760
        %3784 = vmatpush.msra.mxu0 %v3783
        %v3785 = vand.u32 %v350, 4294901760
        %3786 = vmatpush.msra.mxu0 %v3785
        %v3787 = vand.u32 %v349, 4294901760
        %3788 = vmatpush.msra.mxu0 %v3787
        %v3789 = vand.u32 %v348, 4294901760
        %3790 = vmatpush.msra.mxu0 %v3789
        %v3791 = vand.u32 %v347, 4294901760
        %3792 = vmatpush.msra.mxu0 %v3791
        %v3793 = vand.u32 %v346, 4294901760
        %3794 = vmatpush.msra.mxu0 %v3793
        %v3795 = vand.u32 %v3458, 4294901760
        %3796 = vmatmul.f32.gmra.mxu0 %v3795
        %v3797 = vpop.f32.mrf.mxu0
        %v3798 = vadd.f32 %v3761, %v3797
        %3799 = vdwg.mxu0
        %v3800 = vperm.slane %v3798, 0
        %v3801 = vmul.f32 %v3057, %v3800
        %v3802 = vmul.f32 %v3058, %v3800
        %v3803 = vmul.f32 %v3059, %v3800
        %v3804 = vmul.f32 %v3060, %v3800
        %v3805 = vperm.slane %v3798, 1
        %v3806 = vadd.f32 %v3801, %v3805
        %v3807 = vadd.f32 %v3802, %v3805
        %v3808 = vadd.f32 %v3803, %v3805
        %v3809 = vadd.f32 %v3804, %v3805
        %v3810 = vmax.f32 %v3806, 0.0
        %v3811 = vmax.f32 %v3807, 0.0
        %v3812 = vmax.f32 %v3808, 0.0
        %v3813 = vmax.f32 %v3809, 0.0
        %3814 = vst [vmem:[%s320] sm:$0xff] %v3810
        %3815 = vst [vmem:[%s320 + $0x8] sm:$0xff] %v3811
        %3816 = vst [vmem:[%s320 + $0x10] sm:$0xff] %v3812
        %3817 = vst [vmem:[%s320 + $0x18] sm:$0xff] %v3813
        %s3818 = sand.u32 %s166, 1
        %s3819 = sand.u32 %s166, 1
        %s3820 = smul.addr %s3819, 32
        %s3821 = scalar_lea.vmem [#allocation3], %s3820
        // Predicated region
        $region83: #{fused_bn_relu_dwconv_bn_relu.1} parent=77 // pred_check
          %p3822 = pneg %p176
        $region84: #{fused_bn_relu_dwconv_bn_relu.1} parent=77 // pred_check_branch
          %3824 = sbr.rel (%p3822) target = $region86
        $region85: #{fused_bn_relu_dwconv_bn_relu.1} parent=77 // pred_region
          %s3825 = smul.addr %s17, 8
          %s3826 = scalar_lea.vmem %s6, %s3825
          // Predicated region
          $region87: #{fused_bn_relu_dwconv_bn_relu.1} parent=85 // pred_check
            _
          $region88: #{fused_bn_relu_dwconv_bn_relu.1} parent=85 // pred_check_branch
            %3828 = sbr.rel (0) target = $region90
          $region89: #{fused_bn_relu_dwconv_bn_relu.1} parent=85 // pred_region
            // Predicated region
            $region91: #{fused_bn_relu_dwconv_bn_relu.1} parent=89 // pred_check
              _
            $region92: #{fused_bn_relu_dwconv_bn_relu.1} parent=89 // pred_check_branch
              %3830 = sbr.rel (0) target = $region94
            $region93: #{fused_bn_relu_dwconv_bn_relu.1} parent=89 // pred_region
              // Predicated region
              $region106: #{fused_bn_relu_dwconv_bn_relu.1} parent=93 // pred_check
                _
              $region107: #{fused_bn_relu_dwconv_bn_relu.1} parent=93 // pred_check_branch
                %3852 = sbr.rel (0) target = $region109
              $region108: #{fused_bn_relu_dwconv_bn_relu.1} parent=93 // pred_region
                loop: start=0, step=1, limit=1
                $region110: #{fused_bn_relu_dwconv_bn_relu.1} parent=108 // loop_pre_header
                  _
                $region111: #{fused_bn_relu_dwconv_bn_relu.1} parent=108 // loop_header
                  %s3854 = sphi 0, %s3858
                  %p3855 = scmp.ge.s32.totalorder %s3854, 1
                  %s3859 = sphi %s3821, %s3821
                  %s3860 = sphi %s3826, %s3826
                $region112: #{fused_bn_relu_dwconv_bn_relu.1} parent=108 // loop_header_branch
                  %3857 = sbr.rel (%p3855) target = $region116
                $region113: #{fused_bn_relu_dwconv_bn_relu.1} parent=108 // loop_body
                  %v3861 = vld [vmem:[%s3859] sm:$0xff]
                  %3862 = vst [vmem:[%s3860] sm:$0xff] %v3861
                  %v3863 = vld [vmem:[%s3859 + $0x8] sm:$0xff]
                  %3864 = vst [vmem:[%s3860 + $0x10] sm:$0xff] %v3863
                  %v3865 = vld [vmem:[%s3859 + $0x10] sm:$0xff]
                  %3866 = vst [vmem:[%s3860 + $0x20] sm:$0xff] %v3865
                  %v3867 = vld [vmem:[%s3859 + $0x18] sm:$0xff]
                  %3868 = vst [vmem:[%s3860 + $0x30] sm:$0xff] %v3867
                $region114: #{fused_bn_relu_dwconv_bn_relu.1} parent=108 // loop_footer
                  %s3858 = sadd.s32 1, %s3854
                $region115: #{fused_bn_relu_dwconv_bn_relu.1} parent=108 // loop_footer_branch
                  %3853 = sbr.rel target = $region111
                $region116: #{fused_bn_relu_dwconv_bn_relu.1} parent=108 // loop_exit
                  _
              $region109: #{fused_bn_relu_dwconv_bn_relu.1} parent=93 // pred_fallthru
                _
              // Predicated region
              $region117: #{fused_bn_relu_dwconv_bn_relu.1} parent=93 // pred_check
                _
              $region118: #{fused_bn_relu_dwconv_bn_relu.1} parent=93 // pred_check_branch
                %3870 = sbr.rel target = $region120
              $region119: #{fused_bn_relu_dwconv_bn_relu.1} parent=93 // pred_region
                _
              $region120: #{fused_bn_relu_dwconv_bn_relu.1} parent=93 // pred_fallthru
                _
            $region94: #{fused_bn_relu_dwconv_bn_relu.1} parent=89 // pred_fallthru
              _
            // Predicated region
            $region95: #{fused_bn_relu_dwconv_bn_relu.1} parent=89 // pred_check
              _
            $region96: #{fused_bn_relu_dwconv_bn_relu.1} parent=89 // pred_check_branch
              %3832 = sbr.rel target = $region98
            $region97: #{fused_bn_relu_dwconv_bn_relu.1} parent=89 // pred_region
              %s3834 = ssub.s32 256, 1
              loop: start=0, step=1, limit=1
              $region99: #{fused_bn_relu_dwconv_bn_relu.1} parent=97 // loop_pre_header
                _
              $region100: #{fused_bn_relu_dwconv_bn_relu.1} parent=97 // loop_header
                %s3836 = sphi 0, %s3840
                %p3837 = scmp.ge.s32.totalorder %s3836, 1
                %s3841 = sphi %s3821, %s3821
                %s3842 = sphi %s3826, %s3826
              $region101: #{fused_bn_relu_dwconv_bn_relu.1} parent=97 // loop_header_branch
                %3839 = sbr.rel (%p3837) target = $region105
              $region102: #{fused_bn_relu_dwconv_bn_relu.1} parent=97 // loop_body
                %v3843 = vld [vmem:[%s3841] sm:%s3834]
                %3844 = vst [vmem:[%s3842] sm:%s3834] %v3843
                %v3845 = vld [vmem:[%s3841 + $0x8] sm:%s3834]
                %3846 = vst [vmem:[%s3842 + $0x10] sm:%s3834] %v3845
                %v3847 = vld [vmem:[%s3841 + $0x10] sm:%s3834]
                %3848 = vst [vmem:[%s3842 + $0x20] sm:%s3834] %v3847
                %v3849 = vld [vmem:[%s3841 + $0x18] sm:%s3834]
                %3850 = vst [vmem:[%s3842 + $0x30] sm:%s3834] %v3849
              $region103: #{fused_bn_relu_dwconv_bn_relu.1} parent=97 // loop_footer
                %s3840 = sadd.s32 1, %s3836
              $region104: #{fused_bn_relu_dwconv_bn_relu.1} parent=97 // loop_footer_branch
                %3835 = sbr.rel target = $region100
              $region105: #{fused_bn_relu_dwconv_bn_relu.1} parent=97 // loop_exit
                _
            $region98: #{fused_bn_relu_dwconv_bn_relu.1} parent=89 // pred_fallthru
              _
          $region90: #{fused_bn_relu_dwconv_bn_relu.1} parent=85 // pred_fallthru
            _
          %3871 = vnop
        $region86: #{fused_bn_relu_dwconv_bn_relu.1} parent=77 // pred_fallthru
          _
      $region78: #{fused_bn_relu_dwconv_bn_relu.1} parent=5 // pred_fallthru
        _
      %p3872 = scmp.le.s32.totalorder 2, %s12
      // Predicated region
      $region121: #{fused_bn_relu_dwconv_bn_relu.1} parent=5 // pred_check
        %p3873 = pneg %p3872
      $region122: #{fused_bn_relu_dwconv_bn_relu.1} parent=5 // pred_check_branch
        %3875 = sbr.rel (%p3873) target = $region124
      $region123: #{fused_bn_relu_dwconv_bn_relu.1} parent=5 // pred_region
        %s3876 = ssub.s32 %s12, 2
        // Predicated region
        $region125: #{fused_bn_relu_dwconv_bn_relu.1} parent=123 // pred_check
          %p3877 = pneg %p182
        $region126: #{fused_bn_relu_dwconv_bn_relu.1} parent=123 // pred_check_branch
          %3879 = sbr.rel (%p3877) target = $region128
        $region127: #{fused_bn_relu_dwconv_bn_relu.1} parent=123 // pred_region
          %s3880 = sand.u32 %s167, 1
          %s3881 = sand.u32 %s167, 1
          %s3882 = smul.addr %s3881, 32
          %s3883 = scalar_lea.vmem [#allocation3], %s3882
        $region128: #{fused_bn_relu_dwconv_bn_relu.1} parent=123 // pred_fallthru
          _
      $region124: #{fused_bn_relu_dwconv_bn_relu.1} parent=5 // pred_fallthru
        _
    $region6: #{fused_bn_relu_dwconv_bn_relu.1} parent=1 // loop_footer
      %s16 = sadd.s32 1, %s12
    $region7: #{fused_bn_relu_dwconv_bn_relu.1} parent=1 // loop_footer_branch
      %11 = sbr.rel target = $region3
    $region8: #{fused_bn_relu_dwconv_bn_relu.1} parent=1 // loop_exit
      _

</llo_original>
